<compile_context>
chip_gen: v7x
topology: tpu7x:2x2x1
jax: 0.10.0
libtpu: 0.0.40
codegen_flags: <defaults>
</compile_context>

<pallas_src>
import functools

import jax
import jax.numpy as jnp
from jax.experimental import pallas as pl
from jax.experimental.pallas import tpu as pltpu


def _round_up(x, m):
    return (x + m - 1) // m * m


# ---------------------------------------------------------------------------
# Pallas kernels
# ---------------------------------------------------------------------------

def _matmul_bias_kernel(*refs, relu, has_residual):
    """Tiled bf16 matmul, f32 accumulation, fused +bias [+residual] [+ReLU] epilogue."""
    if has_residual:
        a_ref, b_ref, bias_ref, r_ref, o_ref, acc_ref = refs
    else:
        a_ref, b_ref, bias_ref, o_ref, acc_ref = refs
        r_ref = None

    @pl.when(pl.program_id(2) == 0)
    def _():
        acc_ref[...] = jnp.zeros_like(acc_ref)

    acc_ref[...] += jnp.dot(a_ref[...], b_ref[...],
                            preferred_element_type=jnp.float32)

    @pl.when(pl.program_id(2) == pl.num_programs(2) - 1)
    def _():
        y = acc_ref[...] + bias_ref[...]
        if has_residual:
            y = y + r_ref[...].astype(jnp.float32)
        if relu:
            y = jnp.maximum(y, 0.0)
        o_ref[...] = y.astype(o_ref.dtype)


def _pick_tk(kp):
    """Single K step when it fits; otherwise largest 128-multiple divisor."""
    if kp <= 1536:
        return kp
    for cand in (1536, 1280, 1152, 1024, 896, 768, 640, 512, 384, 256, 128):
        if kp % cand == 0:
            return cand
    return 128


@functools.partial(jax.jit, static_argnames=("relu",))
def matmul_bias_act(a, b, bias, residual=None, *, relu):
    """out = act(a @ b + bias [+ residual]); a:[M,K] bf16, b:[K,N] bf16, bias:[N] f32."""
    M, K = a.shape
    _, N = b.shape

    Kp = _round_up(K, 128)
    tk = _pick_tk(Kp)
    # Pick tm so the A tile stays ~<=1.25 MiB (bf16) — safe on v5e/v6e/v7x VMEM budgets
    # while keeping the per-step overhead amortized for the long-M / short-K 1x1 convs.
    tm = 512
    for cand in (2048, 1024):
        if M % cand == 0 and cand * tk * 2 <= (5 << 18):
            tm = cand
            break
    if M < tm:
        tm = _round_up(M, 8)
    Mp = _round_up(M, tm)
    Np = _round_up(N, 128)
    tn = 256 if Np % 256 == 0 else 128

    a = jnp.pad(a, ((0, Mp - M), (0, Kp - K)))
    b = jnp.pad(b, ((0, Kp - K), (0, Np - N)))
    bias = jnp.pad(bias.astype(jnp.float32), (0, Np - N)).reshape(1, Np)

    in_specs = [
        pl.BlockSpec((tm, tk), lambda i, j, k: (i, k)),
        pl.BlockSpec((tk, tn), lambda i, j, k: (k, j)),
        pl.BlockSpec((1, tn), lambda i, j, k: (0, j)),
    ]
    operands = [a, b, bias]
    has_residual = residual is not None
    if has_residual:
        r = jnp.pad(residual, ((0, Mp - M), (0, Np - N)))
        in_specs.append(pl.BlockSpec((tm, tn), lambda i, j, k: (i, j)))
        operands.append(r)

    out = pl.pallas_call(
        functools.partial(_matmul_bias_kernel, relu=relu,
                          has_residual=has_residual),
        out_shape=jax.ShapeDtypeStruct((Mp, Np), jnp.bfloat16),
        grid_spec=pltpu.PrefetchScalarGridSpec(
            num_scalar_prefetch=0,
            grid=(Mp // tm, Np // tn, Kp // tk),
            in_specs=in_specs,
            out_specs=pl.BlockSpec((tm, tn), lambda i, j, k: (i, j)),
            scratch_shapes=[pltpu.VMEM((tm, tn), jnp.float32)],
        ),
        compiler_params=pltpu.CompilerParams(
            dimension_semantics=("parallel", "parallel", "arbitrary")),
    )(*operands)
    return out[:M, :N]


def _maxpool_kernel(x_ref, o_ref):
    o_ref[...] = jnp.max(x_ref[...], axis=0)


@jax.jit
def maxpool2d_3x3_s2(x):
    """MaxPool2d(kernel=3, stride=2, padding=1) on NHWC (bf16) via Pallas max-reduce."""
    N, H, W, C = x.shape
    k, s, p = 3, 2, 1
    OH = (H + 2 * p - k) // s + 1
    OW = (W + 2 * p - k) // s + 1
    x = x.astype(jnp.bfloat16)
    xp = jnp.pad(x, ((0, 0), (p, p), (p, p), (0, 0)),
                 constant_values=float("-inf"))
    taps = [xp[:, i:i + s * OH:s, j:j + s * OW:s, :]
            for i in range(k) for j in range(k)]
    # TODO(synk): the 9-tap stack still materializes in HBM; a halo-overlapping /
    # manual-DMA formulation would avoid it but needs Element-offset BlockSpecs.
    L = N * OH * OW * C
    assert L % 128 == 0
    # lane-dense view: last dim = 128 lanes (avoids masked half-lane stores for C=64)
    stacked = jnp.stack(taps, axis=0).reshape(k * k, L // 128, 128)

    M2 = L // 128
    tm = 1024
    Mp = _round_up(M2, tm)
    if Mp != M2:
        stacked = jnp.pad(stacked, ((0, 0), (0, Mp - M2), (0, 0)),
                          constant_values=float("-inf"))

    out = pl.pallas_call(
        _maxpool_kernel,
        out_shape=jax.ShapeDtypeStruct((Mp, 128), jnp.bfloat16),
        grid=(Mp // tm,),
        in_specs=[pl.BlockSpec((k * k, tm, 128), lambda i: (0, i, 0))],
        out_specs=pl.BlockSpec((tm, 128), lambda i: (i, 0)),
    )(stacked)
    return out[:M2].reshape(N, OH, OW, C)


def _avgpool_kernel(x_ref, o_ref):
    o_ref[...] = jnp.mean(x_ref[...].astype(jnp.float32), axis=1)


@jax.jit
def avgpool_16x16(x):
    """AvgPool2d(16, stride=1) on a 16x16 NHWC map == global spatial mean."""
    N, H, W, C = x.shape
    assert H == 16 and W == 16, "AvgPool2d(16,1,0) + fc(2048,3) requires 16x16 map"
    xr = x.reshape(N, H * W, C).astype(jnp.bfloat16)
    return pl.pallas_call(
        _avgpool_kernel,
        out_shape=jax.ShapeDtypeStruct((N, C), jnp.float32),
    )(xr)


# ---------------------------------------------------------------------------
# Conv = im2col (JAX glue, bf16) + Pallas matmul with fused BN/residual/ReLU epilogue
# ---------------------------------------------------------------------------

@functools.partial(jax.jit, static_argnames=("stride", "padding", "relu"))
def conv2d_bn_act(x, w, scale, bias, residual=None, *, stride, padding, relu):
    """x:[N,H,W,Cin], w:[KH,KW,Cin,Cout] -> [N,OH,OW,Cout].

    BN is folded into the weights (scale) and bias; optional residual add + ReLU is
    fused into the matmul epilogue.
    """
    N, H, W, Cin = x.shape
    KH, KW, _, Cout = w.shape
    OH = (H + 2 * padding - KH) // stride + 1
    OW = (W + 2 * padding - KW) // stride + 1

    x = x.astype(jnp.bfloat16)
    if KH == 1 and KW == 1 and padding == 0:
        xs = x[:, ::stride, ::stride, :] if stride > 1 else x
        patches = xs.reshape(N * OH * OW, Cin)
    else:
        # TODO(synk): im2col still materializes KH*KW x the activation in HBM; a fully
        # fused (tap-axis-in-grid / manual-DMA halo) conv kernel would remove it.
        xp = jnp.pad(x, ((0, 0), (padding, padding), (padding, padding), (0, 0)))
        taps = [xp[:, i:i + stride * OH:stride, j:j + stride * OW:stride, :]
                for i in range(KH) for j in range(KW)]
        patches = jnp.stack(taps, axis=3).reshape(N * OH * OW, KH * KW * Cin)

    # Fold the BN scale into the weight so the kernel epilogue is just "+ bias".
    wmat = (w.reshape(KH * KW * Cin, Cout) * scale[None, :]).astype(jnp.bfloat16)
    r = None
    if residual is not None:
        r = residual.reshape(N * OH * OW, Cout).astype(jnp.bfloat16)
    out = matmul_bias_act(patches, wmat, bias.astype(jnp.float32), r, relu=relu)
    return out.reshape(N, OH, OW, Cout)


# ---------------------------------------------------------------------------
# Deterministic parameter init (synthetic, no pretrained weights)
# ---------------------------------------------------------------------------

def _conv_w(key, kh, kw, cin, cout):
    return (jax.random.normal(key, (kh, kw, cin, cout), jnp.float32)
            * jnp.sqrt(2.0 / (kh * kw * cin)))


def _bn(key, c, eps=1e-5):
    k1, k2, k3, k4 = jax.random.split(key, 4)
    gamma = jax.random.uniform(k1, (c,), minval=0.9, maxval=1.1)
    beta = jax.random.normal(k2, (c,)) * 0.01
    mean = jax.random.normal(k3, (c,)) * 0.01
    var = jax.random.uniform(k4, (c,), minval=0.9, maxval=1.1)
    scale = gamma / jnp.sqrt(var + eps)
    bias = beta - mean * scale
    return scale, bias


def init_params(key):
    keys = iter(jax.random.split(key, 256))
    p = {}
    p["conv1_w"] = _conv_w(next(keys), 7, 7, 3, 64)
    p["bn1"] = _bn(next(keys), 64)

    layers = []
    in_c = 64
    for planes, nblocks, stride in [(64, 3, 1), (128, 4, 2), (256, 6, 2), (512, 3, 2)]:
        blocks = []
        for b in range(nblocks):
            s = stride if b == 0 else 1
            blk = {
                "w1": _conv_w(next(keys), 1, 1, in_c, planes),
                "bn1": _bn(next(keys), planes),
                "w2": _conv_w(next(keys), 3, 3, planes, planes),
                "bn2": _bn(next(keys), planes),
                "w3": _conv_w(next(keys), 1, 1, planes, planes * 4),
                "bn3": _bn(next(keys), planes * 4),
                "stride": s,
            }
            if b == 0:
                blk["wd"] = _conv_w(next(keys), 1, 1, in_c, planes * 4)
                blk["bnd"] = _bn(next(keys), planes * 4)
            blocks.append(blk)
            in_c = planes * 4
        layers.append(blocks)
    p["layers"] = layers

    p["fc_w"] = jax.random.normal(next(keys), (2048, 3), jnp.float32) / jnp.sqrt(2048.0)
    p["fc_b"] = jnp.zeros((3,), jnp.float32)
    return p


# ---------------------------------------------------------------------------
# Forward pass (== self.resnet(x) of JccNet)
# ---------------------------------------------------------------------------

def bottleneck(x, blk):
    s = blk["stride"]
    # identity path first so the residual add + ReLU can be fused into conv3's epilogue
    if "wd" in blk:
        identity = conv2d_bn_act(x, blk["wd"], blk["bnd"][0], blk["bnd"][1],
                                 stride=s, padding=0, relu=False)
    else:
        identity = x
    out = conv2d_bn_act(x, blk["w1"], blk["bn1"][0], blk["bn1"][1],
                        stride=1, padding=0, relu=True)
    out = conv2d_bn_act(out, blk["w2"], blk["bn2"][0], blk["bn2"][1],
                        stride=s, padding=1, relu=True)
    out = conv2d_bn_act(out, blk["w3"], blk["bn3"][0], blk["bn3"][1],
                        stride=1, padding=0, relu=True, residual=identity)
    return out


def jccnet_forward(params, x_nchw):
    # layout: accept NCHW, run NHWC / bf16 internally.
    x = jnp.transpose(x_nchw, (0, 2, 3, 1)).astype(jnp.bfloat16)
    # conv1 + bn1 + relu
    x = conv2d_bn_act(x, params["conv1_w"], params["bn1"][0], params["bn1"][1],
                      stride=2, padding=3, relu=True)
    # maxpool 3x3 / stride 2 / pad 1
    x = maxpool2d_3x3_s2(x)
    # layer1..layer4 (bottleneck stacks)
    for blocks in params["layers"]:
        for blk in blocks:
            x = bottleneck(x, blk)
    # AvgPool2d(16, stride=1) -> [N, 2048]
    pooled = avgpool_16x16(x)
    # fc: 2048 -> 3.  Tiny (2x2048 @ 2048x3): plain dot; a padded MXU kernel is wasted.
    logits = pooled @ params["fc_w"] + params["fc_b"]
    return logits


# TODO(synk): DummyLoss / calc_loss are not part of forward() and are not implemented.

if __name__ == "__main__":
    key = jax.random.PRNGKey(0)
    pkey, xkey = jax.random.split(key)
    params = init_params(pkey)
    x = jax.random.normal(xkey, (2, 3, 512, 512), jnp.float32)

    out = jccnet_forward(params, x)
    out = jax.block_until_ready(out)
    assert out.shape == (2, 3), out.shape
    assert bool(jnp.all(jnp.isfinite(out)))
    print("KERNEL_OK")
</pallas_src>

<mosaic_0001>
module attributes {stable_mosaic.version = 11 : i64} {
  func.func @_matmul_bias_kernel(%arg0: i32, %arg1: i32, %arg2: i32, %arg3: memref<2048x256xbf16, #tpu.memory_space<vmem>>, %arg4: memref<256x128xbf16, #tpu.memory_space<vmem>>, %arg5: memref<1x128xf32, #tpu.memory_space<vmem>>, %arg6: memref<2048x128xbf16, #tpu.memory_space<vmem>>, %arg7: memref<2048x128xf32, #tpu.memory_space<vmem>>) attributes {dimension_semantics = [#tpu.dimension_semantics<parallel>, #tpu.dimension_semantics<parallel>, #tpu.dimension_semantics<arbitrary>], iteration_bounds = array<i64: 64, 1, 1>, scalar_prefetch = 0 : i64, scratch_operands = 1 : i64, tpu.core_type = #tpu.core_type<tc>, window_params = [{transform_indices = @transform_0, window_bounds = array<i64: 2048, 256>}, {transform_indices = @transform_1, window_bounds = array<i64: 256, 128>}, {transform_indices = @transform_2, window_bounds = array<i64: 1, 128>}, {transform_indices = @transform_3, window_bounds = array<i64: 2048, 128>}]} {
    %c0_i32 = arith.constant 0 : i32
    %0 = arith.cmpi eq, %arg2, %c0_i32 : i32
    %1 = arith.extui %0 : i1 to i32
    %c0_i32_0 = arith.constant 0 : i32
    %2 = arith.cmpi ne, %1, %c0_i32_0 : i32
    scf.if %2 {
      %cst_10 = arith.constant 0.000000e+00 : f32
      %12 = vector.broadcast %cst_10 : f32 to vector<2048x128xf32>
      %c0_11 = arith.constant 0 : index
      %c0_12 = arith.constant 0 : index
      %13 = vector.load %arg7[%c0_11, %c0_12] : memref<2048x128xf32, #tpu.memory_space<vmem>>, vector<2048x128xf32>
      tpu.vector_store %arg7[%c0_11, %c0_12], %12 {strides = array<i32>} : memref<2048x128xf32, #tpu.memory_space<vmem>>, vector<2048x128xf32>,
    } else {
    }
    %c0 = arith.constant 0 : index
    %c0_1 = arith.constant 0 : index
    %3 = vector.load %arg7[%c0, %c0_1] : memref<2048x128xf32, #tpu.memory_space<vmem>>, vector<2048x128xf32>
    %c0_2 = arith.constant 0 : index
    %c0_3 = arith.constant 0 : index
    %4 = vector.load %arg3[%c0_2, %c0_3] : memref<2048x256xbf16, #tpu.memory_space<vmem>>, vector<2048x256xbf16>
    %c0_4 = arith.constant 0 : index
    %c0_5 = arith.constant 0 : index
    %5 = vector.load %arg4[%c0_4, %c0_5] : memref<256x128xbf16, #tpu.memory_space<vmem>>, vector<256x128xbf16>
    %cst = arith.constant dense<0.000000e+00> : vector<2048x128xf32>
    %6 = tpu.matmul %4, %5, %cst {dimension_numbers = #tpu.dot_dimension_numbers<[1], [0], [0], [1], [0, 0, 1, 1], [], []>} : vector<2048x256xbf16>, vector<256x128xbf16>, vector<2048x128xf32> -> vector<2048x128xf32>
    %7 = arith.addf %3, %6 : vector<2048x128xf32>
    %c0_6 = arith.constant 0 : index
    %c0_7 = arith.constant 0 : index
    %8 = vector.load %arg7[%c0_6, %c0_7] : memref<2048x128xf32, #tpu.memory_space<vmem>>, vector<2048x128xf32>
    tpu.vector_store %arg7[%c0_6, %c0_7], %7 {strides = array<i32>} : memref<2048x128xf32, #tpu.memory_space<vmem>>, vector<2048x128xf32>,
    %c0_i32_8 = arith.constant 0 : i32
    %9 = arith.cmpi eq, %arg2, %c0_i32_8 : i32
    %10 = arith.extui %9 : i1 to i32
    %c0_i32_9 = arith.constant 0 : i32
    %11 = arith.cmpi ne, %10, %c0_i32_9 : i32
    scf.if %11 {
      %c0_10 = arith.constant 0 : index
      %c0_11 = arith.constant 0 : index
      %12 = vector.load %arg7[%c0_10, %c0_11] : memref<2048x128xf32, #tpu.memory_space<vmem>>, vector<2048x128xf32>
      %c0_12 = arith.constant 0 : index
      %c0_13 = arith.constant 0 : index
      %13 = vector.load %arg5[%c0_12, %c0_13] : memref<1x128xf32, #tpu.memory_space<vmem>>, vector<1x128xf32>
      %14 = vector.broadcast %13 : vector<1x128xf32> to vector<2048x128xf32>
      %15 = arith.addf %12, %14 : vector<2048x128xf32>
      %cst_14 = arith.constant 0.000000e+00 : f32
      %16 = vector.broadcast %cst_14 : f32 to vector<2048x128xf32>
      %17 = arith.maximumf %15, %16 : vector<2048x128xf32>
      %18 = arith.truncf %17 : vector<2048x128xf32> to vector<2048x128xbf16>
      %c0_15 = arith.constant 0 : index
      %c0_16 = arith.constant 0 : index
      %19 = vector.load %arg6[%c0_15, %c0_16] : memref<2048x128xbf16, #tpu.memory_space<vmem>>, vector<2048x128xbf16>
      tpu.vector_store %arg6[%c0_15, %c0_16], %18 {strides = array<i32>} : memref<2048x128xbf16, #tpu.memory_space<vmem>>, vector<2048x128xbf16>,
    } else {
    }
    return
  }
  func.func @transform_0(%arg0: i32, %arg1: i32, %arg2: i32) -> (i32, i32) {
    %c0_i32 = arith.constant 0 : i32
    return %arg0, %arg2 : i32, i32
  }
  func.func @transform_1(%arg0: i32, %arg1: i32, %arg2: i32) -> (i32, i32) {
    %c0_i32 = arith.constant 0 : i32
    return %arg2, %arg1 : i32, i32
  }
  func.func @transform_2(%arg0: i32, %arg1: i32, %arg2: i32) -> (i32, i32) {
    %c0_i32 = arith.constant 0 : i32
    %c0_i32_0 = arith.constant 0 : i32
    return %c0_i32, %arg1 : i32, i32
  }
  func.func @transform_3(%arg0: i32, %arg1: i32, %arg2: i32) -> (i32, i32) {
    %c0_i32 = arith.constant 0 : i32
    return %arg0, %arg1 : i32, i32
  }
}

</mosaic_0001>

<llo_original>
// kernel: matmul_bias_act.1
$region0: #{matmul_bias_act.1}
  #allocation0 [shape = 'u32[]', space=smem, size = 0x4, offset = 0x4, fixed_abs, tag = 'smem constant byte address 0x4 - core index']
  #allocation1 [shape = 'u32[144,128]{1,0:T(1,128)}', space=vmem, size = 0x12000, scoped, tag = 'internal scratch']
  #allocation2 [shape = 'f32[2048,128]{1,0:T(8,128)}', space=vmem, size = 0x100000, scoped, tag = 'scratch operand']
  %s0 = inlined_call_operand.hbm [shape: bf16[131072,256], index: 0, kind: input, shape index: {}]
  %s1 = inlined_call_operand.hbm [shape: bf16[256,128], index: 1, kind: input, shape index: {}]
  %s2 = inlined_call_operand.hbm [shape: f32[1,128], index: 2, kind: input, shape index: {}]
  %s3 = inlined_call_operand.vmem [shape: bf16[131072,128], index: 3, kind: output, shape index: {}]
  %s4 = sld [smem:[#allocation0]]
  $region65: #{matmul_bias_act.1} parent=0
    _
  %s6 = ssub.s32 1, %s4
  %s7 = scalar_select 0, %s6, %s4
  $region1: #{matmul_bias_act.1} parent=0
    #allocation3 [shape = 'u8[2097152]{0}', space=vmem, size = 0x200000, scoped, tag = 'input window, operand 0']
    #allocation4 [shape = 's32[2]{0}', space=sflag, size = 0x8, scoped, tag = 'scoped memory for matmul_bias_act.1']
    #allocation5 [shape = 'u8[65536]{0}', space=vmem, size = 0x10000, scoped, tag = 'input window, operand 1, single buffered']
    #allocation6 [shape = 's32[1]{0}', space=sflag, size = 0x4, scoped, tag = 'scoped memory for matmul_bias_act.1']
    #allocation7 [shape = 'u8[512]{0}', space=vmem, size = 0x400, scoped, tag = 'input window, operand 2, single buffered']
    %8 = vsyncpa [#allocation4], 0
    %s9 = scalar_lea.sflag [#allocation4], 1
    %10 = vsyncpa %s9, 0
    %11 = vsyncpa [#allocation6], 0
    loop: start=0, step=1, limit=66
    $region2: #{matmul_bias_act.1} parent=1 // loop_pre_header
      _
    $region3: #{matmul_bias_act.1} parent=1 // loop_header
      %s13 = sphi 0, %s17
      %p14 = scmp.ge.s32.totalorder %s13, 66
      %s20 = sphi 0, %s39
      %s21 = sphi 0, %s35
      %s22 = sphi 0, %s31
      %s23 = sphi 0, %s20
      %s24 = sphi 0, %s21
      %s25 = sphi 0, %s22
      %s26 = sphi 0, %s23
      %s27 = sphi 0, %s24
      %s28 = sphi 0, %s25
      %s44 = sphi 0, %s46
      %s47 = sphi 0, %s44
      %s48 = sphi 0, %s47
      %s64 = sphi 0, %s48
      %s72 = sphi 0, %s74
      %s75 = sphi 0, %s72
      %s76 = sphi 0, %s75
      %s92 = sphi 0, %s76
      %s98 = sphi 0, %s100
      %s101 = sphi 0, %s98
      %s102 = sphi 0, %s101
      %s118 = sphi 0, %s102
      %s126 = sphi 0, %s128
      %s129 = sphi 0, %s126
      %s130 = sphi 0, %s129
      %s146 = sphi 0, %s130
    $region4: #{matmul_bias_act.1} parent=1 // loop_header_branch
      %16 = sbr.rel (%p14) target = $region8
    $region5: #{matmul_bias_act.1} parent=1 // loop_body
      %s18 = ssub.s32 %s13, 1
      %s19 = ssub.s32 %s13, 2
      %s29 = sadd.s32 1, %s22
      %p30 = scmp.ge.s32.totalorder %s29, 1
      %s31 = scalar_select %p30, 0, %s29
      %s32 = sadd.s32 1, %s21
      %s33 = scalar_select %p30, %s32, %s21
      %p34 = scmp.ge.s32.totalorder %s33, 1
      %s35 = scalar_select %p34, 0, %s33
      %s36 = sadd.s32 1, %s20
      %s37 = scalar_select %p34, %s36, %s20
      %p38 = scmp.ge.s32.totalorder %s37, 64
      %s39 = scalar_select %p38, 0, %s37
      %s40 = ssub.s32 %s20, %s39
      %s41 = ssub.s32 %s22, %s31
      %s42 = sor.u32 %s40, %s41
      %p43 = scmp.eq.s32.totalorder %s42, 0
      %s45 = sadd.s32 %s44, 1
      %s46 = scalar_select %p43, %s44, %s45
      %p49 = pneg %p43
      %p50 = scmp.eq.s32.totalorder %s13, 63
      %p51 = por %p49, %p50
      %p52 = scmp.ne.s32.totalorder %s44, %s47
      %p53 = scmp.eq.s32.totalorder %s13, 0
      %p54 = por %p52, %p53
      %p55 = scmp.ne.s32.totalorder %s44, %s47
      %p56 = scmp.eq.s32.totalorder %s18, 63
      %p57 = por %p55, %p56
      %p58 = scmp.ne.s32.totalorder %s47, %s48
      %p59 = scmp.eq.s32.totalorder %s18, 0
      %p60 = por %p58, %p59
      %p61 = scmp.ne.s32.totalorder %s47, %s48
      %p62 = scmp.eq.s32.totalorder %s19, 63
      %p63 = por %p61, %p62
      %p65 = scmp.ne.s32.totalorder %s48, %s64
      %p66 = scmp.eq.s32.totalorder %s19, 0
      %p67 = por %p65, %p66
      %s68 = ssub.s32 %s22, %s31
      %s69 = ssub.s32 %s21, %s35
      %s70 = sor.u32 %s68, %s69
      %p71 = scmp.eq.s32.totalorder %s70, 0
      %s73 = sadd.s32 %s72, 1
      %s74 = scalar_select %p71, %s72, %s73
      %p77 = pneg %p71
      %p78 = scmp.eq.s32.totalorder %s13, 63
      %p79 = por %p77, %p78
      %p80 = scmp.ne.s32.totalorder %s72, %s75
      %p81 = scmp.eq.s32.totalorder %s13, 0
      %p82 = por %p80, %p81
      %p83 = scmp.ne.s32.totalorder %s72, %s75
      %p84 = scmp.eq.s32.totalorder %s18, 63
      %p85 = por %p83, %p84
      %p86 = scmp.ne.s32.totalorder %s75, %s76
      %p87 = scmp.eq.s32.totalorder %s18, 0
      %p88 = por %p86, %p87
      %p89 = scmp.ne.s32.totalorder %s75, %s76
      %p90 = scmp.eq.s32.totalorder %s19, 63
      %p91 = por %p89, %p90
      %p93 = scmp.ne.s32.totalorder %s76, %s92
      %p94 = scmp.eq.s32.totalorder %s19, 0
      %p95 = por %p93, %p94
      %s96 = ssub.s32 %s21, %s35
      %p97 = scmp.eq.s32.totalorder %s96, 0
      %s99 = sadd.s32 %s98, 1
      %s100 = scalar_select %p97, %s98, %s99
      %p103 = pneg %p97
      %p104 = scmp.eq.s32.totalorder %s13, 63
      %p105 = por %p103, %p104
      %p106 = scmp.ne.s32.totalorder %s98, %s101
      %p107 = scmp.eq.s32.totalorder %s13, 0
      %p108 = por %p106, %p107
      %p109 = scmp.ne.s32.totalorder %s98, %s101
      %p110 = scmp.eq.s32.totalorder %s18, 63
      %p111 = por %p109, %p110
      %p112 = scmp.ne.s32.totalorder %s101, %s102
      %p113 = scmp.eq.s32.totalorder %s18, 0
      %p114 = por %p112, %p113
      %p115 = scmp.ne.s32.totalorder %s101, %s102
      %p116 = scmp.eq.s32.totalorder %s19, 63
      %p117 = por %p115, %p116
      %p119 = scmp.ne.s32.totalorder %s102, %s118
      %p120 = scmp.eq.s32.totalorder %s19, 0
      %p121 = por %p119, %p120
      %s122 = ssub.s32 %s20, %s39
      %s123 = ssub.s32 %s21, %s35
      %s124 = sor.u32 %s122, %s123
      %p125 = scmp.eq.s32.totalorder %s124, 0
      %s127 = sadd.s32 %s126, 1
      %s128 = scalar_select %p125, %s126, %s127
      %p131 = pneg %p125
      %p132 = scmp.eq.s32.totalorder %s13, 63
      %p133 = por %p131, %p132
      %p134 = scmp.ne.s32.totalorder %s126, %s129
      %p135 = scmp.eq.s32.totalorder %s13, 0
      %p136 = por %p134, %p135
      %p137 = scmp.ne.s32.totalorder %s126, %s129
      %p138 = scmp.eq.s32.totalorder %s18, 63
      %p139 = por %p137, %p138
      %p140 = scmp.ne.s32.totalorder %s129, %s130
      %p141 = scmp.eq.s32.totalorder %s18, 0
      %p142 = por %p140, %p141
      %p143 = scmp.ne.s32.totalorder %s129, %s130
      %p144 = scmp.eq.s32.totalorder %s19, 63
      %p145 = por %p143, %p144
      %p147 = scmp.ne.s32.totalorder %s130, %s146
      %p148 = scmp.eq.s32.totalorder %s19, 0
      %p149 = por %p147, %p148
      %p150 = scmp.le.s32.totalorder 1, %s13
      %p151 = scmp.lt.s32.totalorder %s13, 65
      %p152 = pnand %p150, %p151
      %p153 = pneg %p152
      // Predicated region
      $region9: #{matmul_bias_act.1} parent=5 // pred_check
        _
      $region10: #{matmul_bias_act.1} parent=5 // pred_check_branch
        %155 = sbr.rel (%p152) target = $region12
      $region11: #{matmul_bias_act.1} parent=5 // pred_region
        %s156 = ssub.s32 %s13, 1
        // Predicated region
        $region13: #{matmul_bias_act.1} parent=11 // pred_check
          %p157 = pneg %p88
        $region14: #{matmul_bias_act.1} parent=11 // pred_check_branch
          %159 = sbr.rel (%p157) target = $region16
        $region15: #{matmul_bias_act.1} parent=11 // pred_region
          %s160 = smul.u32 32, %s25
          %s162 = ssub.s32 2048, 2048
          %163 = vsyncadd [#allocation6], %s162
          %s164 = sadd.s32 %s24, %s160
          %s165 = smul.addr %s164, 64
          %s166 = scalar_lea.hbm %s1, %s165
          %s167 = sshll.u32 [#allocation5], 4
          %s168 = int_to_ptr.vmem [resolvable:$true] %s167
          %173 = dma.hbm_to_vmem [thread:$0]  %s166, 2048, %s168, [#allocation6], 64, 64, 4
        $region16: #{matmul_bias_act.1} parent=11 // pred_fallthru
          _
        // Predicated region
        $region17: #{matmul_bias_act.1} parent=11 // pred_check
          %p174 = pneg %p114
        $region18: #{matmul_bias_act.1} parent=11 // pred_check_branch
          %176 = sbr.rel (%p174) target = $region20
        $region19: #{matmul_bias_act.1} parent=11 // pred_region
          %s178 = ssub.s32 16, 16
          %179 = vsyncadd [#allocation6], %s178
          %s180 = smul.addr %s24, 16
          %s181 = scalar_lea.hbm %s2, %s180
          %s183 = sshll.u32 [#allocation7], 4
          %s184 = int_to_ptr.vmem [resolvable:$true] %s183
          %186 = dma.hbm_to_vmem [thread:$0]  %s181, 16, %s184, [#allocation6]
        $region20: #{matmul_bias_act.1} parent=11 // pred_fallthru
          _
      $region12: #{matmul_bias_act.1} parent=5 // pred_fallthru
        _
      %p187 = scmp.lt.s32.totalorder %s13, 64
      // Predicated region
      $region21: #{matmul_bias_act.1} parent=5 // pred_check
        %p188 = pneg %p187
      $region22: #{matmul_bias_act.1} parent=5 // pred_check_branch
        %190 = sbr.rel (%p188) target = $region24
      $region23: #{matmul_bias_act.1} parent=5 // pred_region
        // Predicated region
        $region25: #{matmul_bias_act.1} parent=23 // pred_check
          %p191 = pneg %p54
        $region26: #{matmul_bias_act.1} parent=23 // pred_check_branch
          %193 = sbr.rel (%p191) target = $region28
        $region27: #{matmul_bias_act.1} parent=23 // pred_region
          %s194 = sand.u32 %s44, 1
          %s195 = scalar_lea.sflag [#allocation4], %s194
          %s196 = sand.u32 %s44, 1
          %s197 = smul.addr %s196, 2048
          %s198 = scalar_lea.vmem [#allocation3], %s197
          %s199 = smul.u32 256, %s20
          %s200 = smul.u32 2, %s22
          %s202 = ssub.s32 32768, 32768
          %203 = vsyncadd %s195, %s202
          %s204 = smul.addr %s199, 2
          %s205 = sadd.s32 %s200, %s204
          %s206 = smul.addr %s205, 64
          %s207 = scalar_lea.hbm %s0, %s206
          %s208 = sshll.u32 %s198, 4
          %s209 = int_to_ptr.vmem [resolvable:$true] %s208
          %214 = dma.hbm_to_vmem [thread:$0]  %s207, 32768, %s209, %s195, 128, 128, 8
        $region28: #{matmul_bias_act.1} parent=23 // pred_fallthru
          _
      $region24: #{matmul_bias_act.1} parent=5 // pred_fallthru
        _
      %p215 = scmp.le.s32.totalorder 1, %s13
      %p216 = scmp.lt.s32.totalorder %s13, 65
      %p217 = pnand %p215, %p216
      %p218 = pneg %p217
      // Predicated region
      $region29: #{matmul_bias_act.1} parent=5 // pred_check
        _
      $region30: #{matmul_bias_act.1} parent=5 // pred_check_branch
        %220 = sbr.rel (%p217) target = $region32
      $region31: #{matmul_bias_act.1} parent=5 // pred_region
        %s221 = ssub.s32 %s13, 1
        %s222 = sand.u32 %s47, 1
        %s223 = scalar_lea.sflag [#allocation4], %s222
        %s224 = sand.u32 %s47, 1
        %s225 = smul.addr %s224, 2048
        %s226 = scalar_lea.vmem [#allocation3], %s225
        // Predicated region
        $region33: #{matmul_bias_act.1} parent=31 // pred_check
          %p227 = pneg %p60
        $region34: #{matmul_bias_act.1} parent=31 // pred_check_branch
          %229 = sbr.rel (%p227) target = $region36
        $region35: #{matmul_bias_act.1} parent=31 // pred_region
          %230 = dma.done %s223, 32768
        $region36: #{matmul_bias_act.1} parent=31 // pred_fallthru
          _
        // Predicated region
        $region37: #{matmul_bias_act.1} parent=31 // pred_check
          %p231 = pneg %p88
        $region38: #{matmul_bias_act.1} parent=31 // pred_check_branch
          %233 = sbr.rel (%p231) target = $region40
        $region39: #{matmul_bias_act.1} parent=31 // pred_region
          %234 = dma.done [#allocation6], 2048
        $region40: #{matmul_bias_act.1} parent=31 // pred_fallthru
          _
        // Predicated region
        $region41: #{matmul_bias_act.1} parent=31 // pred_check
          %p235 = pneg %p114
        $region42: #{matmul_bias_act.1} parent=31 // pred_check_branch
          %237 = sbr.rel (%p235) target = $region44
        $region43: #{matmul_bias_act.1} parent=31 // pred_region
          %238 = dma.done [#allocation6], 16
        $region44: #{matmul_bias_act.1} parent=31 // pred_fallthru
          _
        %s239 = sand.u32 %s47, 1
        %s240 = scalar_lea.sflag [#allocation4], %s239
        %s241 = sand.u32 %s47, 1
        %s242 = smul.addr %s241, 2048
        %s243 = scalar_lea.vmem [#allocation3], %s242
        %p244 = pneg %p60
        %p245 = pneg %p57
        %p246 = pneg %p88
        %p247 = pneg %p85
        %p248 = pneg %p114
        %p249 = pneg %p111
        %p250 = pneg %p142
        %p251 = pneg %p139
        %s252 = smul.u32 256, %s23
        %p253 = scmp.lt.s32.totalorder %s252, 16383
        %s254 = scalar_select %p253, %s252, 16383
        %p255 = scmp.lt.s32.totalorder %s24, 0
        %s256 = scalar_select %p255, %s24, 0
        %s257 = sadd.s32 %s256, %s254
        %s258 = smul.addr %s257, 4
        %s259 = scalar_lea.vmem %s3, %s258
        %s260 = smul.u32 256, %s23
        %s261 = smul.u32 2, %s25
        %s262 = smul.u32 32, %s25
        %s263 = smul.u32 256, %s23
        %p264 = scmp.lt.s32.totalorder %s263, 16383
        %s265 = scalar_select %p264, %s263, 16383
        %p266 = scmp.lt.s32.totalorder %s24, 0
        %s267 = scalar_select %p266, %s24, 0
        %s268 = sadd.s32 %s267, %s265
        %s269 = smul.addr %s268, 4
        %s270 = scalar_lea.vmem %s3, %s269
        %s271 = smul.u32 256, %s23
        %p273 = scmp.eq.s32.totalorder %s25, 0
        // Predicated region
        $region45: #{matmul_bias_act.1} parent=31 // pred_check
          %p274 = pneg %p273
        $region46: #{matmul_bias_act.1} parent=31 // pred_check_branch
          %276 = sbr.rel (%p274) target = $region48
        $region47: #{matmul_bias_act.1} parent=31 // pred_region
          %277 = vst [vmem:[#allocation2] sm:$0xff] 0.0
          %278 = vst [vmem:[#allocation2 + $0x8] sm:$0xff] 0.0
          %279 = vst [vmem:[#allocation2 + $0x10] sm:$0xff] 0.0
          %280 = vst [vmem:[#allocation2 + $0x18] sm:$0xff] 0.0
          %281 = vst [vmem:[#allocation2 + $0x20] sm:$0xff] 0.0
          %282 = vst [vmem:[#allocation2 + $0x28] sm:$0xff] 0.0
          %283 = vst [vmem:[#allocation2 + $0x30] sm:$0xff] 0.0
          %284 = vst [vmem:[#allocation2 + $0x38] sm:$0xff] 0.0
          %285 = vst [vmem:[#allocation2 + $0x40] sm:$0xff] 0.0
          %286 = vst [vmem:[#allocation2 + $0x48] sm:$0xff] 0.0
          %287 = vst [vmem:[#allocation2 + $0x50] sm:$0xff] 0.0
          %288 = vst [vmem:[#allocation2 + $0x58] sm:$0xff] 0.0
          %289 = vst [vmem:[#allocation2 + $0x60] sm:$0xff] 0.0
          %290 = vst [vmem:[#allocation2 + $0x68] sm:$0xff] 0.0
          %291 = vst [vmem:[#allocation2 + $0x70] sm:$0xff] 0.0
          %292 = vst [vmem:[#allocation2 + $0x78] sm:$0xff] 0.0
          %293 = vst [vmem:[#allocation2 + $0x80] sm:$0xff] 0.0
          %294 = vst [vmem:[#allocation2 + $0x88] sm:$0xff] 0.0
          %295 = vst [vmem:[#allocation2 + $0x90] sm:$0xff] 0.0
          %296 = vst [vmem:[#allocation2 + $0x98] sm:$0xff] 0.0
          %297 = vst [vmem:[#allocation2 + $0xa0] sm:$0xff] 0.0
          %298 = vst [vmem:[#allocation2 + $0xa8] sm:$0xff] 0.0
          %299 = vst [vmem:[#allocation2 + $0xb0] sm:$0xff] 0.0
          %300 = vst [vmem:[#allocation2 + $0xb8] sm:$0xff] 0.0
          %301 = vst [vmem:[#allocation2 + $0xc0] sm:$0xff] 0.0
          %302 = vst [vmem:[#allocation2 + $0xc8] sm:$0xff] 0.0
          %303 = vst [vmem:[#allocation2 + $0xd0] sm:$0xff] 0.0
          %304 = vst [vmem:[#allocation2 + $0xd8] sm:$0xff] 0.0
          %305 = vst [vmem:[#allocation2 + $0xe0] sm:$0xff] 0.0
          %306 = vst [vmem:[#allocation2 + $0xe8] sm:$0xff] 0.0
          %307 = vst [vmem:[#allocation2 + $0xf0] sm:$0xff] 0.0
          %308 = vst [vmem:[#allocation2 + $0xf8] sm:$0xff] 0.0
          %309 = vst [vmem:[#allocation2 + $0x100] sm:$0xff] 0.0
          %310 = vst [vmem:[#allocation2 + $0x108] sm:$0xff] 0.0
          %311 = vst [vmem:[#allocation2 + $0x110] sm:$0xff] 0.0
          %312 = vst [vmem:[#allocation2 + $0x118] sm:$0xff] 0.0
          %313 = vst [vmem:[#allocation2 + $0x120] sm:$0xff] 0.0
          %314 = vst [vmem:[#allocation2 + $0x128] sm:$0xff] 0.0
          %315 = vst [vmem:[#allocation2 + $0x130] sm:$0xff] 0.0
          %316 = vst [vmem:[#allocation2 + $0x138] sm:$0xff] 0.0
          %317 = vst [vmem:[#allocation2 + $0x140] sm:$0xff] 0.0
          %318 = vst [vmem:[#allocation2 + $0x148] sm:$0xff] 0.0
          %319 = vst [vmem:[#allocation2 + $0x150] sm:$0xff] 0.0
          %320 = vst [vmem:[#allocation2 + $0x158] sm:$0xff] 0.0
          %321 = vst [vmem:[#allocation2 + $0x160] sm:$0xff] 0.0
          %322 = vst [vmem:[#allocation2 + $0x168] sm:$0xff] 0.0
          %323 = vst [vmem:[#allocation2 + $0x170] sm:$0xff] 0.0
          %324 = vst [vmem:[#allocation2 + $0x178] sm:$0xff] 0.0
          %325 = vst [vmem:[#allocation2 + $0x180] sm:$0xff] 0.0
          %326 = vst [vmem:[#allocation2 + $0x188] sm:$0xff] 0.0
          %327 = vst [vmem:[#allocation2 + $0x190] sm:$0xff] 0.0
          %328 = vst [vmem:[#allocation2 + $0x198] sm:$0xff] 0.0
          %329 = vst [vmem:[#allocation2 + $0x1a0] sm:$0xff] 0.0
          %330 = vst [vmem:[#allocation2 + $0x1a8] sm:$0xff] 0.0
          %331 = vst [vmem:[#allocation2 + $0x1b0] sm:$0xff] 0.0
          %332 = vst [vmem:[#allocation2 + $0x1b8] sm:$0xff] 0.0
          %333 = vst [vmem:[#allocation2 + $0x1c0] sm:$0xff] 0.0
          %334 = vst [vmem:[#allocation2 + $0x1c8] sm:$0xff] 0.0
          %335 = vst [vmem:[#allocation2 + $0x1d0] sm:$0xff] 0.0
          %336 = vst [vmem:[#allocation2 + $0x1d8] sm:$0xff] 0.0
          %337 = vst [vmem:[#allocation2 + $0x1e0] sm:$0xff] 0.0
          %338 = vst [vmem:[#allocation2 + $0x1e8] sm:$0xff] 0.0
          %339 = vst [vmem:[#allocation2 + $0x1f0] sm:$0xff] 0.0
          %340 = vst [vmem:[#allocation2 + $0x1f8] sm:$0xff] 0.0
          %341 = vst [vmem:[#allocation2 + $0x200] sm:$0xff] 0.0
          %342 = vst [vmem:[#allocation2 + $0x208] sm:$0xff] 0.0
          %343 = vst [vmem:[#allocation2 + $0x210] sm:$0xff] 0.0
          %344 = vst [vmem:[#allocation2 + $0x218] sm:$0xff] 0.0
          %345 = vst [vmem:[#allocation2 + $0x220] sm:$0xff] 0.0
          %346 = vst [vmem:[#allocation2 + $0x228] sm:$0xff] 0.0
          %347 = vst [vmem:[#allocation2 + $0x230] sm:$0xff] 0.0
          %348 = vst [vmem:[#allocation2 + $0x238] sm:$0xff] 0.0
          %349 = vst [vmem:[#allocation2 + $0x240] sm:$0xff] 0.0
          %350 = vst [vmem:[#allocation2 + $0x248] sm:$0xff] 0.0
          %351 = vst [vmem:[#allocation2 + $0x250] sm:$0xff] 0.0
          %352 = vst [vmem:[#allocation2 + $0x258] sm:$0xff] 0.0
          %353 = vst [vmem:[#allocation2 + $0x260] sm:$0xff] 0.0
          %354 = vst [vmem:[#allocation2 + $0x268] sm:$0xff] 0.0
          %355 = vst [vmem:[#allocation2 + $0x270] sm:$0xff] 0.0
          %356 = vst [vmem:[#allocation2 + $0x278] sm:$0xff] 0.0
          %357 = vst [vmem:[#allocation2 + $0x280] sm:$0xff] 0.0
          %358 = vst [vmem:[#allocation2 + $0x288] sm:$0xff] 0.0
          %359 = vst [vmem:[#allocation2 + $0x290] sm:$0xff] 0.0
          %360 = vst [vmem:[#allocation2 + $0x298] sm:$0xff] 0.0
          %361 = vst [vmem:[#allocation2 + $0x2a0] sm:$0xff] 0.0
          %362 = vst [vmem:[#allocation2 + $0x2a8] sm:$0xff] 0.0
          %363 = vst [vmem:[#allocation2 + $0x2b0] sm:$0xff] 0.0
          %364 = vst [vmem:[#allocation2 + $0x2b8] sm:$0xff] 0.0
          %365 = vst [vmem:[#allocation2 + $0x2c0] sm:$0xff] 0.0
          %366 = vst [vmem:[#allocation2 + $0x2c8] sm:$0xff] 0.0
          %367 = vst [vmem:[#allocation2 + $0x2d0] sm:$0xff] 0.0
          %368 = vst [vmem:[#allocation2 + $0x2d8] sm:$0xff] 0.0
          %369 = vst [vmem:[#allocation2 + $0x2e0] sm:$0xff] 0.0
          %370 = vst [vmem:[#allocation2 + $0x2e8] sm:$0xff] 0.0
          %371 = vst [vmem:[#allocation2 + $0x2f0] sm:$0xff] 0.0
          %372 = vst [vmem:[#allocation2 + $0x2f8] sm:$0xff] 0.0
          %373 = vst [vmem:[#allocation2 + $0x300] sm:$0xff] 0.0
          %374 = vst [vmem:[#allocation2 + $0x308] sm:$0xff] 0.0
          %375 = vst [vmem:[#allocation2 + $0x310] sm:$0xff] 0.0
          %376 = vst [vmem:[#allocation2 + $0x318] sm:$0xff] 0.0
          %377 = vst [vmem:[#allocation2 + $0x320] sm:$0xff] 0.0
          %378 = vst [vmem:[#allocation2 + $0x328] sm:$0xff] 0.0
          %379 = vst [vmem:[#allocation2 + $0x330] sm:$0xff] 0.0
          %380 = vst [vmem:[#allocation2 + $0x338] sm:$0xff] 0.0
          %381 = vst [vmem:[#allocation2 + $0x340] sm:$0xff] 0.0
          %382 = vst [vmem:[#allocation2 + $0x348] sm:$0xff] 0.0
          %383 = vst [vmem:[#allocation2 + $0x350] sm:$0xff] 0.0
          %384 = vst [vmem:[#allocation2 + $0x358] sm:$0xff] 0.0
          %385 = vst [vmem:[#allocation2 + $0x360] sm:$0xff] 0.0
          %386 = vst [vmem:[#allocation2 + $0x368] sm:$0xff] 0.0
          %387 = vst [vmem:[#allocation2 + $0x370] sm:$0xff] 0.0
          %388 = vst [vmem:[#allocation2 + $0x378] sm:$0xff] 0.0
          %389 = vst [vmem:[#allocation2 + $0x380] sm:$0xff] 0.0
          %390 = vst [vmem:[#allocation2 + $0x388] sm:$0xff] 0.0
          %391 = vst [vmem:[#allocation2 + $0x390] sm:$0xff] 0.0
          %392 = vst [vmem:[#allocation2 + $0x398] sm:$0xff] 0.0
          %393 = vst [vmem:[#allocation2 + $0x3a0] sm:$0xff] 0.0
          %394 = vst [vmem:[#allocation2 + $0x3a8] sm:$0xff] 0.0
          %395 = vst [vmem:[#allocation2 + $0x3b0] sm:$0xff] 0.0
          %396 = vst [vmem:[#allocation2 + $0x3b8] sm:$0xff] 0.0
          %397 = vst [vmem:[#allocation2 + $0x3c0] sm:$0xff] 0.0
          %398 = vst [vmem:[#allocation2 + $0x3c8] sm:$0xff] 0.0
          %399 = vst [vmem:[#allocation2 + $0x3d0] sm:$0xff] 0.0
          %400 = vst [vmem:[#allocation2 + $0x3d8] sm:$0xff] 0.0
          %401 = vst [vmem:[#allocation2 + $0x3e0] sm:$0xff] 0.0
          %402 = vst [vmem:[#allocation2 + $0x3e8] sm:$0xff] 0.0
          %403 = vst [vmem:[#allocation2 + $0x3f0] sm:$0xff] 0.0
          %404 = vst [vmem:[#allocation2 + $0x3f8] sm:$0xff] 0.0
          %405 = vst [vmem:[#allocation2 + $0x400] sm:$0xff] 0.0
          %406 = vst [vmem:[#allocation2 + $0x408] sm:$0xff] 0.0
          %407 = vst [vmem:[#allocation2 + $0x410] sm:$0xff] 0.0
          %408 = vst [vmem:[#allocation2 + $0x418] sm:$0xff] 0.0
          %409 = vst [vmem:[#allocation2 + $0x420] sm:$0xff] 0.0
          %410 = vst [vmem:[#allocation2 + $0x428] sm:$0xff] 0.0
          %411 = vst [vmem:[#allocation2 + $0x430] sm:$0xff] 0.0
          %412 = vst [vmem:[#allocation2 + $0x438] sm:$0xff] 0.0
          %413 = vst [vmem:[#allocation2 + $0x440] sm:$0xff] 0.0
          %414 = vst [vmem:[#allocation2 + $0x448] sm:$0xff] 0.0
          %415 = vst [vmem:[#allocation2 + $0x450] sm:$0xff] 0.0
          %416 = vst [vmem:[#allocation2 + $0x458] sm:$0xff] 0.0
          %417 = vst [vmem:[#allocation2 + $0x460] sm:$0xff] 0.0
          %418 = vst [vmem:[#allocation2 + $0x468] sm:$0xff] 0.0
          %419 = vst [vmem:[#allocation2 + $0x470] sm:$0xff] 0.0
          %420 = vst [vmem:[#allocation2 + $0x478] sm:$0xff] 0.0
          %421 = vst [vmem:[#allocation2 + $0x480] sm:$0xff] 0.0
          %422 = vst [vmem:[#allocation2 + $0x488] sm:$0xff] 0.0
          %423 = vst [vmem:[#allocation2 + $0x490] sm:$0xff] 0.0
          %424 = vst [vmem:[#allocation2 + $0x498] sm:$0xff] 0.0
          %425 = vst [vmem:[#allocation2 + $0x4a0] sm:$0xff] 0.0
          %426 = vst [vmem:[#allocation2 + $0x4a8] sm:$0xff] 0.0
          %427 = vst [vmem:[#allocation2 + $0x4b0] sm:$0xff] 0.0
          %428 = vst [vmem:[#allocation2 + $0x4b8] sm:$0xff] 0.0
          %429 = vst [vmem:[#allocation2 + $0x4c0] sm:$0xff] 0.0
          %430 = vst [vmem:[#allocation2 + $0x4c8] sm:$0xff] 0.0
          %431 = vst [vmem:[#allocation2 + $0x4d0] sm:$0xff] 0.0
          %432 = vst [vmem:[#allocation2 + $0x4d8] sm:$0xff] 0.0
          %433 = vst [vmem:[#allocation2 + $0x4e0] sm:$0xff] 0.0
          %434 = vst [vmem:[#allocation2 + $0x4e8] sm:$0xff] 0.0
          %435 = vst [vmem:[#allocation2 + $0x4f0] sm:$0xff] 0.0
          %436 = vst [vmem:[#allocation2 + $0x4f8] sm:$0xff] 0.0
          %437 = vst [vmem:[#allocation2 + $0x500] sm:$0xff] 0.0
          %438 = vst [vmem:[#allocation2 + $0x508] sm:$0xff] 0.0
          %439 = vst [vmem:[#allocation2 + $0x510] sm:$0xff] 0.0
          %440 = vst [vmem:[#allocation2 + $0x518] sm:$0xff] 0.0
          %441 = vst [vmem:[#allocation2 + $0x520] sm:$0xff] 0.0
          %442 = vst [vmem:[#allocation2 + $0x528] sm:$0xff] 0.0
          %443 = vst [vmem:[#allocation2 + $0x530] sm:$0xff] 0.0
          %444 = vst [vmem:[#allocation2 + $0x538] sm:$0xff] 0.0
          %445 = vst [vmem:[#allocation2 + $0x540] sm:$0xff] 0.0
          %446 = vst [vmem:[#allocation2 + $0x548] sm:$0xff] 0.0
          %447 = vst [vmem:[#allocation2 + $0x550] sm:$0xff] 0.0
          %448 = vst [vmem:[#allocation2 + $0x558] sm:$0xff] 0.0
          %449 = vst [vmem:[#allocation2 + $0x560] sm:$0xff] 0.0
          %450 = vst [vmem:[#allocation2 + $0x568] sm:$0xff] 0.0
          %451 = vst [vmem:[#allocation2 + $0x570] sm:$0xff] 0.0
          %452 = vst [vmem:[#allocation2 + $0x578] sm:$0xff] 0.0
          %453 = vst [vmem:[#allocation2 + $0x580] sm:$0xff] 0.0
          %454 = vst [vmem:[#allocation2 + $0x588] sm:$0xff] 0.0
          %455 = vst [vmem:[#allocation2 + $0x590] sm:$0xff] 0.0
          %456 = vst [vmem:[#allocation2 + $0x598] sm:$0xff] 0.0
          %457 = vst [vmem:[#allocation2 + $0x5a0] sm:$0xff] 0.0
          %458 = vst [vmem:[#allocation2 + $0x5a8] sm:$0xff] 0.0
          %459 = vst [vmem:[#allocation2 + $0x5b0] sm:$0xff] 0.0
          %460 = vst [vmem:[#allocation2 + $0x5b8] sm:$0xff] 0.0
          %461 = vst [vmem:[#allocation2 + $0x5c0] sm:$0xff] 0.0
          %462 = vst [vmem:[#allocation2 + $0x5c8] sm:$0xff] 0.0
          %463 = vst [vmem:[#allocation2 + $0x5d0] sm:$0xff] 0.0
          %464 = vst [vmem:[#allocation2 + $0x5d8] sm:$0xff] 0.0
          %465 = vst [vmem:[#allocation2 + $0x5e0] sm:$0xff] 0.0
          %466 = vst [vmem:[#allocation2 + $0x5e8] sm:$0xff] 0.0
          %467 = vst [vmem:[#allocation2 + $0x5f0] sm:$0xff] 0.0
          %468 = vst [vmem:[#allocation2 + $0x5f8] sm:$0xff] 0.0
          %469 = vst [vmem:[#allocation2 + $0x600] sm:$0xff] 0.0
          %470 = vst [vmem:[#allocation2 + $0x608] sm:$0xff] 0.0
          %471 = vst [vmem:[#allocation2 + $0x610] sm:$0xff] 0.0
          %472 = vst [vmem:[#allocation2 + $0x618] sm:$0xff] 0.0
          %473 = vst [vmem:[#allocation2 + $0x620] sm:$0xff] 0.0
          %474 = vst [vmem:[#allocation2 + $0x628] sm:$0xff] 0.0
          %475 = vst [vmem:[#allocation2 + $0x630] sm:$0xff] 0.0
          %476 = vst [vmem:[#allocation2 + $0x638] sm:$0xff] 0.0
          %477 = vst [vmem:[#allocation2 + $0x640] sm:$0xff] 0.0
          %478 = vst [vmem:[#allocation2 + $0x648] sm:$0xff] 0.0
          %479 = vst [vmem:[#allocation2 + $0x650] sm:$0xff] 0.0
          %480 = vst [vmem:[#allocation2 + $0x658] sm:$0xff] 0.0
          %481 = vst [vmem:[#allocation2 + $0x660] sm:$0xff] 0.0
          %482 = vst [vmem:[#allocation2 + $0x668] sm:$0xff] 0.0
          %483 = vst [vmem:[#allocation2 + $0x670] sm:$0xff] 0.0
          %484 = vst [vmem:[#allocation2 + $0x678] sm:$0xff] 0.0
          %485 = vst [vmem:[#allocation2 + $0x680] sm:$0xff] 0.0
          %486 = vst [vmem:[#allocation2 + $0x688] sm:$0xff] 0.0
          %487 = vst [vmem:[#allocation2 + $0x690] sm:$0xff] 0.0
          %488 = vst [vmem:[#allocation2 + $0x698] sm:$0xff] 0.0
          %489 = vst [vmem:[#allocation2 + $0x6a0] sm:$0xff] 0.0
          %490 = vst [vmem:[#allocation2 + $0x6a8] sm:$0xff] 0.0
          %491 = vst [vmem:[#allocation2 + $0x6b0] sm:$0xff] 0.0
          %492 = vst [vmem:[#allocation2 + $0x6b8] sm:$0xff] 0.0
          %493 = vst [vmem:[#allocation2 + $0x6c0] sm:$0xff] 0.0
          %494 = vst [vmem:[#allocation2 + $0x6c8] sm:$0xff] 0.0
          %495 = vst [vmem:[#allocation2 + $0x6d0] sm:$0xff] 0.0
          %496 = vst [vmem:[#allocation2 + $0x6d8] sm:$0xff] 0.0
          %497 = vst [vmem:[#allocation2 + $0x6e0] sm:$0xff] 0.0
          %498 = vst [vmem:[#allocation2 + $0x6e8] sm:$0xff] 0.0
          %499 = vst [vmem:[#allocation2 + $0x6f0] sm:$0xff] 0.0
          %500 = vst [vmem:[#allocation2 + $0x6f8] sm:$0xff] 0.0
          %501 = vst [vmem:[#allocation2 + $0x700] sm:$0xff] 0.0
          %502 = vst [vmem:[#allocation2 + $0x708] sm:$0xff] 0.0
          %503 = vst [vmem:[#allocation2 + $0x710] sm:$0xff] 0.0
          %504 = vst [vmem:[#allocation2 + $0x718] sm:$0xff] 0.0
          %505 = vst [vmem:[#allocation2 + $0x720] sm:$0xff] 0.0
          %506 = vst [vmem:[#allocation2 + $0x728] sm:$0xff] 0.0
          %507 = vst [vmem:[#allocation2 + $0x730] sm:$0xff] 0.0
          %508 = vst [vmem:[#allocation2 + $0x738] sm:$0xff] 0.0
          %509 = vst [vmem:[#allocation2 + $0x740] sm:$0xff] 0.0
          %510 = vst [vmem:[#allocation2 + $0x748] sm:$0xff] 0.0
          %511 = vst [vmem:[#allocation2 + $0x750] sm:$0xff] 0.0
          %512 = vst [vmem:[#allocation2 + $0x758] sm:$0xff] 0.0
          %513 = vst [vmem:[#allocation2 + $0x760] sm:$0xff] 0.0
          %514 = vst [vmem:[#allocation2 + $0x768] sm:$0xff] 0.0
          %515 = vst [vmem:[#allocation2 + $0x770] sm:$0xff] 0.0
          %516 = vst [vmem:[#allocation2 + $0x778] sm:$0xff] 0.0
          %517 = vst [vmem:[#allocation2 + $0x780] sm:$0xff] 0.0
          %518 = vst [vmem:[#allocation2 + $0x788] sm:$0xff] 0.0
          %519 = vst [vmem:[#allocation2 + $0x790] sm:$0xff] 0.0
          %520 = vst [vmem:[#allocation2 + $0x798] sm:$0xff] 0.0
          %521 = vst [vmem:[#allocation2 + $0x7a0] sm:$0xff] 0.0
          %522 = vst [vmem:[#allocation2 + $0x7a8] sm:$0xff] 0.0
          %523 = vst [vmem:[#allocation2 + $0x7b0] sm:$0xff] 0.0
          %524 = vst [vmem:[#allocation2 + $0x7b8] sm:$0xff] 0.0
          %525 = vst [vmem:[#allocation2 + $0x7c0] sm:$0xff] 0.0
          %526 = vst [vmem:[#allocation2 + $0x7c8] sm:$0xff] 0.0
          %527 = vst [vmem:[#allocation2 + $0x7d0] sm:$0xff] 0.0
          %528 = vst [vmem:[#allocation2 + $0x7d8] sm:$0xff] 0.0
          %529 = vst [vmem:[#allocation2 + $0x7e0] sm:$0xff] 0.0
          %530 = vst [vmem:[#allocation2 + $0x7e8] sm:$0xff] 0.0
          %531 = vst [vmem:[#allocation2 + $0x7f0] sm:$0xff] 0.0
          %532 = vst [vmem:[#allocation2 + $0x7f8] sm:$0xff] 0.0
        $region48: #{matmul_bias_act.1} parent=31 // pred_fallthru
          _
        %v533 = vld [vmem:[#allocation2] sm:$0xff]
        %v534 = vld [vmem:[#allocation2 + $0x8] sm:$0xff]
        %v535 = vld [vmem:[#allocation2 + $0x10] sm:$0xff]
        %v536 = vld [vmem:[#allocation2 + $0x18] sm:$0xff]
        %v537 = vld [vmem:[#allocation2 + $0x20] sm:$0xff]
        %v538 = vld [vmem:[#allocation2 + $0x28] sm:$0xff]
        %v539 = vld [vmem:[#allocation2 + $0x30] sm:$0xff]
        %v540 = vld [vmem:[#allocation2 + $0x38] sm:$0xff]
        %v541 = vld [vmem:[#allocation2 + $0x40] sm:$0xff]
        %v542 = vld [vmem:[#allocation2 + $0x48] sm:$0xff]
        %v543 = vld [vmem:[#allocation2 + $0x50] sm:$0xff]
        %v544 = vld [vmem:[#allocation2 + $0x58] sm:$0xff]
        %v545 = vld [vmem:[#allocation2 + $0x60] sm:$0xff]
        %v546 = vld [vmem:[#allocation2 + $0x68] sm:$0xff]
        %v547 = vld [vmem:[#allocation2 + $0x70] sm:$0xff]
        %v548 = vld [vmem:[#allocation2 + $0x78] sm:$0xff]
        %v549 = vld [vmem:[#allocation2 + $0x80] sm:$0xff]
        %v550 = vld [vmem:[#allocation2 + $0x88] sm:$0xff]
        %v551 = vld [vmem:[#allocation2 + $0x90] sm:$0xff]
        %v552 = vld [vmem:[#allocation2 + $0x98] sm:$0xff]
        %v553 = vld [vmem:[#allocation2 + $0xa0] sm:$0xff]
        %v554 = vld [vmem:[#allocation2 + $0xa8] sm:$0xff]
        %v555 = vld [vmem:[#allocation2 + $0xb0] sm:$0xff]
        %v556 = vld [vmem:[#allocation2 + $0xb8] sm:$0xff]
        %v557 = vld [vmem:[#allocation2 + $0xc0] sm:$0xff]
        %v558 = vld [vmem:[#allocation2 + $0xc8] sm:$0xff]
        %v559 = vld [vmem:[#allocation2 + $0xd0] sm:$0xff]
        %v560 = vld [vmem:[#allocation2 + $0xd8] sm:$0xff]
        %v561 = vld [vmem:[#allocation2 + $0xe0] sm:$0xff]
        %v562 = vld [vmem:[#allocation2 + $0xe8] sm:$0xff]
        %v563 = vld [vmem:[#allocation2 + $0xf0] sm:$0xff]
        %v564 = vld [vmem:[#allocation2 + $0xf8] sm:$0xff]
        %v565 = vld [vmem:[#allocation2 + $0x100] sm:$0xff]
        %v566 = vld [vmem:[#allocation2 + $0x108] sm:$0xff]
        %v567 = vld [vmem:[#allocation2 + $0x110] sm:$0xff]
        %v568 = vld [vmem:[#allocation2 + $0x118] sm:$0xff]
        %v569 = vld [vmem:[#allocation2 + $0x120] sm:$0xff]
        %v570 = vld [vmem:[#allocation2 + $0x128] sm:$0xff]
        %v571 = vld [vmem:[#allocation2 + $0x130] sm:$0xff]
        %v572 = vld [vmem:[#allocation2 + $0x138] sm:$0xff]
        %v573 = vld [vmem:[#allocation2 + $0x140] sm:$0xff]
        %v574 = vld [vmem:[#allocation2 + $0x148] sm:$0xff]
        %v575 = vld [vmem:[#allocation2 + $0x150] sm:$0xff]
        %v576 = vld [vmem:[#allocation2 + $0x158] sm:$0xff]
        %v577 = vld [vmem:[#allocation2 + $0x160] sm:$0xff]
        %v578 = vld [vmem:[#allocation2 + $0x168] sm:$0xff]
        %v579 = vld [vmem:[#allocation2 + $0x170] sm:$0xff]
        %v580 = vld [vmem:[#allocation2 + $0x178] sm:$0xff]
        %v581 = vld [vmem:[#allocation2 + $0x180] sm:$0xff]
        %v582 = vld [vmem:[#allocation2 + $0x188] sm:$0xff]
        %v583 = vld [vmem:[#allocation2 + $0x190] sm:$0xff]
        %v584 = vld [vmem:[#allocation2 + $0x198] sm:$0xff]
        %v585 = vld [vmem:[#allocation2 + $0x1a0] sm:$0xff]
        %v586 = vld [vmem:[#allocation2 + $0x1a8] sm:$0xff]
        %v587 = vld [vmem:[#allocation2 + $0x1b0] sm:$0xff]
        %v588 = vld [vmem:[#allocation2 + $0x1b8] sm:$0xff]
        %v589 = vld [vmem:[#allocation2 + $0x1c0] sm:$0xff]
        %v590 = vld [vmem:[#allocation2 + $0x1c8] sm:$0xff]
        %v591 = vld [vmem:[#allocation2 + $0x1d0] sm:$0xff]
        %v592 = vld [vmem:[#allocation2 + $0x1d8] sm:$0xff]
        %v593 = vld [vmem:[#allocation2 + $0x1e0] sm:$0xff]
        %v594 = vld [vmem:[#allocation2 + $0x1e8] sm:$0xff]
        %v595 = vld [vmem:[#allocation2 + $0x1f0] sm:$0xff]
        %v596 = vld [vmem:[#allocation2 + $0x1f8] sm:$0xff]
        %v597 = vld [vmem:[#allocation2 + $0x200] sm:$0xff]
        %v598 = vld [vmem:[#allocation2 + $0x208] sm:$0xff]
        %v599 = vld [vmem:[#allocation2 + $0x210] sm:$0xff]
        %v600 = vld [vmem:[#allocation2 + $0x218] sm:$0xff]
        %v601 = vld [vmem:[#allocation2 + $0x220] sm:$0xff]
        %v602 = vld [vmem:[#allocation2 + $0x228] sm:$0xff]
        %v603 = vld [vmem:[#allocation2 + $0x230] sm:$0xff]
        %v604 = vld [vmem:[#allocation2 + $0x238] sm:$0xff]
        %v605 = vld [vmem:[#allocation2 + $0x240] sm:$0xff]
        %v606 = vld [vmem:[#allocation2 + $0x248] sm:$0xff]
        %v607 = vld [vmem:[#allocation2 + $0x250] sm:$0xff]
        %v608 = vld [vmem:[#allocation2 + $0x258] sm:$0xff]
        %v609 = vld [vmem:[#allocation2 + $0x260] sm:$0xff]
        %v610 = vld [vmem:[#allocation2 + $0x268] sm:$0xff]
        %v611 = vld [vmem:[#allocation2 + $0x270] sm:$0xff]
        %v612 = vld [vmem:[#allocation2 + $0x278] sm:$0xff]
        %v613 = vld [vmem:[#allocation2 + $0x280] sm:$0xff]
        %v614 = vld [vmem:[#allocation2 + $0x288] sm:$0xff]
        %v615 = vld [vmem:[#allocation2 + $0x290] sm:$0xff]
        %v616 = vld [vmem:[#allocation2 + $0x298] sm:$0xff]
        %v617 = vld [vmem:[#allocation2 + $0x2a0] sm:$0xff]
        %v618 = vld [vmem:[#allocation2 + $0x2a8] sm:$0xff]
        %v619 = vld [vmem:[#allocation2 + $0x2b0] sm:$0xff]
        %v620 = vld [vmem:[#allocation2 + $0x2b8] sm:$0xff]
        %v621 = vld [vmem:[#allocation2 + $0x2c0] sm:$0xff]
        %v622 = vld [vmem:[#allocation2 + $0x2c8] sm:$0xff]
        %v623 = vld [vmem:[#allocation2 + $0x2d0] sm:$0xff]
        %v624 = vld [vmem:[#allocation2 + $0x2d8] sm:$0xff]
        %v625 = vld [vmem:[#allocation2 + $0x2e0] sm:$0xff]
        %v626 = vld [vmem:[#allocation2 + $0x2e8] sm:$0xff]
        %v627 = vld [vmem:[#allocation2 + $0x2f0] sm:$0xff]
        %v628 = vld [vmem:[#allocation2 + $0x2f8] sm:$0xff]
        %v629 = vld [vmem:[#allocation2 + $0x300] sm:$0xff]
        %v630 = vld [vmem:[#allocation2 + $0x308] sm:$0xff]
        %v631 = vld [vmem:[#allocation2 + $0x310] sm:$0xff]
        %v632 = vld [vmem:[#allocation2 + $0x318] sm:$0xff]
        %v633 = vld [vmem:[#allocation2 + $0x320] sm:$0xff]
        %v634 = vld [vmem:[#allocation2 + $0x328] sm:$0xff]
        %v635 = vld [vmem:[#allocation2 + $0x330] sm:$0xff]
        %v636 = vld [vmem:[#allocation2 + $0x338] sm:$0xff]
        %v637 = vld [vmem:[#allocation2 + $0x340] sm:$0xff]
        %v638 = vld [vmem:[#allocation2 + $0x348] sm:$0xff]
        %v639 = vld [vmem:[#allocation2 + $0x350] sm:$0xff]
        %v640 = vld [vmem:[#allocation2 + $0x358] sm:$0xff]
        %v641 = vld [vmem:[#allocation2 + $0x360] sm:$0xff]
        %v642 = vld [vmem:[#allocation2 + $0x368] sm:$0xff]
        %v643 = vld [vmem:[#allocation2 + $0x370] sm:$0xff]
        %v644 = vld [vmem:[#allocation2 + $0x378] sm:$0xff]
        %v645 = vld [vmem:[#allocation2 + $0x380] sm:$0xff]
        %v646 = vld [vmem:[#allocation2 + $0x388] sm:$0xff]
        %v647 = vld [vmem:[#allocation2 + $0x390] sm:$0xff]
        %v648 = vld [vmem:[#allocation2 + $0x398] sm:$0xff]
        %v649 = vld [vmem:[#allocation2 + $0x3a0] sm:$0xff]
        %v650 = vld [vmem:[#allocation2 + $0x3a8] sm:$0xff]
        %v651 = vld [vmem:[#allocation2 + $0x3b0] sm:$0xff]
        %v652 = vld [vmem:[#allocation2 + $0x3b8] sm:$0xff]
        %v653 = vld [vmem:[#allocation2 + $0x3c0] sm:$0xff]
        %v654 = vld [vmem:[#allocation2 + $0x3c8] sm:$0xff]
        %v655 = vld [vmem:[#allocation2 + $0x3d0] sm:$0xff]
        %v656 = vld [vmem:[#allocation2 + $0x3d8] sm:$0xff]
        %v657 = vld [vmem:[#allocation2 + $0x3e0] sm:$0xff]
        %v658 = vld [vmem:[#allocation2 + $0x3e8] sm:$0xff]
        %v659 = vld [vmem:[#allocation2 + $0x3f0] sm:$0xff]
        %v660 = vld [vmem:[#allocation2 + $0x3f8] sm:$0xff]
        %v661 = vld [vmem:[#allocation2 + $0x400] sm:$0xff]
        %v662 = vld [vmem:[#allocation2 + $0x408] sm:$0xff]
        %v663 = vld [vmem:[#allocation2 + $0x410] sm:$0xff]
        %v664 = vld [vmem:[#allocation2 + $0x418] sm:$0xff]
        %v665 = vld [vmem:[#allocation2 + $0x420] sm:$0xff]
        %v666 = vld [vmem:[#allocation2 + $0x428] sm:$0xff]
        %v667 = vld [vmem:[#allocation2 + $0x430] sm:$0xff]
        %v668 = vld [vmem:[#allocation2 + $0x438] sm:$0xff]
        %v669 = vld [vmem:[#allocation2 + $0x440] sm:$0xff]
        %v670 = vld [vmem:[#allocation2 + $0x448] sm:$0xff]
        %v671 = vld [vmem:[#allocation2 + $0x450] sm:$0xff]
        %v672 = vld [vmem:[#allocation2 + $0x458] sm:$0xff]
        %v673 = vld [vmem:[#allocation2 + $0x460] sm:$0xff]
        %v674 = vld [vmem:[#allocation2 + $0x468] sm:$0xff]
        %v675 = vld [vmem:[#allocation2 + $0x470] sm:$0xff]
        %v676 = vld [vmem:[#allocation2 + $0x478] sm:$0xff]
        %v677 = vld [vmem:[#allocation2 + $0x480] sm:$0xff]
        %v678 = vld [vmem:[#allocation2 + $0x488] sm:$0xff]
        %v679 = vld [vmem:[#allocation2 + $0x490] sm:$0xff]
        %v680 = vld [vmem:[#allocation2 + $0x498] sm:$0xff]
        %v681 = vld [vmem:[#allocation2 + $0x4a0] sm:$0xff]
        %v682 = vld [vmem:[#allocation2 + $0x4a8] sm:$0xff]
        %v683 = vld [vmem:[#allocation2 + $0x4b0] sm:$0xff]
        %v684 = vld [vmem:[#allocation2 + $0x4b8] sm:$0xff]
        %v685 = vld [vmem:[#allocation2 + $0x4c0] sm:$0xff]
        %v686 = vld [vmem:[#allocation2 + $0x4c8] sm:$0xff]
        %v687 = vld [vmem:[#allocation2 + $0x4d0] sm:$0xff]
        %v688 = vld [vmem:[#allocation2 + $0x4d8] sm:$0xff]
        %v689 = vld [vmem:[#allocation2 + $0x4e0] sm:$0xff]
        %v690 = vld [vmem:[#allocation2 + $0x4e8] sm:$0xff]
        %v691 = vld [vmem:[#allocation2 + $0x4f0] sm:$0xff]
        %v692 = vld [vmem:[#allocation2 + $0x4f8] sm:$0xff]
        %v693 = vld [vmem:[#allocation2 + $0x500] sm:$0xff]
        %v694 = vld [vmem:[#allocation2 + $0x508] sm:$0xff]
        %v695 = vld [vmem:[#allocation2 + $0x510] sm:$0xff]
        %v696 = vld [vmem:[#allocation2 + $0x518] sm:$0xff]
        %v697 = vld [vmem:[#allocation2 + $0x520] sm:$0xff]
        %v698 = vld [vmem:[#allocation2 + $0x528] sm:$0xff]
        %v699 = vld [vmem:[#allocation2 + $0x530] sm:$0xff]
        %v700 = vld [vmem:[#allocation2 + $0x538] sm:$0xff]
        %v701 = vld [vmem:[#allocation2 + $0x540] sm:$0xff]
        %v702 = vld [vmem:[#allocation2 + $0x548] sm:$0xff]
        %v703 = vld [vmem:[#allocation2 + $0x550] sm:$0xff]
        %v704 = vld [vmem:[#allocation2 + $0x558] sm:$0xff]
        %v705 = vld [vmem:[#allocation2 + $0x560] sm:$0xff]
        %v706 = vld [vmem:[#allocation2 + $0x568] sm:$0xff]
        %v707 = vld [vmem:[#allocation2 + $0x570] sm:$0xff]
        %v708 = vld [vmem:[#allocation2 + $0x578] sm:$0xff]
        %v709 = vld [vmem:[#allocation2 + $0x580] sm:$0xff]
        %v710 = vld [vmem:[#allocation2 + $0x588] sm:$0xff]
        %v711 = vld [vmem:[#allocation2 + $0x590] sm:$0xff]
        %v712 = vld [vmem:[#allocation2 + $0x598] sm:$0xff]
        %v713 = vld [vmem:[#allocation2 + $0x5a0] sm:$0xff]
        %v714 = vld [vmem:[#allocation2 + $0x5a8] sm:$0xff]
        %v715 = vld [vmem:[#allocation2 + $0x5b0] sm:$0xff]
        %v716 = vld [vmem:[#allocation2 + $0x5b8] sm:$0xff]
        %v717 = vld [vmem:[#allocation2 + $0x5c0] sm:$0xff]
        %v718 = vld [vmem:[#allocation2 + $0x5c8] sm:$0xff]
        %v719 = vld [vmem:[#allocation2 + $0x5d0] sm:$0xff]
        %v720 = vld [vmem:[#allocation2 + $0x5d8] sm:$0xff]
        %v721 = vld [vmem:[#allocation2 + $0x5e0] sm:$0xff]
        %v722 = vld [vmem:[#allocation2 + $0x5e8] sm:$0xff]
        %v723 = vld [vmem:[#allocation2 + $0x5f0] sm:$0xff]
        %v724 = vld [vmem:[#allocation2 + $0x5f8] sm:$0xff]
        %v725 = vld [vmem:[#allocation2 + $0x600] sm:$0xff]
        %v726 = vld [vmem:[#allocation2 + $0x608] sm:$0xff]
        %v727 = vld [vmem:[#allocation2 + $0x610] sm:$0xff]
        %v728 = vld [vmem:[#allocation2 + $0x618] sm:$0xff]
        %v729 = vld [vmem:[#allocation2 + $0x620] sm:$0xff]
        %v730 = vld [vmem:[#allocation2 + $0x628] sm:$0xff]
        %v731 = vld [vmem:[#allocation2 + $0x630] sm:$0xff]
        %v732 = vld [vmem:[#allocation2 + $0x638] sm:$0xff]
        %v733 = vld [vmem:[#allocation2 + $0x640] sm:$0xff]
        %v734 = vld [vmem:[#allocation2 + $0x648] sm:$0xff]
        %v735 = vld [vmem:[#allocation2 + $0x650] sm:$0xff]
        %v736 = vld [vmem:[#allocation2 + $0x658] sm:$0xff]
        %v737 = vld [vmem:[#allocation2 + $0x660] sm:$0xff]
        %v738 = vld [vmem:[#allocation2 + $0x668] sm:$0xff]
        %v739 = vld [vmem:[#allocation2 + $0x670] sm:$0xff]
        %v740 = vld [vmem:[#allocation2 + $0x678] sm:$0xff]
        %v741 = vld [vmem:[#allocation2 + $0x680] sm:$0xff]
        %v742 = vld [vmem:[#allocation2 + $0x688] sm:$0xff]
        %v743 = vld [vmem:[#allocation2 + $0x690] sm:$0xff]
        %v744 = vld [vmem:[#allocation2 + $0x698] sm:$0xff]
        %v745 = vld [vmem:[#allocation2 + $0x6a0] sm:$0xff]
        %v746 = vld [vmem:[#allocation2 + $0x6a8] sm:$0xff]
        %v747 = vld [vmem:[#allocation2 + $0x6b0] sm:$0xff]
        %v748 = vld [vmem:[#allocation2 + $0x6b8] sm:$0xff]
        %v749 = vld [vmem:[#allocation2 + $0x6c0] sm:$0xff]
        %v750 = vld [vmem:[#allocation2 + $0x6c8] sm:$0xff]
        %v751 = vld [vmem:[#allocation2 + $0x6d0] sm:$0xff]
        %v752 = vld [vmem:[#allocation2 + $0x6d8] sm:$0xff]
        %v753 = vld [vmem:[#allocation2 + $0x6e0] sm:$0xff]
        %v754 = vld [vmem:[#allocation2 + $0x6e8] sm:$0xff]
        %v755 = vld [vmem:[#allocation2 + $0x6f0] sm:$0xff]
        %v756 = vld [vmem:[#allocation2 + $0x6f8] sm:$0xff]
        %v757 = vld [vmem:[#allocation2 + $0x700] sm:$0xff]
        %v758 = vld [vmem:[#allocation2 + $0x708] sm:$0xff]
        %v759 = vld [vmem:[#allocation2 + $0x710] sm:$0xff]
        %v760 = vld [vmem:[#allocation2 + $0x718] sm:$0xff]
        %v761 = vld [vmem:[#allocation2 + $0x720] sm:$0xff]
        %v762 = vld [vmem:[#allocation2 + $0x728] sm:$0xff]
        %v763 = vld [vmem:[#allocation2 + $0x730] sm:$0xff]
        %v764 = vld [vmem:[#allocation2 + $0x738] sm:$0xff]
        %v765 = vld [vmem:[#allocation2 + $0x740] sm:$0xff]
        %v766 = vld [vmem:[#allocation2 + $0x748] sm:$0xff]
        %v767 = vld [vmem:[#allocation2 + $0x750] sm:$0xff]
        %v768 = vld [vmem:[#allocation2 + $0x758] sm:$0xff]
        %v769 = vld [vmem:[#allocation2 + $0x760] sm:$0xff]
        %v770 = vld [vmem:[#allocation2 + $0x768] sm:$0xff]
        %v771 = vld [vmem:[#allocation2 + $0x770] sm:$0xff]
        %v772 = vld [vmem:[#allocation2 + $0x778] sm:$0xff]
        %v773 = vld [vmem:[#allocation2 + $0x780] sm:$0xff]
        %v774 = vld [vmem:[#allocation2 + $0x788] sm:$0xff]
        %v775 = vld [vmem:[#allocation2 + $0x790] sm:$0xff]
        %v776 = vld [vmem:[#allocation2 + $0x798] sm:$0xff]
        %v777 = vld [vmem:[#allocation2 + $0x7a0] sm:$0xff]
        %v778 = vld [vmem:[#allocation2 + $0x7a8] sm:$0xff]
        %v779 = vld [vmem:[#allocation2 + $0x7b0] sm:$0xff]
        %v780 = vld [vmem:[#allocation2 + $0x7b8] sm:$0xff]
        %v781 = vld [vmem:[#allocation2 + $0x7c0] sm:$0xff]
        %v782 = vld [vmem:[#allocation2 + $0x7c8] sm:$0xff]
        %v783 = vld [vmem:[#allocation2 + $0x7d0] sm:$0xff]
        %v784 = vld [vmem:[#allocation2 + $0x7d8] sm:$0xff]
        %v785 = vld [vmem:[#allocation2 + $0x7e0] sm:$0xff]
        %v786 = vld [vmem:[#allocation2 + $0x7e8] sm:$0xff]
        %v787 = vld [vmem:[#allocation2 + $0x7f0] sm:$0xff]
        %v788 = vld [vmem:[#allocation2 + $0x7f8] sm:$0xff]
        %v789 = vld [vmem:[%s226] sm:$0xff]
        %v790 = vld [vmem:[%s226 + $0x8] sm:$0xff]
        %v791 = vld [vmem:[%s226 + $0x10] sm:$0xff]
        %v792 = vld [vmem:[%s226 + $0x18] sm:$0xff]
        %v793 = vld [vmem:[%s226 + $0x20] sm:$0xff]
        %v794 = vld [vmem:[%s226 + $0x28] sm:$0xff]
        %v795 = vld [vmem:[%s226 + $0x30] sm:$0xff]
        %v796 = vld [vmem:[%s226 + $0x38] sm:$0xff]
        %v797 = vld [vmem:[%s226 + $0x40] sm:$0xff]
        %v798 = vld [vmem:[%s226 + $0x48] sm:$0xff]
        %v799 = vld [vmem:[%s226 + $0x50] sm:$0xff]
        %v800 = vld [vmem:[%s226 + $0x58] sm:$0xff]
        %v801 = vld [vmem:[%s226 + $0x60] sm:$0xff]
        %v802 = vld [vmem:[%s226 + $0x68] sm:$0xff]
        %v803 = vld [vmem:[%s226 + $0x70] sm:$0xff]
        %v804 = vld [vmem:[%s226 + $0x78] sm:$0xff]
        %v805 = vld [vmem:[%s226 + $0x80] sm:$0xff]
        %v806 = vld [vmem:[%s226 + $0x88] sm:$0xff]
        %v807 = vld [vmem:[%s226 + $0x90] sm:$0xff]
        %v808 = vld [vmem:[%s226 + $0x98] sm:$0xff]
        %v809 = vld [vmem:[%s226 + $0xa0] sm:$0xff]
        %v810 = vld [vmem:[%s226 + $0xa8] sm:$0xff]
        %v811 = vld [vmem:[%s226 + $0xb0] sm:$0xff]
        %v812 = vld [vmem:[%s226 + $0xb8] sm:$0xff]
        %v813 = vld [vmem:[%s226 + $0xc0] sm:$0xff]
        %v814 = vld [vmem:[%s226 + $0xc8] sm:$0xff]
        %v815 = vld [vmem:[%s226 + $0xd0] sm:$0xff]
        %v816 = vld [vmem:[%s226 + $0xd8] sm:$0xff]
        %v817 = vld [vmem:[%s226 + $0xe0] sm:$0xff]
        %v818 = vld [vmem:[%s226 + $0xe8] sm:$0xff]
        %v819 = vld [vmem:[%s226 + $0xf0] sm:$0xff]
        %v820 = vld [vmem:[%s226 + $0xf8] sm:$0xff]
        %v821 = vld [vmem:[%s226 + $0x100] sm:$0xff]
        %v822 = vld [vmem:[%s226 + $0x108] sm:$0xff]
        %v823 = vld [vmem:[%s226 + $0x110] sm:$0xff]
        %v824 = vld [vmem:[%s226 + $0x118] sm:$0xff]
        %v825 = vld [vmem:[%s226 + $0x120] sm:$0xff]
        %v826 = vld [vmem:[%s226 + $0x128] sm:$0xff]
        %v827 = vld [vmem:[%s226 + $0x130] sm:$0xff]
        %v828 = vld [vmem:[%s226 + $0x138] sm:$0xff]
        %v829 = vld [vmem:[%s226 + $0x140] sm:$0xff]
        %v830 = vld [vmem:[%s226 + $0x148] sm:$0xff]
        %v831 = vld [vmem:[%s226 + $0x150] sm:$0xff]
        %v832 = vld [vmem:[%s226 + $0x158] sm:$0xff]
        %v833 = vld [vmem:[%s226 + $0x160] sm:$0xff]
        %v834 = vld [vmem:[%s226 + $0x168] sm:$0xff]
        %v835 = vld [vmem:[%s226 + $0x170] sm:$0xff]
        %v836 = vld [vmem:[%s226 + $0x178] sm:$0xff]
        %v837 = vld [vmem:[%s226 + $0x180] sm:$0xff]
        %v838 = vld [vmem:[%s226 + $0x188] sm:$0xff]
        %v839 = vld [vmem:[%s226 + $0x190] sm:$0xff]
        %v840 = vld [vmem:[%s226 + $0x198] sm:$0xff]
        %v841 = vld [vmem:[%s226 + $0x1a0] sm:$0xff]
        %v842 = vld [vmem:[%s226 + $0x1a8] sm:$0xff]
        %v843 = vld [vmem:[%s226 + $0x1b0] sm:$0xff]
        %v844 = vld [vmem:[%s226 + $0x1b8] sm:$0xff]
        %v845 = vld [vmem:[%s226 + $0x1c0] sm:$0xff]
        %v846 = vld [vmem:[%s226 + $0x1c8] sm:$0xff]
        %v847 = vld [vmem:[%s226 + $0x1d0] sm:$0xff]
        %v848 = vld [vmem:[%s226 + $0x1d8] sm:$0xff]
        %v849 = vld [vmem:[%s226 + $0x1e0] sm:$0xff]
        %v850 = vld [vmem:[%s226 + $0x1e8] sm:$0xff]
        %v851 = vld [vmem:[%s226 + $0x1f0] sm:$0xff]
        %v852 = vld [vmem:[%s226 + $0x1f8] sm:$0xff]
        %v853 = vld [vmem:[%s226 + $0x200] sm:$0xff]
        %v854 = vld [vmem:[%s226 + $0x208] sm:$0xff]
        %v855 = vld [vmem:[%s226 + $0x210] sm:$0xff]
        %v856 = vld [vmem:[%s226 + $0x218] sm:$0xff]
        %v857 = vld [vmem:[%s226 + $0x220] sm:$0xff]
        %v858 = vld [vmem:[%s226 + $0x228] sm:$0xff]
        %v859 = vld [vmem:[%s226 + $0x230] sm:$0xff]
        %v860 = vld [vmem:[%s226 + $0x238] sm:$0xff]
        %v861 = vld [vmem:[%s226 + $0x240] sm:$0xff]
        %v862 = vld [vmem:[%s226 + $0x248] sm:$0xff]
        %v863 = vld [vmem:[%s226 + $0x250] sm:$0xff]
        %v864 = vld [vmem:[%s226 + $0x258] sm:$0xff]
        %v865 = vld [vmem:[%s226 + $0x260] sm:$0xff]
        %v866 = vld [vmem:[%s226 + $0x268] sm:$0xff]
        %v867 = vld [vmem:[%s226 + $0x270] sm:$0xff]
        %v868 = vld [vmem:[%s226 + $0x278] sm:$0xff]
        %v869 = vld [vmem:[%s226 + $0x280] sm:$0xff]
        %v870 = vld [vmem:[%s226 + $0x288] sm:$0xff]
        %v871 = vld [vmem:[%s226 + $0x290] sm:$0xff]
        %v872 = vld [vmem:[%s226 + $0x298] sm:$0xff]
        %v873 = vld [vmem:[%s226 + $0x2a0] sm:$0xff]
        %v874 = vld [vmem:[%s226 + $0x2a8] sm:$0xff]
        %v875 = vld [vmem:[%s226 + $0x2b0] sm:$0xff]
        %v876 = vld [vmem:[%s226 + $0x2b8] sm:$0xff]
        %v877 = vld [vmem:[%s226 + $0x2c0] sm:$0xff]
        %v878 = vld [vmem:[%s226 + $0x2c8] sm:$0xff]
        %v879 = vld [vmem:[%s226 + $0x2d0] sm:$0xff]
        %v880 = vld [vmem:[%s226 + $0x2d8] sm:$0xff]
        %v881 = vld [vmem:[%s226 + $0x2e0] sm:$0xff]
        %v882 = vld [vmem:[%s226 + $0x2e8] sm:$0xff]
        %v883 = vld [vmem:[%s226 + $0x2f0] sm:$0xff]
        %v884 = vld [vmem:[%s226 + $0x2f8] sm:$0xff]
        %v885 = vld [vmem:[%s226 + $0x300] sm:$0xff]
        %v886 = vld [vmem:[%s226 + $0x308] sm:$0xff]
        %v887 = vld [vmem:[%s226 + $0x310] sm:$0xff]
        %v888 = vld [vmem:[%s226 + $0x318] sm:$0xff]
        %v889 = vld [vmem:[%s226 + $0x320] sm:$0xff]
        %v890 = vld [vmem:[%s226 + $0x328] sm:$0xff]
        %v891 = vld [vmem:[%s226 + $0x330] sm:$0xff]
        %v892 = vld [vmem:[%s226 + $0x338] sm:$0xff]
        %v893 = vld [vmem:[%s226 + $0x340] sm:$0xff]
        %v894 = vld [vmem:[%s226 + $0x348] sm:$0xff]
        %v895 = vld [vmem:[%s226 + $0x350] sm:$0xff]
        %v896 = vld [vmem:[%s226 + $0x358] sm:$0xff]
        %v897 = vld [vmem:[%s226 + $0x360] sm:$0xff]
        %v898 = vld [vmem:[%s226 + $0x368] sm:$0xff]
        %v899 = vld [vmem:[%s226 + $0x370] sm:$0xff]
        %v900 = vld [vmem:[%s226 + $0x378] sm:$0xff]
        %v901 = vld [vmem:[%s226 + $0x380] sm:$0xff]
        %v902 = vld [vmem:[%s226 + $0x388] sm:$0xff]
        %v903 = vld [vmem:[%s226 + $0x390] sm:$0xff]
        %v904 = vld [vmem:[%s226 + $0x398] sm:$0xff]
        %v905 = vld [vmem:[%s226 + $0x3a0] sm:$0xff]
        %v906 = vld [vmem:[%s226 + $0x3a8] sm:$0xff]
        %v907 = vld [vmem:[%s226 + $0x3b0] sm:$0xff]
        %v908 = vld [vmem:[%s226 + $0x3b8] sm:$0xff]
        %v909 = vld [vmem:[%s226 + $0x3c0] sm:$0xff]
        %v910 = vld [vmem:[%s226 + $0x3c8] sm:$0xff]
        %v911 = vld [vmem:[%s226 + $0x3d0] sm:$0xff]
        %v912 = vld [vmem:[%s226 + $0x3d8] sm:$0xff]
        %v913 = vld [vmem:[%s226 + $0x3e0] sm:$0xff]
        %v914 = vld [vmem:[%s226 + $0x3e8] sm:$0xff]
        %v915 = vld [vmem:[%s226 + $0x3f0] sm:$0xff]
        %v916 = vld [vmem:[%s226 + $0x3f8] sm:$0xff]
        %v917 = vld [vmem:[%s226 + $0x400] sm:$0xff]
        %v918 = vld [vmem:[%s226 + $0x408] sm:$0xff]
        %v919 = vld [vmem:[%s226 + $0x410] sm:$0xff]
        %v920 = vld [vmem:[%s226 + $0x418] sm:$0xff]
        %v921 = vld [vmem:[%s226 + $0x420] sm:$0xff]
        %v922 = vld [vmem:[%s226 + $0x428] sm:$0xff]
        %v923 = vld [vmem:[%s226 + $0x430] sm:$0xff]
        %v924 = vld [vmem:[%s226 + $0x438] sm:$0xff]
        %v925 = vld [vmem:[%s226 + $0x440] sm:$0xff]
        %v926 = vld [vmem:[%s226 + $0x448] sm:$0xff]
        %v927 = vld [vmem:[%s226 + $0x450] sm:$0xff]
        %v928 = vld [vmem:[%s226 + $0x458] sm:$0xff]
        %v929 = vld [vmem:[%s226 + $0x460] sm:$0xff]
        %v930 = vld [vmem:[%s226 + $0x468] sm:$0xff]
        %v931 = vld [vmem:[%s226 + $0x470] sm:$0xff]
        %v932 = vld [vmem:[%s226 + $0x478] sm:$0xff]
        %v933 = vld [vmem:[%s226 + $0x480] sm:$0xff]
        %v934 = vld [vmem:[%s226 + $0x488] sm:$0xff]
        %v935 = vld [vmem:[%s226 + $0x490] sm:$0xff]
        %v936 = vld [vmem:[%s226 + $0x498] sm:$0xff]
        %v937 = vld [vmem:[%s226 + $0x4a0] sm:$0xff]
        %v938 = vld [vmem:[%s226 + $0x4a8] sm:$0xff]
        %v939 = vld [vmem:[%s226 + $0x4b0] sm:$0xff]
        %v940 = vld [vmem:[%s226 + $0x4b8] sm:$0xff]
        %v941 = vld [vmem:[%s226 + $0x4c0] sm:$0xff]
        %v942 = vld [vmem:[%s226 + $0x4c8] sm:$0xff]
        %v943 = vld [vmem:[%s226 + $0x4d0] sm:$0xff]
        %v944 = vld [vmem:[%s226 + $0x4d8] sm:$0xff]
        %v945 = vld [vmem:[%s226 + $0x4e0] sm:$0xff]
        %v946 = vld [vmem:[%s226 + $0x4e8] sm:$0xff]
        %v947 = vld [vmem:[%s226 + $0x4f0] sm:$0xff]
        %v948 = vld [vmem:[%s226 + $0x4f8] sm:$0xff]
        %v949 = vld [vmem:[%s226 + $0x500] sm:$0xff]
        %v950 = vld [vmem:[%s226 + $0x508] sm:$0xff]
        %v951 = vld [vmem:[%s226 + $0x510] sm:$0xff]
        %v952 = vld [vmem:[%s226 + $0x518] sm:$0xff]
        %v953 = vld [vmem:[%s226 + $0x520] sm:$0xff]
        %v954 = vld [vmem:[%s226 + $0x528] sm:$0xff]
        %v955 = vld [vmem:[%s226 + $0x530] sm:$0xff]
        %v956 = vld [vmem:[%s226 + $0x538] sm:$0xff]
        %v957 = vld [vmem:[%s226 + $0x540] sm:$0xff]
        %v958 = vld [vmem:[%s226 + $0x548] sm:$0xff]
        %v959 = vld [vmem:[%s226 + $0x550] sm:$0xff]
        %v960 = vld [vmem:[%s226 + $0x558] sm:$0xff]
        %v961 = vld [vmem:[%s226 + $0x560] sm:$0xff]
        %v962 = vld [vmem:[%s226 + $0x568] sm:$0xff]
        %v963 = vld [vmem:[%s226 + $0x570] sm:$0xff]
        %v964 = vld [vmem:[%s226 + $0x578] sm:$0xff]
        %v965 = vld [vmem:[%s226 + $0x580] sm:$0xff]
        %v966 = vld [vmem:[%s226 + $0x588] sm:$0xff]
        %v967 = vld [vmem:[%s226 + $0x590] sm:$0xff]
        %v968 = vld [vmem:[%s226 + $0x598] sm:$0xff]
        %v969 = vld [vmem:[%s226 + $0x5a0] sm:$0xff]
        %v970 = vld [vmem:[%s226 + $0x5a8] sm:$0xff]
        %v971 = vld [vmem:[%s226 + $0x5b0] sm:$0xff]
        %v972 = vld [vmem:[%s226 + $0x5b8] sm:$0xff]
        %v973 = vld [vmem:[%s226 + $0x5c0] sm:$0xff]
        %v974 = vld [vmem:[%s226 + $0x5c8] sm:$0xff]
        %v975 = vld [vmem:[%s226 + $0x5d0] sm:$0xff]
        %v976 = vld [vmem:[%s226 + $0x5d8] sm:$0xff]
        %v977 = vld [vmem:[%s226 + $0x5e0] sm:$0xff]
        %v978 = vld [vmem:[%s226 + $0x5e8] sm:$0xff]
        %v979 = vld [vmem:[%s226 + $0x5f0] sm:$0xff]
        %v980 = vld [vmem:[%s226 + $0x5f8] sm:$0xff]
        %v981 = vld [vmem:[%s226 + $0x600] sm:$0xff]
        %v982 = vld [vmem:[%s226 + $0x608] sm:$0xff]
        %v983 = vld [vmem:[%s226 + $0x610] sm:$0xff]
        %v984 = vld [vmem:[%s226 + $0x618] sm:$0xff]
        %v985 = vld [vmem:[%s226 + $0x620] sm:$0xff]
        %v986 = vld [vmem:[%s226 + $0x628] sm:$0xff]
        %v987 = vld [vmem:[%s226 + $0x630] sm:$0xff]
        %v988 = vld [vmem:[%s226 + $0x638] sm:$0xff]
        %v989 = vld [vmem:[%s226 + $0x640] sm:$0xff]
        %v990 = vld [vmem:[%s226 + $0x648] sm:$0xff]
        %v991 = vld [vmem:[%s226 + $0x650] sm:$0xff]
        %v992 = vld [vmem:[%s226 + $0x658] sm:$0xff]
        %v993 = vld [vmem:[%s226 + $0x660] sm:$0xff]
        %v994 = vld [vmem:[%s226 + $0x668] sm:$0xff]
        %v995 = vld [vmem:[%s226 + $0x670] sm:$0xff]
        %v996 = vld [vmem:[%s226 + $0x678] sm:$0xff]
        %v997 = vld [vmem:[%s226 + $0x680] sm:$0xff]
        %v998 = vld [vmem:[%s226 + $0x688] sm:$0xff]
        %v999 = vld [vmem:[%s226 + $0x690] sm:$0xff]
        %v1000 = vld [vmem:[%s226 + $0x698] sm:$0xff]
        %v1001 = vld [vmem:[%s226 + $0x6a0] sm:$0xff]
        %v1002 = vld [vmem:[%s226 + $0x6a8] sm:$0xff]
        %v1003 = vld [vmem:[%s226 + $0x6b0] sm:$0xff]
        %v1004 = vld [vmem:[%s226 + $0x6b8] sm:$0xff]
        %v1005 = vld [vmem:[%s226 + $0x6c0] sm:$0xff]
        %v1006 = vld [vmem:[%s226 + $0x6c8] sm:$0xff]
        %v1007 = vld [vmem:[%s226 + $0x6d0] sm:$0xff]
        %v1008 = vld [vmem:[%s226 + $0x6d8] sm:$0xff]
        %v1009 = vld [vmem:[%s226 + $0x6e0] sm:$0xff]
        %v1010 = vld [vmem:[%s226 + $0x6e8] sm:$0xff]
        %v1011 = vld [vmem:[%s226 + $0x6f0] sm:$0xff]
        %v1012 = vld [vmem:[%s226 + $0x6f8] sm:$0xff]
        %v1013 = vld [vmem:[%s226 + $0x700] sm:$0xff]
        %v1014 = vld [vmem:[%s226 + $0x708] sm:$0xff]
        %v1015 = vld [vmem:[%s226 + $0x710] sm:$0xff]
        %v1016 = vld [vmem:[%s226 + $0x718] sm:$0xff]
        %v1017 = vld [vmem:[%s226 + $0x720] sm:$0xff]
        %v1018 = vld [vmem:[%s226 + $0x728] sm:$0xff]
        %v1019 = vld [vmem:[%s226 + $0x730] sm:$0xff]
        %v1020 = vld [vmem:[%s226 + $0x738] sm:$0xff]
        %v1021 = vld [vmem:[%s226 + $0x740] sm:$0xff]
        %v1022 = vld [vmem:[%s226 + $0x748] sm:$0xff]
        %v1023 = vld [vmem:[%s226 + $0x750] sm:$0xff]
        %v1024 = vld [vmem:[%s226 + $0x758] sm:$0xff]
        %v1025 = vld [vmem:[%s226 + $0x760] sm:$0xff]
        %v1026 = vld [vmem:[%s226 + $0x768] sm:$0xff]
        %v1027 = vld [vmem:[%s226 + $0x770] sm:$0xff]
        %v1028 = vld [vmem:[%s226 + $0x778] sm:$0xff]
        %v1029 = vld [vmem:[%s226 + $0x780] sm:$0xff]
        %v1030 = vld [vmem:[%s226 + $0x788] sm:$0xff]
        %v1031 = vld [vmem:[%s226 + $0x790] sm:$0xff]
        %v1032 = vld [vmem:[%s226 + $0x798] sm:$0xff]
        %v1033 = vld [vmem:[%s226 + $0x7a0] sm:$0xff]
        %v1034 = vld [vmem:[%s226 + $0x7a8] sm:$0xff]
        %v1035 = vld [vmem:[%s226 + $0x7b0] sm:$0xff]
        %v1036 = vld [vmem:[%s226 + $0x7b8] sm:$0xff]
        %v1037 = vld [vmem:[%s226 + $0x7c0] sm:$0xff]
        %v1038 = vld [vmem:[%s226 + $0x7c8] sm:$0xff]
        %v1039 = vld [vmem:[%s226 + $0x7d0] sm:$0xff]
        %v1040 = vld [vmem:[%s226 + $0x7d8] sm:$0xff]
        %v1041 = vld [vmem:[%s226 + $0x7e0] sm:$0xff]
        %v1042 = vld [vmem:[%s226 + $0x7e8] sm:$0xff]
        %v1043 = vld [vmem:[%s226 + $0x7f0] sm:$0xff]
        %v1044 = vld [vmem:[%s226 + $0x7f8] sm:$0xff]
        %v1045 = vld [vmem:[#allocation5] sm:$0xf]
        %v1046 = vld [vmem:[#allocation5 + $0x4] sm:$0xf]
        %v1047 = vld [vmem:[#allocation5 + $0x8] sm:$0xf]
        %v1048 = vld [vmem:[#allocation5 + $0xc] sm:$0xf]
        %v1049 = vld [vmem:[#allocation5 + $0x10] sm:$0xf]
        %v1050 = vld [vmem:[#allocation5 + $0x14] sm:$0xf]
        %v1051 = vld [vmem:[#allocation5 + $0x18] sm:$0xf]
        %v1052 = vld [vmem:[#allocation5 + $0x1c] sm:$0xf]
        %v1053 = vld [vmem:[#allocation5 + $0x20] sm:$0xf]
        %v1054 = vld [vmem:[#allocation5 + $0x24] sm:$0xf]
        %v1055 = vld [vmem:[#allocation5 + $0x28] sm:$0xf]
        %v1056 = vld [vmem:[#allocation5 + $0x2c] sm:$0xf]
        %v1057 = vld [vmem:[#allocation5 + $0x30] sm:$0xf]
        %v1058 = vld [vmem:[#allocation5 + $0x34] sm:$0xf]
        %v1059 = vld [vmem:[#allocation5 + $0x38] sm:$0xf]
        %v1060 = vld [vmem:[#allocation5 + $0x3c] sm:$0xf]
        %v1061 = vld [vmem:[#allocation5 + $0x40] sm:$0xf]
        %v1062 = vld [vmem:[#allocation5 + $0x44] sm:$0xf]
        %v1063 = vld [vmem:[#allocation5 + $0x48] sm:$0xf]
        %v1064 = vld [vmem:[#allocation5 + $0x4c] sm:$0xf]
        %v1065 = vld [vmem:[#allocation5 + $0x50] sm:$0xf]
        %v1066 = vld [vmem:[#allocation5 + $0x54] sm:$0xf]
        %v1067 = vld [vmem:[#allocation5 + $0x58] sm:$0xf]
        %v1068 = vld [vmem:[#allocation5 + $0x5c] sm:$0xf]
        %v1069 = vld [vmem:[#allocation5 + $0x60] sm:$0xf]
        %v1070 = vld [vmem:[#allocation5 + $0x64] sm:$0xf]
        %v1071 = vld [vmem:[#allocation5 + $0x68] sm:$0xf]
        %v1072 = vld [vmem:[#allocation5 + $0x6c] sm:$0xf]
        %v1073 = vld [vmem:[#allocation5 + $0x70] sm:$0xf]
        %v1074 = vld [vmem:[#allocation5 + $0x74] sm:$0xf]
        %v1075 = vld [vmem:[#allocation5 + $0x78] sm:$0xf]
        %v1076 = vld [vmem:[#allocation5 + $0x7c] sm:$0xf]
        %v1333 = vunpack.c.l.b16 %v789
        %v1334 = vunpack.c.h.b16 %v789
        %v1335 = vunpack.c.l.b16 %v790
        %v1336 = vunpack.c.h.b16 %v790
        %v1337 = vunpack.c.l.b16 %v791
        %v1338 = vunpack.c.h.b16 %v791
        %v1339 = vunpack.c.l.b16 %v792
        %v1340 = vunpack.c.h.b16 %v792
        %v1341 = vunpack.c.l.b16 %v793
        %v1342 = vunpack.c.h.b16 %v793
        %v1343 = vunpack.c.l.b16 %v794
        %v1344 = vunpack.c.h.b16 %v794
        %v1345 = vunpack.c.l.b16 %v795
        %v1346 = vunpack.c.h.b16 %v795
        %v1347 = vunpack.c.l.b16 %v796
        %v1348 = vunpack.c.h.b16 %v796
        %v1349 = vunpack.c.l.b16 %v797
        %v1350 = vunpack.c.h.b16 %v797
        %v1351 = vunpack.c.l.b16 %v798
        %v1352 = vunpack.c.h.b16 %v798
        %v1353 = vunpack.c.l.b16 %v799
        %v1354 = vunpack.c.h.b16 %v799
        %v1355 = vunpack.c.l.b16 %v800
        %v1356 = vunpack.c.h.b16 %v800
        %v1357 = vunpack.c.l.b16 %v801
        %v1358 = vunpack.c.h.b16 %v801
        %v1359 = vunpack.c.l.b16 %v802
        %v1360 = vunpack.c.h.b16 %v802
        %v1361 = vunpack.c.l.b16 %v803
        %v1362 = vunpack.c.h.b16 %v803
        %v1363 = vunpack.c.l.b16 %v804
        %v1364 = vunpack.c.h.b16 %v804
        %v1365 = vunpack.c.l.b16 %v805
        %v1366 = vunpack.c.h.b16 %v805
        %v1367 = vunpack.c.l.b16 %v806
        %v1368 = vunpack.c.h.b16 %v806
        %v1369 = vunpack.c.l.b16 %v807
        %v1370 = vunpack.c.h.b16 %v807
        %v1371 = vunpack.c.l.b16 %v808
        %v1372 = vunpack.c.h.b16 %v808
        %v1373 = vunpack.c.l.b16 %v809
        %v1374 = vunpack.c.h.b16 %v809
        %v1375 = vunpack.c.l.b16 %v810
        %v1376 = vunpack.c.h.b16 %v810
        %v1377 = vunpack.c.l.b16 %v811
        %v1378 = vunpack.c.h.b16 %v811
        %v1379 = vunpack.c.l.b16 %v812
        %v1380 = vunpack.c.h.b16 %v812
        %v1381 = vunpack.c.l.b16 %v813
        %v1382 = vunpack.c.h.b16 %v813
        %v1383 = vunpack.c.l.b16 %v814
        %v1384 = vunpack.c.h.b16 %v814
        %v1385 = vunpack.c.l.b16 %v815
        %v1386 = vunpack.c.h.b16 %v815
        %v1387 = vunpack.c.l.b16 %v816
        %v1388 = vunpack.c.h.b16 %v816
        %v1389 = vunpack.c.l.b16 %v817
        %v1390 = vunpack.c.h.b16 %v817
        %v1391 = vunpack.c.l.b16 %v818
        %v1392 = vunpack.c.h.b16 %v818
        %v1393 = vunpack.c.l.b16 %v819
        %v1394 = vunpack.c.h.b16 %v819
        %v1395 = vunpack.c.l.b16 %v820
        %v1396 = vunpack.c.h.b16 %v820
        %v1397 = vunpack.c.l.b16 %v821
        %v1398 = vunpack.c.h.b16 %v821
        %v1399 = vunpack.c.l.b16 %v822
        %v1400 = vunpack.c.h.b16 %v822
        %v1401 = vunpack.c.l.b16 %v823
        %v1402 = vunpack.c.h.b16 %v823
        %v1403 = vunpack.c.l.b16 %v824
        %v1404 = vunpack.c.h.b16 %v824
        %v1405 = vunpack.c.l.b16 %v825
        %v1406 = vunpack.c.h.b16 %v825
        %v1407 = vunpack.c.l.b16 %v826
        %v1408 = vunpack.c.h.b16 %v826
        %v1409 = vunpack.c.l.b16 %v827
        %v1410 = vunpack.c.h.b16 %v827
        %v1411 = vunpack.c.l.b16 %v828
        %v1412 = vunpack.c.h.b16 %v828
        %v1413 = vunpack.c.l.b16 %v829
        %v1414 = vunpack.c.h.b16 %v829
        %v1415 = vunpack.c.l.b16 %v830
        %v1416 = vunpack.c.h.b16 %v830
        %v1417 = vunpack.c.l.b16 %v831
        %v1418 = vunpack.c.h.b16 %v831
        %v1419 = vunpack.c.l.b16 %v832
        %v1420 = vunpack.c.h.b16 %v832
        %v1421 = vunpack.c.l.b16 %v833
        %v1422 = vunpack.c.h.b16 %v833
        %v1423 = vunpack.c.l.b16 %v834
        %v1424 = vunpack.c.h.b16 %v834
        %v1425 = vunpack.c.l.b16 %v835
        %v1426 = vunpack.c.h.b16 %v835
        %v1427 = vunpack.c.l.b16 %v836
        %v1428 = vunpack.c.h.b16 %v836
        %v1429 = vunpack.c.l.b16 %v837
        %v1430 = vunpack.c.h.b16 %v837
        %v1431 = vunpack.c.l.b16 %v838
        %v1432 = vunpack.c.h.b16 %v838
        %v1433 = vunpack.c.l.b16 %v839
        %v1434 = vunpack.c.h.b16 %v839
        %v1435 = vunpack.c.l.b16 %v840
        %v1436 = vunpack.c.h.b16 %v840
        %v1437 = vunpack.c.l.b16 %v841
        %v1438 = vunpack.c.h.b16 %v841
        %v1439 = vunpack.c.l.b16 %v842
        %v1440 = vunpack.c.h.b16 %v842
        %v1441 = vunpack.c.l.b16 %v843
        %v1442 = vunpack.c.h.b16 %v843
        %v1443 = vunpack.c.l.b16 %v844
        %v1444 = vunpack.c.h.b16 %v844
        %v1445 = vunpack.c.l.b16 %v845
        %v1446 = vunpack.c.h.b16 %v845
        %v1447 = vunpack.c.l.b16 %v846
        %v1448 = vunpack.c.h.b16 %v846
        %v1449 = vunpack.c.l.b16 %v847
        %v1450 = vunpack.c.h.b16 %v847
        %v1451 = vunpack.c.l.b16 %v848
        %v1452 = vunpack.c.h.b16 %v848
        %v1453 = vunpack.c.l.b16 %v849
        %v1454 = vunpack.c.h.b16 %v849
        %v1455 = vunpack.c.l.b16 %v850
        %v1456 = vunpack.c.h.b16 %v850
        %v1457 = vunpack.c.l.b16 %v851
        %v1458 = vunpack.c.h.b16 %v851
        %v1459 = vunpack.c.l.b16 %v852
        %v1460 = vunpack.c.h.b16 %v852
        %v1461 = vunpack.c.l.b16 %v853
        %v1462 = vunpack.c.h.b16 %v853
        %v1463 = vunpack.c.l.b16 %v854
        %v1464 = vunpack.c.h.b16 %v854
        %v1465 = vunpack.c.l.b16 %v855
        %v1466 = vunpack.c.h.b16 %v855
        %v1467 = vunpack.c.l.b16 %v856
        %v1468 = vunpack.c.h.b16 %v856
        %v1469 = vunpack.c.l.b16 %v857
        %v1470 = vunpack.c.h.b16 %v857
        %v1471 = vunpack.c.l.b16 %v858
        %v1472 = vunpack.c.h.b16 %v858
        %v1473 = vunpack.c.l.b16 %v859
        %v1474 = vunpack.c.h.b16 %v859
        %v1475 = vunpack.c.l.b16 %v860
        %v1476 = vunpack.c.h.b16 %v860
        %v1477 = vunpack.c.l.b16 %v861
        %v1478 = vunpack.c.h.b16 %v861
        %v1479 = vunpack.c.l.b16 %v862
        %v1480 = vunpack.c.h.b16 %v862
        %v1481 = vunpack.c.l.b16 %v863
        %v1482 = vunpack.c.h.b16 %v863
        %v1483 = vunpack.c.l.b16 %v864
        %v1484 = vunpack.c.h.b16 %v864
        %v1485 = vunpack.c.l.b16 %v865
        %v1486 = vunpack.c.h.b16 %v865
        %v1487 = vunpack.c.l.b16 %v866
        %v1488 = vunpack.c.h.b16 %v866
        %v1489 = vunpack.c.l.b16 %v867
        %v1490 = vunpack.c.h.b16 %v867
        %v1491 = vunpack.c.l.b16 %v868
        %v1492 = vunpack.c.h.b16 %v868
        %v1493 = vunpack.c.l.b16 %v869
        %v1494 = vunpack.c.h.b16 %v869
        %v1495 = vunpack.c.l.b16 %v870
        %v1496 = vunpack.c.h.b16 %v870
        %v1497 = vunpack.c.l.b16 %v871
        %v1498 = vunpack.c.h.b16 %v871
        %v1499 = vunpack.c.l.b16 %v872
        %v1500 = vunpack.c.h.b16 %v872
        %v1501 = vunpack.c.l.b16 %v873
        %v1502 = vunpack.c.h.b16 %v873
        %v1503 = vunpack.c.l.b16 %v874
        %v1504 = vunpack.c.h.b16 %v874
        %v1505 = vunpack.c.l.b16 %v875
        %v1506 = vunpack.c.h.b16 %v875
        %v1507 = vunpack.c.l.b16 %v876
        %v1508 = vunpack.c.h.b16 %v876
        %v1509 = vunpack.c.l.b16 %v877
        %v1510 = vunpack.c.h.b16 %v877
        %v1511 = vunpack.c.l.b16 %v878
        %v1512 = vunpack.c.h.b16 %v878
        %v1513 = vunpack.c.l.b16 %v879
        %v1514 = vunpack.c.h.b16 %v879
        %v1515 = vunpack.c.l.b16 %v880
        %v1516 = vunpack.c.h.b16 %v880
        %v1517 = vunpack.c.l.b16 %v881
        %v1518 = vunpack.c.h.b16 %v881
        %v1519 = vunpack.c.l.b16 %v882
        %v1520 = vunpack.c.h.b16 %v882
        %v1521 = vunpack.c.l.b16 %v883
        %v1522 = vunpack.c.h.b16 %v883
        %v1523 = vunpack.c.l.b16 %v884
        %v1524 = vunpack.c.h.b16 %v884
        %v1525 = vunpack.c.l.b16 %v885
        %v1526 = vunpack.c.h.b16 %v885
        %v1527 = vunpack.c.l.b16 %v886
        %v1528 = vunpack.c.h.b16 %v886
        %v1529 = vunpack.c.l.b16 %v887
        %v1530 = vunpack.c.h.b16 %v887
        %v1531 = vunpack.c.l.b16 %v888
        %v1532 = vunpack.c.h.b16 %v888
        %v1533 = vunpack.c.l.b16 %v889
        %v1534 = vunpack.c.h.b16 %v889
        %v1535 = vunpack.c.l.b16 %v890
        %v1536 = vunpack.c.h.b16 %v890
        %v1537 = vunpack.c.l.b16 %v891
        %v1538 = vunpack.c.h.b16 %v891
        %v1539 = vunpack.c.l.b16 %v892
        %v1540 = vunpack.c.h.b16 %v892
        %v1541 = vunpack.c.l.b16 %v893
        %v1542 = vunpack.c.h.b16 %v893
        %v1543 = vunpack.c.l.b16 %v894
        %v1544 = vunpack.c.h.b16 %v894
        %v1545 = vunpack.c.l.b16 %v895
        %v1546 = vunpack.c.h.b16 %v895
        %v1547 = vunpack.c.l.b16 %v896
        %v1548 = vunpack.c.h.b16 %v896
        %v1549 = vunpack.c.l.b16 %v897
        %v1550 = vunpack.c.h.b16 %v897
        %v1551 = vunpack.c.l.b16 %v898
        %v1552 = vunpack.c.h.b16 %v898
        %v1553 = vunpack.c.l.b16 %v899
        %v1554 = vunpack.c.h.b16 %v899
        %v1555 = vunpack.c.l.b16 %v900
        %v1556 = vunpack.c.h.b16 %v900
        %v1557 = vunpack.c.l.b16 %v901
        %v1558 = vunpack.c.h.b16 %v901
        %v1559 = vunpack.c.l.b16 %v902
        %v1560 = vunpack.c.h.b16 %v902
        %v1561 = vunpack.c.l.b16 %v903
        %v1562 = vunpack.c.h.b16 %v903
        %v1563 = vunpack.c.l.b16 %v904
        %v1564 = vunpack.c.h.b16 %v904
        %v1565 = vunpack.c.l.b16 %v905
        %v1566 = vunpack.c.h.b16 %v905
        %v1567 = vunpack.c.l.b16 %v906
        %v1568 = vunpack.c.h.b16 %v906
        %v1569 = vunpack.c.l.b16 %v907
        %v1570 = vunpack.c.h.b16 %v907
        %v1571 = vunpack.c.l.b16 %v908
        %v1572 = vunpack.c.h.b16 %v908
        %v1573 = vunpack.c.l.b16 %v909
        %v1574 = vunpack.c.h.b16 %v909
        %v1575 = vunpack.c.l.b16 %v910
        %v1576 = vunpack.c.h.b16 %v910
        %v1577 = vunpack.c.l.b16 %v911
        %v1578 = vunpack.c.h.b16 %v911
        %v1579 = vunpack.c.l.b16 %v912
        %v1580 = vunpack.c.h.b16 %v912
        %v1581 = vunpack.c.l.b16 %v913
        %v1582 = vunpack.c.h.b16 %v913
        %v1583 = vunpack.c.l.b16 %v914
        %v1584 = vunpack.c.h.b16 %v914
        %v1585 = vunpack.c.l.b16 %v915
        %v1586 = vunpack.c.h.b16 %v915
        %v1587 = vunpack.c.l.b16 %v916
        %v1588 = vunpack.c.h.b16 %v916
        %v1589 = vunpack.c.l.b16 %v917
        %v1590 = vunpack.c.h.b16 %v917
        %v1591 = vunpack.c.l.b16 %v918
        %v1592 = vunpack.c.h.b16 %v918
        %v1593 = vunpack.c.l.b16 %v919
        %v1594 = vunpack.c.h.b16 %v919
        %v1595 = vunpack.c.l.b16 %v920
        %v1596 = vunpack.c.h.b16 %v920
        %v1597 = vunpack.c.l.b16 %v921
        %v1598 = vunpack.c.h.b16 %v921
        %v1599 = vunpack.c.l.b16 %v922
        %v1600 = vunpack.c.h.b16 %v922
        %v1601 = vunpack.c.l.b16 %v923
        %v1602 = vunpack.c.h.b16 %v923
        %v1603 = vunpack.c.l.b16 %v924
        %v1604 = vunpack.c.h.b16 %v924
        %v1605 = vunpack.c.l.b16 %v925
        %v1606 = vunpack.c.h.b16 %v925
        %v1607 = vunpack.c.l.b16 %v926
        %v1608 = vunpack.c.h.b16 %v926
        %v1609 = vunpack.c.l.b16 %v927
        %v1610 = vunpack.c.h.b16 %v927
        %v1611 = vunpack.c.l.b16 %v928
        %v1612 = vunpack.c.h.b16 %v928
        %v1613 = vunpack.c.l.b16 %v929
        %v1614 = vunpack.c.h.b16 %v929
        %v1615 = vunpack.c.l.b16 %v930
        %v1616 = vunpack.c.h.b16 %v930
        %v1617 = vunpack.c.l.b16 %v931
        %v1618 = vunpack.c.h.b16 %v931
        %v1619 = vunpack.c.l.b16 %v932
        %v1620 = vunpack.c.h.b16 %v932
        %v1621 = vunpack.c.l.b16 %v933
        %v1622 = vunpack.c.h.b16 %v933
        %v1623 = vunpack.c.l.b16 %v934
        %v1624 = vunpack.c.h.b16 %v934
        %v1625 = vunpack.c.l.b16 %v935
        %v1626 = vunpack.c.h.b16 %v935
        %v1627 = vunpack.c.l.b16 %v936
        %v1628 = vunpack.c.h.b16 %v936
        %v1629 = vunpack.c.l.b16 %v937
        %v1630 = vunpack.c.h.b16 %v937
        %v1631 = vunpack.c.l.b16 %v938
        %v1632 = vunpack.c.h.b16 %v938
        %v1633 = vunpack.c.l.b16 %v939
        %v1634 = vunpack.c.h.b16 %v939
        %v1635 = vunpack.c.l.b16 %v940
        %v1636 = vunpack.c.h.b16 %v940
        %v1637 = vunpack.c.l.b16 %v941
        %v1638 = vunpack.c.h.b16 %v941
        %v1639 = vunpack.c.l.b16 %v942
        %v1640 = vunpack.c.h.b16 %v942
        %v1641 = vunpack.c.l.b16 %v943
        %v1642 = vunpack.c.h.b16 %v943
        %v1643 = vunpack.c.l.b16 %v944
        %v1644 = vunpack.c.h.b16 %v944
        %v1645 = vunpack.c.l.b16 %v945
        %v1646 = vunpack.c.h.b16 %v945
        %v1647 = vunpack.c.l.b16 %v946
        %v1648 = vunpack.c.h.b16 %v946
        %v1649 = vunpack.c.l.b16 %v947
        %v1650 = vunpack.c.h.b16 %v947
        %v1651 = vunpack.c.l.b16 %v948
        %v1652 = vunpack.c.h.b16 %v948
        %v1653 = vunpack.c.l.b16 %v949
        %v1654 = vunpack.c.h.b16 %v949
        %v1655 = vunpack.c.l.b16 %v950
        %v1656 = vunpack.c.h.b16 %v950
        %v1657 = vunpack.c.l.b16 %v951
        %v1658 = vunpack.c.h.b16 %v951
        %v1659 = vunpack.c.l.b16 %v952
        %v1660 = vunpack.c.h.b16 %v952
        %v1661 = vunpack.c.l.b16 %v953
        %v1662 = vunpack.c.h.b16 %v953
        %v1663 = vunpack.c.l.b16 %v954
        %v1664 = vunpack.c.h.b16 %v954
        %v1665 = vunpack.c.l.b16 %v955
        %v1666 = vunpack.c.h.b16 %v955
        %v1667 = vunpack.c.l.b16 %v956
        %v1668 = vunpack.c.h.b16 %v956
        %v1669 = vunpack.c.l.b16 %v957
        %v1670 = vunpack.c.h.b16 %v957
        %v1671 = vunpack.c.l.b16 %v958
        %v1672 = vunpack.c.h.b16 %v958
        %v1673 = vunpack.c.l.b16 %v959
        %v1674 = vunpack.c.h.b16 %v959
        %v1675 = vunpack.c.l.b16 %v960
        %v1676 = vunpack.c.h.b16 %v960
        %v1677 = vunpack.c.l.b16 %v961
        %v1678 = vunpack.c.h.b16 %v961
        %v1679 = vunpack.c.l.b16 %v962
        %v1680 = vunpack.c.h.b16 %v962
        %v1681 = vunpack.c.l.b16 %v963
        %v1682 = vunpack.c.h.b16 %v963
        %v1683 = vunpack.c.l.b16 %v964
        %v1684 = vunpack.c.h.b16 %v964
        %v1685 = vunpack.c.l.b16 %v965
        %v1686 = vunpack.c.h.b16 %v965
        %v1687 = vunpack.c.l.b16 %v966
        %v1688 = vunpack.c.h.b16 %v966
        %v1689 = vunpack.c.l.b16 %v967
        %v1690 = vunpack.c.h.b16 %v967
        %v1691 = vunpack.c.l.b16 %v968
        %v1692 = vunpack.c.h.b16 %v968
        %v1693 = vunpack.c.l.b16 %v969
        %v1694 = vunpack.c.h.b16 %v969
        %v1695 = vunpack.c.l.b16 %v970
        %v1696 = vunpack.c.h.b16 %v970
        %v1697 = vunpack.c.l.b16 %v971
        %v1698 = vunpack.c.h.b16 %v971
        %v1699 = vunpack.c.l.b16 %v972
        %v1700 = vunpack.c.h.b16 %v972
        %v1701 = vunpack.c.l.b16 %v973
        %v1702 = vunpack.c.h.b16 %v973
        %v1703 = vunpack.c.l.b16 %v974
        %v1704 = vunpack.c.h.b16 %v974
        %v1705 = vunpack.c.l.b16 %v975
        %v1706 = vunpack.c.h.b16 %v975
        %v1707 = vunpack.c.l.b16 %v976
        %v1708 = vunpack.c.h.b16 %v976
        %v1709 = vunpack.c.l.b16 %v977
        %v1710 = vunpack.c.h.b16 %v977
        %v1711 = vunpack.c.l.b16 %v978
        %v1712 = vunpack.c.h.b16 %v978
        %v1713 = vunpack.c.l.b16 %v979
        %v1714 = vunpack.c.h.b16 %v979
        %v1715 = vunpack.c.l.b16 %v980
        %v1716 = vunpack.c.h.b16 %v980
        %v1717 = vunpack.c.l.b16 %v981
        %v1718 = vunpack.c.h.b16 %v981
        %v1719 = vunpack.c.l.b16 %v982
        %v1720 = vunpack.c.h.b16 %v982
        %v1721 = vunpack.c.l.b16 %v983
        %v1722 = vunpack.c.h.b16 %v983
        %v1723 = vunpack.c.l.b16 %v984
        %v1724 = vunpack.c.h.b16 %v984
        %v1725 = vunpack.c.l.b16 %v985
        %v1726 = vunpack.c.h.b16 %v985
        %v1727 = vunpack.c.l.b16 %v986
        %v1728 = vunpack.c.h.b16 %v986
        %v1729 = vunpack.c.l.b16 %v987
        %v1730 = vunpack.c.h.b16 %v987
        %v1731 = vunpack.c.l.b16 %v988
        %v1732 = vunpack.c.h.b16 %v988
        %v1733 = vunpack.c.l.b16 %v989
        %v1734 = vunpack.c.h.b16 %v989
        %v1735 = vunpack.c.l.b16 %v990
        %v1736 = vunpack.c.h.b16 %v990
        %v1737 = vunpack.c.l.b16 %v991
        %v1738 = vunpack.c.h.b16 %v991
        %v1739 = vunpack.c.l.b16 %v992
        %v1740 = vunpack.c.h.b16 %v992
        %v1741 = vunpack.c.l.b16 %v993
        %v1742 = vunpack.c.h.b16 %v993
        %v1743 = vunpack.c.l.b16 %v994
        %v1744 = vunpack.c.h.b16 %v994
        %v1745 = vunpack.c.l.b16 %v995
        %v1746 = vunpack.c.h.b16 %v995
        %v1747 = vunpack.c.l.b16 %v996
        %v1748 = vunpack.c.h.b16 %v996
        %v1749 = vunpack.c.l.b16 %v997
        %v1750 = vunpack.c.h.b16 %v997
        %v1751 = vunpack.c.l.b16 %v998
        %v1752 = vunpack.c.h.b16 %v998
        %v1753 = vunpack.c.l.b16 %v999
        %v1754 = vunpack.c.h.b16 %v999
        %v1755 = vunpack.c.l.b16 %v1000
        %v1756 = vunpack.c.h.b16 %v1000
        %v1757 = vunpack.c.l.b16 %v1001
        %v1758 = vunpack.c.h.b16 %v1001
        %v1759 = vunpack.c.l.b16 %v1002
        %v1760 = vunpack.c.h.b16 %v1002
        %v1761 = vunpack.c.l.b16 %v1003
        %v1762 = vunpack.c.h.b16 %v1003
        %v1763 = vunpack.c.l.b16 %v1004
        %v1764 = vunpack.c.h.b16 %v1004
        %v1765 = vunpack.c.l.b16 %v1005
        %v1766 = vunpack.c.h.b16 %v1005
        %v1767 = vunpack.c.l.b16 %v1006
        %v1768 = vunpack.c.h.b16 %v1006
        %v1769 = vunpack.c.l.b16 %v1007
        %v1770 = vunpack.c.h.b16 %v1007
        %v1771 = vunpack.c.l.b16 %v1008
        %v1772 = vunpack.c.h.b16 %v1008
        %v1773 = vunpack.c.l.b16 %v1009
        %v1774 = vunpack.c.h.b16 %v1009
        %v1775 = vunpack.c.l.b16 %v1010
        %v1776 = vunpack.c.h.b16 %v1010
        %v1777 = vunpack.c.l.b16 %v1011
        %v1778 = vunpack.c.h.b16 %v1011
        %v1779 = vunpack.c.l.b16 %v1012
        %v1780 = vunpack.c.h.b16 %v1012
        %v1781 = vunpack.c.l.b16 %v1013
        %v1782 = vunpack.c.h.b16 %v1013
        %v1783 = vunpack.c.l.b16 %v1014
        %v1784 = vunpack.c.h.b16 %v1014
        %v1785 = vunpack.c.l.b16 %v1015
        %v1786 = vunpack.c.h.b16 %v1015
        %v1787 = vunpack.c.l.b16 %v1016
        %v1788 = vunpack.c.h.b16 %v1016
        %v1789 = vunpack.c.l.b16 %v1017
        %v1790 = vunpack.c.h.b16 %v1017
        %v1791 = vunpack.c.l.b16 %v1018
        %v1792 = vunpack.c.h.b16 %v1018
        %v1793 = vunpack.c.l.b16 %v1019
        %v1794 = vunpack.c.h.b16 %v1019
        %v1795 = vunpack.c.l.b16 %v1020
        %v1796 = vunpack.c.h.b16 %v1020
        %v1797 = vunpack.c.l.b16 %v1021
        %v1798 = vunpack.c.h.b16 %v1021
        %v1799 = vunpack.c.l.b16 %v1022
        %v1800 = vunpack.c.h.b16 %v1022
        %v1801 = vunpack.c.l.b16 %v1023
        %v1802 = vunpack.c.h.b16 %v1023
        %v1803 = vunpack.c.l.b16 %v1024
        %v1804 = vunpack.c.h.b16 %v1024
        %v1805 = vunpack.c.l.b16 %v1025
        %v1806 = vunpack.c.h.b16 %v1025
        %v1807 = vunpack.c.l.b16 %v1026
        %v1808 = vunpack.c.h.b16 %v1026
        %v1809 = vunpack.c.l.b16 %v1027
        %v1810 = vunpack.c.h.b16 %v1027
        %v1811 = vunpack.c.l.b16 %v1028
        %v1812 = vunpack.c.h.b16 %v1028
        %v1813 = vunpack.c.l.b16 %v1029
        %v1814 = vunpack.c.h.b16 %v1029
        %v1815 = vunpack.c.l.b16 %v1030
        %v1816 = vunpack.c.h.b16 %v1030
        %v1817 = vunpack.c.l.b16 %v1031
        %v1818 = vunpack.c.h.b16 %v1031
        %v1819 = vunpack.c.l.b16 %v1032
        %v1820 = vunpack.c.h.b16 %v1032
        %v1821 = vunpack.c.l.b16 %v1033
        %v1822 = vunpack.c.h.b16 %v1033
        %v1823 = vunpack.c.l.b16 %v1034
        %v1824 = vunpack.c.h.b16 %v1034
        %v1825 = vunpack.c.l.b16 %v1035
        %v1826 = vunpack.c.h.b16 %v1035
        %v1827 = vunpack.c.l.b16 %v1036
        %v1828 = vunpack.c.h.b16 %v1036
        %v1829 = vunpack.c.l.b16 %v1037
        %v1830 = vunpack.c.h.b16 %v1037
        %v1831 = vunpack.c.l.b16 %v1038
        %v1832 = vunpack.c.h.b16 %v1038
        %v1833 = vunpack.c.l.b16 %v1039
        %v1834 = vunpack.c.h.b16 %v1039
        %v1835 = vunpack.c.l.b16 %v1040
        %v1836 = vunpack.c.h.b16 %v1040
        %v1837 = vunpack.c.l.b16 %v1041
        %v1838 = vunpack.c.h.b16 %v1041
        %v1839 = vunpack.c.l.b16 %v1042
        %v1840 = vunpack.c.h.b16 %v1042
        %v1841 = vunpack.c.l.b16 %v1043
        %v1842 = vunpack.c.h.b16 %v1043
        %v1843 = vunpack.c.l.b16 %v1044
        %v1844 = vunpack.c.h.b16 %v1044
        %v1845 = vpack.c.b16 %v1335, %v1333
        %v1846 = vpack.c.b16 %v1336, %v1334
        %v1847 = vpack.c.b16 %v1339, %v1337
        %v1848 = vpack.c.b16 %v1340, %v1338
        %v1849 = vpack.c.b16 %v1343, %v1341
        %v1850 = vpack.c.b16 %v1344, %v1342
        %v1851 = vpack.c.b16 %v1347, %v1345
        %v1852 = vpack.c.b16 %v1348, %v1346
        %v1853 = vpack.c.b16 %v1351, %v1349
        %v1854 = vpack.c.b16 %v1352, %v1350
        %v1855 = vpack.c.b16 %v1355, %v1353
        %v1856 = vpack.c.b16 %v1356, %v1354
        %v1857 = vpack.c.b16 %v1359, %v1357
        %v1858 = vpack.c.b16 %v1360, %v1358
        %v1859 = vpack.c.b16 %v1363, %v1361
        %v1860 = vpack.c.b16 %v1364, %v1362
        %v1861 = vpack.c.b16 %v1367, %v1365
        %v1862 = vpack.c.b16 %v1368, %v1366
        %v1863 = vpack.c.b16 %v1371, %v1369
        %v1864 = vpack.c.b16 %v1372, %v1370
        %v1865 = vpack.c.b16 %v1375, %v1373
        %v1866 = vpack.c.b16 %v1376, %v1374
        %v1867 = vpack.c.b16 %v1379, %v1377
        %v1868 = vpack.c.b16 %v1380, %v1378
        %v1869 = vpack.c.b16 %v1383, %v1381
        %v1870 = vpack.c.b16 %v1384, %v1382
        %v1871 = vpack.c.b16 %v1387, %v1385
        %v1872 = vpack.c.b16 %v1388, %v1386
        %v1873 = vpack.c.b16 %v1391, %v1389
        %v1874 = vpack.c.b16 %v1392, %v1390
        %v1875 = vpack.c.b16 %v1395, %v1393
        %v1876 = vpack.c.b16 %v1396, %v1394
        %v1877 = vpack.c.b16 %v1399, %v1397
        %v1878 = vpack.c.b16 %v1400, %v1398
        %v1879 = vpack.c.b16 %v1403, %v1401
        %v1880 = vpack.c.b16 %v1404, %v1402
        %v1881 = vpack.c.b16 %v1407, %v1405
        %v1882 = vpack.c.b16 %v1408, %v1406
        %v1883 = vpack.c.b16 %v1411, %v1409
        %v1884 = vpack.c.b16 %v1412, %v1410
        %v1885 = vpack.c.b16 %v1415, %v1413
        %v1886 = vpack.c.b16 %v1416, %v1414
        %v1887 = vpack.c.b16 %v1419, %v1417
        %v1888 = vpack.c.b16 %v1420, %v1418
        %v1889 = vpack.c.b16 %v1423, %v1421
        %v1890 = vpack.c.b16 %v1424, %v1422
        %v1891 = vpack.c.b16 %v1427, %v1425
        %v1892 = vpack.c.b16 %v1428, %v1426
        %v1893 = vpack.c.b16 %v1431, %v1429
        %v1894 = vpack.c.b16 %v1432, %v1430
        %v1895 = vpack.c.b16 %v1435, %v1433
        %v1896 = vpack.c.b16 %v1436, %v1434
        %v1897 = vpack.c.b16 %v1439, %v1437
        %v1898 = vpack.c.b16 %v1440, %v1438
        %v1899 = vpack.c.b16 %v1443, %v1441
        %v1900 = vpack.c.b16 %v1444, %v1442
        %v1901 = vpack.c.b16 %v1447, %v1445
        %v1902 = vpack.c.b16 %v1448, %v1446
        %v1903 = vpack.c.b16 %v1451, %v1449
        %v1904 = vpack.c.b16 %v1452, %v1450
        %v1905 = vpack.c.b16 %v1455, %v1453
        %v1906 = vpack.c.b16 %v1456, %v1454
        %v1907 = vpack.c.b16 %v1459, %v1457
        %v1908 = vpack.c.b16 %v1460, %v1458
        %v1909 = vpack.c.b16 %v1463, %v1461
        %v1910 = vpack.c.b16 %v1464, %v1462
        %v1911 = vpack.c.b16 %v1467, %v1465
        %v1912 = vpack.c.b16 %v1468, %v1466
        %v1913 = vpack.c.b16 %v1471, %v1469
        %v1914 = vpack.c.b16 %v1472, %v1470
        %v1915 = vpack.c.b16 %v1475, %v1473
        %v1916 = vpack.c.b16 %v1476, %v1474
        %v1917 = vpack.c.b16 %v1479, %v1477
        %v1918 = vpack.c.b16 %v1480, %v1478
        %v1919 = vpack.c.b16 %v1483, %v1481
        %v1920 = vpack.c.b16 %v1484, %v1482
        %v1921 = vpack.c.b16 %v1487, %v1485
        %v1922 = vpack.c.b16 %v1488, %v1486
        %v1923 = vpack.c.b16 %v1491, %v1489
        %v1924 = vpack.c.b16 %v1492, %v1490
        %v1925 = vpack.c.b16 %v1495, %v1493
        %v1926 = vpack.c.b16 %v1496, %v1494
        %v1927 = vpack.c.b16 %v1499, %v1497
        %v1928 = vpack.c.b16 %v1500, %v1498
        %v1929 = vpack.c.b16 %v1503, %v1501
        %v1930 = vpack.c.b16 %v1504, %v1502
        %v1931 = vpack.c.b16 %v1507, %v1505
        %v1932 = vpack.c.b16 %v1508, %v1506
        %v1933 = vpack.c.b16 %v1511, %v1509
        %v1934 = vpack.c.b16 %v1512, %v1510
        %v1935 = vpack.c.b16 %v1515, %v1513
        %v1936 = vpack.c.b16 %v1516, %v1514
        %v1937 = vpack.c.b16 %v1519, %v1517
        %v1938 = vpack.c.b16 %v1520, %v1518
        %v1939 = vpack.c.b16 %v1523, %v1521
        %v1940 = vpack.c.b16 %v1524, %v1522
        %v1941 = vpack.c.b16 %v1527, %v1525
        %v1942 = vpack.c.b16 %v1528, %v1526
        %v1943 = vpack.c.b16 %v1531, %v1529
        %v1944 = vpack.c.b16 %v1532, %v1530
        %v1945 = vpack.c.b16 %v1535, %v1533
        %v1946 = vpack.c.b16 %v1536, %v1534
        %v1947 = vpack.c.b16 %v1539, %v1537
        %v1948 = vpack.c.b16 %v1540, %v1538
        %v1949 = vpack.c.b16 %v1543, %v1541
        %v1950 = vpack.c.b16 %v1544, %v1542
        %v1951 = vpack.c.b16 %v1547, %v1545
        %v1952 = vpack.c.b16 %v1548, %v1546
        %v1953 = vpack.c.b16 %v1551, %v1549
        %v1954 = vpack.c.b16 %v1552, %v1550
        %v1955 = vpack.c.b16 %v1555, %v1553
        %v1956 = vpack.c.b16 %v1556, %v1554
        %v1957 = vpack.c.b16 %v1559, %v1557
        %v1958 = vpack.c.b16 %v1560, %v1558
        %v1959 = vpack.c.b16 %v1563, %v1561
        %v1960 = vpack.c.b16 %v1564, %v1562
        %v1961 = vpack.c.b16 %v1567, %v1565
        %v1962 = vpack.c.b16 %v1568, %v1566
        %v1963 = vpack.c.b16 %v1571, %v1569
        %v1964 = vpack.c.b16 %v1572, %v1570
        %v1965 = vpack.c.b16 %v1575, %v1573
        %v1966 = vpack.c.b16 %v1576, %v1574
        %v1967 = vpack.c.b16 %v1579, %v1577
        %v1968 = vpack.c.b16 %v1580, %v1578
        %v1969 = vpack.c.b16 %v1583, %v1581
        %v1970 = vpack.c.b16 %v1584, %v1582
        %v1971 = vpack.c.b16 %v1587, %v1585
        %v1972 = vpack.c.b16 %v1588, %v1586
        %v1973 = vpack.c.b16 %v1591, %v1589
        %v1974 = vpack.c.b16 %v1592, %v1590
        %v1975 = vpack.c.b16 %v1595, %v1593
        %v1976 = vpack.c.b16 %v1596, %v1594
        %v1977 = vpack.c.b16 %v1599, %v1597
        %v1978 = vpack.c.b16 %v1600, %v1598
        %v1979 = vpack.c.b16 %v1603, %v1601
        %v1980 = vpack.c.b16 %v1604, %v1602
        %v1981 = vpack.c.b16 %v1607, %v1605
        %v1982 = vpack.c.b16 %v1608, %v1606
        %v1983 = vpack.c.b16 %v1611, %v1609
        %v1984 = vpack.c.b16 %v1612, %v1610
        %v1985 = vpack.c.b16 %v1615, %v1613
        %v1986 = vpack.c.b16 %v1616, %v1614
        %v1987 = vpack.c.b16 %v1619, %v1617
        %v1988 = vpack.c.b16 %v1620, %v1618
        %v1989 = vpack.c.b16 %v1623, %v1621
        %v1990 = vpack.c.b16 %v1624, %v1622
        %v1991 = vpack.c.b16 %v1627, %v1625
        %v1992 = vpack.c.b16 %v1628, %v1626
        %v1993 = vpack.c.b16 %v1631, %v1629
        %v1994 = vpack.c.b16 %v1632, %v1630
        %v1995 = vpack.c.b16 %v1635, %v1633
        %v1996 = vpack.c.b16 %v1636, %v1634
        %v1997 = vpack.c.b16 %v1639, %v1637
        %v1998 = vpack.c.b16 %v1640, %v1638
        %v1999 = vpack.c.b16 %v1643, %v1641
        %v2000 = vpack.c.b16 %v1644, %v1642
        %v2001 = vpack.c.b16 %v1647, %v1645
        %v2002 = vpack.c.b16 %v1648, %v1646
        %v2003 = vpack.c.b16 %v1651, %v1649
        %v2004 = vpack.c.b16 %v1652, %v1650
        %v2005 = vpack.c.b16 %v1655, %v1653
        %v2006 = vpack.c.b16 %v1656, %v1654
        %v2007 = vpack.c.b16 %v1659, %v1657
        %v2008 = vpack.c.b16 %v1660, %v1658
        %v2009 = vpack.c.b16 %v1663, %v1661
        %v2010 = vpack.c.b16 %v1664, %v1662
        %v2011 = vpack.c.b16 %v1667, %v1665
        %v2012 = vpack.c.b16 %v1668, %v1666
        %v2013 = vpack.c.b16 %v1671, %v1669
        %v2014 = vpack.c.b16 %v1672, %v1670
        %v2015 = vpack.c.b16 %v1675, %v1673
        %v2016 = vpack.c.b16 %v1676, %v1674
        %v2017 = vpack.c.b16 %v1679, %v1677
        %v2018 = vpack.c.b16 %v1680, %v1678
        %v2019 = vpack.c.b16 %v1683, %v1681
        %v2020 = vpack.c.b16 %v1684, %v1682
        %v2021 = vpack.c.b16 %v1687, %v1685
        %v2022 = vpack.c.b16 %v1688, %v1686
        %v2023 = vpack.c.b16 %v1691, %v1689
        %v2024 = vpack.c.b16 %v1692, %v1690
        %v2025 = vpack.c.b16 %v1695, %v1693
        %v2026 = vpack.c.b16 %v1696, %v1694
        %v2027 = vpack.c.b16 %v1699, %v1697
        %v2028 = vpack.c.b16 %v1700, %v1698
        %v2029 = vpack.c.b16 %v1703, %v1701
        %v2030 = vpack.c.b16 %v1704, %v1702
        %v2031 = vpack.c.b16 %v1707, %v1705
        %v2032 = vpack.c.b16 %v1708, %v1706
        %v2033 = vpack.c.b16 %v1711, %v1709
        %v2034 = vpack.c.b16 %v1712, %v1710
        %v2035 = vpack.c.b16 %v1715, %v1713
        %v2036 = vpack.c.b16 %v1716, %v1714
        %v2037 = vpack.c.b16 %v1719, %v1717
        %v2038 = vpack.c.b16 %v1720, %v1718
        %v2039 = vpack.c.b16 %v1723, %v1721
        %v2040 = vpack.c.b16 %v1724, %v1722
        %v2041 = vpack.c.b16 %v1727, %v1725
        %v2042 = vpack.c.b16 %v1728, %v1726
        %v2043 = vpack.c.b16 %v1731, %v1729
        %v2044 = vpack.c.b16 %v1732, %v1730
        %v2045 = vpack.c.b16 %v1735, %v1733
        %v2046 = vpack.c.b16 %v1736, %v1734
        %v2047 = vpack.c.b16 %v1739, %v1737
        %v2048 = vpack.c.b16 %v1740, %v1738
        %v2049 = vpack.c.b16 %v1743, %v1741
        %v2050 = vpack.c.b16 %v1744, %v1742
        %v2051 = vpack.c.b16 %v1747, %v1745
        %v2052 = vpack.c.b16 %v1748, %v1746
        %v2053 = vpack.c.b16 %v1751, %v1749
        %v2054 = vpack.c.b16 %v1752, %v1750
        %v2055 = vpack.c.b16 %v1755, %v1753
        %v2056 = vpack.c.b16 %v1756, %v1754
        %v2057 = vpack.c.b16 %v1759, %v1757
        %v2058 = vpack.c.b16 %v1760, %v1758
        %v2059 = vpack.c.b16 %v1763, %v1761
        %v2060 = vpack.c.b16 %v1764, %v1762
        %v2061 = vpack.c.b16 %v1767, %v1765
        %v2062 = vpack.c.b16 %v1768, %v1766
        %v2063 = vpack.c.b16 %v1771, %v1769
        %v2064 = vpack.c.b16 %v1772, %v1770
        %v2065 = vpack.c.b16 %v1775, %v1773
        %v2066 = vpack.c.b16 %v1776, %v1774
        %v2067 = vpack.c.b16 %v1779, %v1777
        %v2068 = vpack.c.b16 %v1780, %v1778
        %v2069 = vpack.c.b16 %v1783, %v1781
        %v2070 = vpack.c.b16 %v1784, %v1782
        %v2071 = vpack.c.b16 %v1787, %v1785
        %v2072 = vpack.c.b16 %v1788, %v1786
        %v2073 = vpack.c.b16 %v1791, %v1789
        %v2074 = vpack.c.b16 %v1792, %v1790
        %v2075 = vpack.c.b16 %v1795, %v1793
        %v2076 = vpack.c.b16 %v1796, %v1794
        %v2077 = vpack.c.b16 %v1799, %v1797
        %v2078 = vpack.c.b16 %v1800, %v1798
        %v2079 = vpack.c.b16 %v1803, %v1801
        %v2080 = vpack.c.b16 %v1804, %v1802
        %v2081 = vpack.c.b16 %v1807, %v1805
        %v2082 = vpack.c.b16 %v1808, %v1806
        %v2083 = vpack.c.b16 %v1811, %v1809
        %v2084 = vpack.c.b16 %v1812, %v1810
        %v2085 = vpack.c.b16 %v1815, %v1813
        %v2086 = vpack.c.b16 %v1816, %v1814
        %v2087 = vpack.c.b16 %v1819, %v1817
        %v2088 = vpack.c.b16 %v1820, %v1818
        %v2089 = vpack.c.b16 %v1823, %v1821
        %v2090 = vpack.c.b16 %v1824, %v1822
        %v2091 = vpack.c.b16 %v1827, %v1825
        %v2092 = vpack.c.b16 %v1828, %v1826
        %v2093 = vpack.c.b16 %v1831, %v1829
        %v2094 = vpack.c.b16 %v1832, %v1830
        %v2095 = vpack.c.b16 %v1835, %v1833
        %v2096 = vpack.c.b16 %v1836, %v1834
        %v2097 = vpack.c.b16 %v1839, %v1837
        %v2098 = vpack.c.b16 %v1840, %v1838
        %v2099 = vpack.c.b16 %v1843, %v1841
        %v2100 = vpack.c.b16 %v1844, %v1842
        %v2389 = vunpack.c.l.b16 %v1045
        %v2390 = vunpack.c.l.b16 %v1046
        %v2391 = vunpack.c.l.b16 %v1047
        %v2392 = vunpack.c.l.b16 %v1048
        %v2393 = vunpack.c.l.b16 %v1049
        %v2394 = vunpack.c.l.b16 %v1050
        %v2395 = vunpack.c.l.b16 %v1051
        %v2396 = vunpack.c.l.b16 %v1052
        %v2397 = vunpack.c.l.b16 %v1053
        %v2398 = vunpack.c.l.b16 %v1054
        %v2399 = vunpack.c.l.b16 %v1055
        %v2400 = vunpack.c.l.b16 %v1056
        %v2401 = vunpack.c.l.b16 %v1057
        %v2402 = vunpack.c.l.b16 %v1058
        %v2403 = vunpack.c.l.b16 %v1059
        %v2404 = vunpack.c.l.b16 %v1060
        %v2405 = vunpack.c.l.b16 %v1061
        %v2406 = vunpack.c.l.b16 %v1062
        %v2407 = vunpack.c.l.b16 %v1063
        %v2408 = vunpack.c.l.b16 %v1064
        %v2409 = vunpack.c.l.b16 %v1065
        %v2410 = vunpack.c.l.b16 %v1066
        %v2411 = vunpack.c.l.b16 %v1067
        %v2412 = vunpack.c.l.b16 %v1068
        %v2413 = vunpack.c.l.b16 %v1069
        %v2414 = vunpack.c.l.b16 %v1070
        %v2415 = vunpack.c.l.b16 %v1071
        %v2416 = vunpack.c.l.b16 %v1072
        %v2417 = vunpack.c.l.b16 %v1073
        %v2418 = vunpack.c.l.b16 %v1074
        %v2419 = vunpack.c.l.b16 %v1075
        %v2420 = vunpack.c.l.b16 %v1076
        %v2421 = vpack.c.b16 %v2390, %v2389
        %v2422 = vpack.c.b16 %v2392, %v2391
        %v2423 = vpack.c.b16 %v2394, %v2393
        %v2424 = vpack.c.b16 %v2396, %v2395
        %v2425 = vpack.c.b16 %v2398, %v2397
        %v2426 = vpack.c.b16 %v2400, %v2399
        %v2427 = vpack.c.b16 %v2402, %v2401
        %v2428 = vpack.c.b16 %v2404, %v2403
        %v2429 = vpack.c.b16 %v2406, %v2405
        %v2430 = vpack.c.b16 %v2408, %v2407
        %v2431 = vpack.c.b16 %v2410, %v2409
        %v2432 = vpack.c.b16 %v2412, %v2411
        %v2433 = vpack.c.b16 %v2414, %v2413
        %v2434 = vpack.c.b16 %v2416, %v2415
        %v2435 = vpack.c.b16 %v2418, %v2417
        %v2436 = vpack.c.b16 %v2420, %v2419
        %2453 = vmatprep.subr.bf16.mxu0 0
        %2454 = vmatpush1.bf16.msra.mxu0 %v2421
        %2455 = vmatprep.subr.bf16.mxu0 0
        %2456 = vmatpush1.bf16.msra.mxu0 %v2422
        %2457 = vmatprep.subr.bf16.mxu0 0
        %2458 = vmatpush1.bf16.msra.mxu0 %v2423
        %2459 = vmatprep.subr.bf16.mxu0 0
        %2460 = vmatpush1.bf16.msra.mxu0 %v2424
        %2461 = vmatprep.subr.bf16.mxu0 0
        %2462 = vmatpush1.bf16.msra.mxu0 %v2425
        %2463 = vmatprep.subr.bf16.mxu0 0
        %2464 = vmatpush1.bf16.msra.mxu0 %v2426
        %2465 = vmatprep.subr.bf16.mxu0 0
        %2466 = vmatpush1.bf16.msra.mxu0 %v2427
        %2467 = vmatprep.subr.bf16.mxu0 0
        %2468 = vmatpush1.bf16.msra.mxu0 %v2428
        %2469 = vmatprep.subr.bf16.mxu0 0
        %2470 = vmatpush1.bf16.msra.mxu0 %v2429
        %2471 = vmatprep.subr.bf16.mxu0 0
        %2472 = vmatpush1.bf16.msra.mxu0 %v2430
        %2473 = vmatprep.subr.bf16.mxu0 0
        %2474 = vmatpush1.bf16.msra.mxu0 %v2431
        %2475 = vmatprep.subr.bf16.mxu0 0
        %2476 = vmatpush1.bf16.msra.mxu0 %v2432
        %2477 = vmatprep.subr.bf16.mxu0 0
        %2478 = vmatpush1.bf16.msra.mxu0 %v2433
        %2479 = vmatprep.subr.bf16.mxu0 0
        %2480 = vmatpush1.bf16.msra.mxu0 %v2434
        %2481 = vmatprep.subr.bf16.mxu0 0
        %2482 = vmatpush1.bf16.msra.mxu0 %v2435
        %2483 = vmatprep.subr.bf16.mxu0 0
        %2484 = vmatpush1.bf16.msra.mxu0 %v2436
        %2485 = vmatprep.mubr.bf16.mxu0 %v1846
        %2486 = vmatmul.mubr.bf16.gmra.mrb[0].mxu0 %v1845
        %v2487 = vpop.f32.mrb[0].mxu0
        %v2488 = vadd.f32 0.0, %v2487
        %v2489 = vpop.f32.mrb[0].mxu0
        %v2490 = vpop.f32.mrb[0].mxu0
        %v2491 = vadd.f32 0.0, %v2490
        %v2492 = vpop.f32.mrb[0].mxu0
        %2493 = vmatprep.mubr.bf16.mxu0 %v1848
        %2494 = vmatmul.mubr.bf16.gmra.mrb[0].mxu0 %v1847
        %v2495 = vpop.f32.mrb[0].mxu0
        %v2496 = vadd.f32 0.0, %v2495
        %v2497 = vpop.f32.mrb[0].mxu0
        %v2498 = vpop.f32.mrb[0].mxu0
        %v2499 = vadd.f32 0.0, %v2498
        %v2500 = vpop.f32.mrb[0].mxu0
        %2501 = vmatprep.mubr.bf16.mxu0 %v1850
        %2502 = vmatmul.mubr.bf16.gmra.mrb[0].mxu0 %v1849
        %v2503 = vpop.f32.mrb[0].mxu0
        %v2504 = vadd.f32 0.0, %v2503
        %v2505 = vpop.f32.mrb[0].mxu0
        %v2506 = vpop.f32.mrb[0].mxu0
        %v2507 = vadd.f32 0.0, %v2506
        %v2508 = vpop.f32.mrb[0].mxu0
        %2509 = vmatprep.mubr.bf16.mxu0 %v1852
        %2510 = vmatmul.mubr.bf16.gmra.mrb[0].mxu0 %v1851
        %v2511 = vpop.f32.mrb[0].mxu0
        %v2512 = vadd.f32 0.0, %v2511
        %v2513 = vpop.f32.mrb[0].mxu0
        %v2514 = vpop.f32.mrb[0].mxu0
        %v2515 = vadd.f32 0.0, %v2514
        %v2516 = vpop.f32.mrb[0].mxu0
        %2517 = vmatprep.mubr.bf16.mxu0 %v1854
        %2518 = vmatmul.mubr.bf16.gmra.mrb[0].mxu0 %v1853
        %v2519 = vpop.f32.mrb[0].mxu0
        %v2520 = vadd.f32 0.0, %v2519
        %v2521 = vpop.f32.mrb[0].mxu0
        %v2522 = vpop.f32.mrb[0].mxu0
        %v2523 = vadd.f32 0.0, %v2522
        %v2524 = vpop.f32.mrb[0].mxu0
        %2525 = vmatprep.mubr.bf16.mxu0 %v1856
        %2526 = vmatmul.mubr.bf16.gmra.mrb[0].mxu0 %v1855
        %v2527 = vpop.f32.mrb[0].mxu0
        %v2528 = vadd.f32 0.0, %v2527
        %v2529 = vpop.f32.mrb[0].mxu0
        %v2530 = vpop.f32.mrb[0].mxu0
        %v2531 = vadd.f32 0.0, %v2530
        %v2532 = vpop.f32.mrb[0].mxu0
        %2533 = vmatprep.mubr.bf16.mxu0 %v1858
        %2534 = vmatmul.mubr.bf16.gmra.mrb[0].mxu0 %v1857
        %v2535 = vpop.f32.mrb[0].mxu0
        %v2536 = vadd.f32 0.0, %v2535
        %v2537 = vpop.f32.mrb[0].mxu0
        %v2538 = vpop.f32.mrb[0].mxu0
        %v2539 = vadd.f32 0.0, %v2538
        %v2540 = vpop.f32.mrb[0].mxu0
        %2541 = vmatprep.mubr.bf16.mxu0 %v1860
        %2542 = vmatmul.mubr.bf16.gmra.mrb[0].mxu0 %v1859
        %v2543 = vpop.f32.mrb[0].mxu0
        %v2544 = vadd.f32 0.0, %v2543
        %v2545 = vpop.f32.mrb[0].mxu0
        %v2546 = vpop.f32.mrb[0].mxu0
        %v2547 = vadd.f32 0.0, %v2546
        %v2548 = vpop.f32.mrb[0].mxu0
        %2549 = vmatprep.mubr.bf16.mxu0 %v1862
        %2550 = vmatmul.mubr.bf16.gmra.mrb[0].mxu0 %v1861
        %v2551 = vpop.f32.mrb[0].mxu0
        %v2552 = vadd.f32 0.0, %v2551
        %v2553 = vpop.f32.mrb[0].mxu0
        %v2554 = vpop.f32.mrb[0].mxu0
        %v2555 = vadd.f32 0.0, %v2554
        %v2556 = vpop.f32.mrb[0].mxu0
        %2557 = vmatprep.mubr.bf16.mxu0 %v1864
        %2558 = vmatmul.mubr.bf16.gmra.mrb[0].mxu0 %v1863
        %v2559 = vpop.f32.mrb[0].mxu0
        %v2560 = vadd.f32 0.0, %v2559
        %v2561 = vpop.f32.mrb[0].mxu0
        %v2562 = vpop.f32.mrb[0].mxu0
        %v2563 = vadd.f32 0.0, %v2562
        %v2564 = vpop.f32.mrb[0].mxu0
        %2565 = vmatprep.mubr.bf16.mxu0 %v1866
        %2566 = vmatmul.mubr.bf16.gmra.mrb[0].mxu0 %v1865
        %v2567 = vpop.f32.mrb[0].mxu0
        %v2568 = vadd.f32 0.0, %v2567
        %v2569 = vpop.f32.mrb[0].mxu0
        %v2570 = vpop.f32.mrb[0].mxu0
        %v2571 = vadd.f32 0.0, %v2570
        %v2572 = vpop.f32.mrb[0].mxu0
        %2573 = vmatprep.mubr.bf16.mxu0 %v1868
        %2574 = vmatmul.mubr.bf16.gmra.mrb[0].mxu0 %v1867
        %v2575 = vpop.f32.mrb[0].mxu0
        %v2576 = vadd.f32 0.0, %v2575
        %v2577 = vpop.f32.mrb[0].mxu0
        %v2578 = vpop.f32.mrb[0].mxu0
        %v2579 = vadd.f32 0.0, %v2578
        %v2580 = vpop.f32.mrb[0].mxu0
        %2581 = vmatprep.mubr.bf16.mxu0 %v1870
        %2582 = vmatmul.mubr.bf16.gmra.mrb[0].mxu0 %v1869
        %v2583 = vpop.f32.mrb[0].mxu0
        %v2584 = vadd.f32 0.0, %v2583
        %v2585 = vpop.f32.mrb[0].mxu0
        %v2586 = vpop.f32.mrb[0].mxu0
        %v2587 = vadd.f32 0.0, %v2586
        %v2588 = vpop.f32.mrb[0].mxu0
        %2589 = vmatprep.mubr.bf16.mxu0 %v1872
        %2590 = vmatmul.mubr.bf16.gmra.mrb[0].mxu0 %v1871
        %v2591 = vpop.f32.mrb[0].mxu0
        %v2592 = vadd.f32 0.0, %v2591
        %v2593 = vpop.f32.mrb[0].mxu0
        %v2594 = vpop.f32.mrb[0].mxu0
        %v2595 = vadd.f32 0.0, %v2594
        %v2596 = vpop.f32.mrb[0].mxu0
        %2597 = vmatprep.mubr.bf16.mxu0 %v1874
        %2598 = vmatmul.mubr.bf16.gmra.mrb[0].mxu0 %v1873
        %v2599 = vpop.f32.mrb[0].mxu0
        %v2600 = vadd.f32 0.0, %v2599
        %v2601 = vpop.f32.mrb[0].mxu0
        %v2602 = vpop.f32.mrb[0].mxu0
        %v2603 = vadd.f32 0.0, %v2602
        %v2604 = vpop.f32.mrb[0].mxu0
        %2605 = vmatprep.mubr.bf16.mxu0 %v1876
        %2606 = vmatmul.mubr.bf16.gmra.mrb[0].mxu0 %v1875
        %v2607 = vpop.f32.mrb[0].mxu0
        %v2608 = vadd.f32 0.0, %v2607
        %v2609 = vpop.f32.mrb[0].mxu0
        %v2610 = vpop.f32.mrb[0].mxu0
        %v2611 = vadd.f32 0.0, %v2610
        %v2612 = vpop.f32.mrb[0].mxu0
        %2613 = vmatprep.mubr.bf16.mxu0 %v1878
        %2614 = vmatmul.mubr.bf16.gmra.mrb[0].mxu0 %v1877
        %v2615 = vpop.f32.mrb[0].mxu0
        %v2616 = vadd.f32 0.0, %v2615
        %v2617 = vpop.f32.mrb[0].mxu0
        %v2618 = vpop.f32.mrb[0].mxu0
        %v2619 = vadd.f32 0.0, %v2618
        %v2620 = vpop.f32.mrb[0].mxu0
        %2621 = vmatprep.mubr.bf16.mxu0 %v1880
        %2622 = vmatmul.mubr.bf16.gmra.mrb[0].mxu0 %v1879
        %v2623 = vpop.f32.mrb[0].mxu0
        %v2624 = vadd.f32 0.0, %v2623
        %v2625 = vpop.f32.mrb[0].mxu0
        %v2626 = vpop.f32.mrb[0].mxu0
        %v2627 = vadd.f32 0.0, %v2626
        %v2628 = vpop.f32.mrb[0].mxu0
        %2629 = vmatprep.mubr.bf16.mxu0 %v1882
        %2630 = vmatmul.mubr.bf16.gmra.mrb[0].mxu0 %v1881
        %v2631 = vpop.f32.mrb[0].mxu0
        %v2632 = vadd.f32 0.0, %v2631
        %v2633 = vpop.f32.mrb[0].mxu0
        %v2634 = vpop.f32.mrb[0].mxu0
        %v2635 = vadd.f32 0.0, %v2634
        %v2636 = vpop.f32.mrb[0].mxu0
        %2637 = vmatprep.mubr.bf16.mxu0 %v1884
        %2638 = vmatmul.mubr.bf16.gmra.mrb[0].mxu0 %v1883
        %v2639 = vpop.f32.mrb[0].mxu0
        %v2640 = vadd.f32 0.0, %v2639
        %v2641 = vpop.f32.mrb[0].mxu0
        %v2642 = vpop.f32.mrb[0].mxu0
        %v2643 = vadd.f32 0.0, %v2642
        %v2644 = vpop.f32.mrb[0].mxu0
        %2645 = vmatprep.mubr.bf16.mxu0 %v1886
        %2646 = vmatmul.mubr.bf16.gmra.mrb[0].mxu0 %v1885
        %v2647 = vpop.f32.mrb[0].mxu0
        %v2648 = vadd.f32 0.0, %v2647
        %v2649 = vpop.f32.mrb[0].mxu0
        %v2650 = vpop.f32.mrb[0].mxu0
        %v2651 = vadd.f32 0.0, %v2650
        %v2652 = vpop.f32.mrb[0].mxu0
        %2653 = vmatprep.mubr.bf16.mxu0 %v1888
        %2654 = vmatmul.mubr.bf16.gmra.mrb[0].mxu0 %v1887
        %v2655 = vpop.f32.mrb[0].mxu0
        %v2656 = vadd.f32 0.0, %v2655
        %v2657 = vpop.f32.mrb[0].mxu0
        %v2658 = vpop.f32.mrb[0].mxu0
        %v2659 = vadd.f32 0.0, %v2658
        %v2660 = vpop.f32.mrb[0].mxu0
        %2661 = vmatprep.mubr.bf16.mxu0 %v1890
        %2662 = vmatmul.mubr.bf16.gmra.mrb[0].mxu0 %v1889
        %v2663 = vpop.f32.mrb[0].mxu0
        %v2664 = vadd.f32 0.0, %v2663
        %v2665 = vpop.f32.mrb[0].mxu0
        %v2666 = vpop.f32.mrb[0].mxu0
        %v2667 = vadd.f32 0.0, %v2666
        %v2668 = vpop.f32.mrb[0].mxu0
        %2669 = vmatprep.mubr.bf16.mxu0 %v1892
        %2670 = vmatmul.mubr.bf16.gmra.mrb[0].mxu0 %v1891
        %v2671 = vpop.f32.mrb[0].mxu0
        %v2672 = vadd.f32 0.0, %v2671
        %v2673 = vpop.f32.mrb[0].mxu0
        %v2674 = vpop.f32.mrb[0].mxu0
        %v2675 = vadd.f32 0.0, %v2674
        %v2676 = vpop.f32.mrb[0].mxu0
        %2677 = vmatprep.mubr.bf16.mxu0 %v1894
        %2678 = vmatmul.mubr.bf16.gmra.mrb[0].mxu0 %v1893
        %v2679 = vpop.f32.mrb[0].mxu0
        %v2680 = vadd.f32 0.0, %v2679
        %v2681 = vpop.f32.mrb[0].mxu0
        %v2682 = vpop.f32.mrb[0].mxu0
        %v2683 = vadd.f32 0.0, %v2682
        %v2684 = vpop.f32.mrb[0].mxu0
        %2685 = vmatprep.mubr.bf16.mxu0 %v1896
        %2686 = vmatmul.mubr.bf16.gmra.mrb[0].mxu0 %v1895
        %v2687 = vpop.f32.mrb[0].mxu0
        %v2688 = vadd.f32 0.0, %v2687
        %v2689 = vpop.f32.mrb[0].mxu0
        %v2690 = vpop.f32.mrb[0].mxu0
        %v2691 = vadd.f32 0.0, %v2690
        %v2692 = vpop.f32.mrb[0].mxu0
        %2693 = vmatprep.mubr.bf16.mxu0 %v1898
        %2694 = vmatmul.mubr.bf16.gmra.mrb[0].mxu0 %v1897
        %v2695 = vpop.f32.mrb[0].mxu0
        %v2696 = vadd.f32 0.0, %v2695
        %v2697 = vpop.f32.mrb[0].mxu0
        %v2698 = vpop.f32.mrb[0].mxu0
        %v2699 = vadd.f32 0.0, %v2698
        %v2700 = vpop.f32.mrb[0].mxu0
        %2701 = vmatprep.mubr.bf16.mxu0 %v1900
        %2702 = vmatmul.mubr.bf16.gmra.mrb[0].mxu0 %v1899
        %v2703 = vpop.f32.mrb[0].mxu0
        %v2704 = vadd.f32 0.0, %v2703
        %v2705 = vpop.f32.mrb[0].mxu0
        %v2706 = vpop.f32.mrb[0].mxu0
        %v2707 = vadd.f32 0.0, %v2706
        %v2708 = vpop.f32.mrb[0].mxu0
        %2709 = vmatprep.mubr.bf16.mxu0 %v1902
        %2710 = vmatmul.mubr.bf16.gmra.mrb[0].mxu0 %v1901
        %v2711 = vpop.f32.mrb[0].mxu0
        %v2712 = vadd.f32 0.0, %v2711
        %v2713 = vpop.f32.mrb[0].mxu0
        %v2714 = vpop.f32.mrb[0].mxu0
        %v2715 = vadd.f32 0.0, %v2714
        %v2716 = vpop.f32.mrb[0].mxu0
        %2717 = vmatprep.mubr.bf16.mxu0 %v1904
        %2718 = vmatmul.mubr.bf16.gmra.mrb[0].mxu0 %v1903
        %v2719 = vpop.f32.mrb[0].mxu0
        %v2720 = vadd.f32 0.0, %v2719
        %v2721 = vpop.f32.mrb[0].mxu0
        %v2722 = vpop.f32.mrb[0].mxu0
        %v2723 = vadd.f32 0.0, %v2722
        %v2724 = vpop.f32.mrb[0].mxu0
        %2725 = vmatprep.mubr.bf16.mxu0 %v1906
        %2726 = vmatmul.mubr.bf16.gmra.mrb[0].mxu0 %v1905
        %v2727 = vpop.f32.mrb[0].mxu0
        %v2728 = vadd.f32 0.0, %v2727
        %v2729 = vpop.f32.mrb[0].mxu0
        %v2730 = vpop.f32.mrb[0].mxu0
        %v2731 = vadd.f32 0.0, %v2730
        %v2732 = vpop.f32.mrb[0].mxu0
        %2733 = vmatprep.mubr.bf16.mxu0 %v1908
        %2734 = vmatmul.mubr.bf16.gmra.mrb[0].mxu0 %v1907
        %v2735 = vpop.f32.mrb[0].mxu0
        %v2736 = vadd.f32 0.0, %v2735
        %v2737 = vpop.f32.mrb[0].mxu0
        %v2738 = vpop.f32.mrb[0].mxu0
        %v2739 = vadd.f32 0.0, %v2738
        %v2740 = vpop.f32.mrb[0].mxu0
        %2741 = vmatprep.mubr.bf16.mxu0 %v1910
        %2742 = vmatmul.mubr.bf16.gmra.mrb[0].mxu0 %v1909
        %v2743 = vpop.f32.mrb[0].mxu0
        %v2744 = vadd.f32 0.0, %v2743
        %v2745 = vpop.f32.mrb[0].mxu0
        %v2746 = vpop.f32.mrb[0].mxu0
        %v2747 = vadd.f32 0.0, %v2746
        %v2748 = vpop.f32.mrb[0].mxu0
        %2749 = vmatprep.mubr.bf16.mxu0 %v1912
        %2750 = vmatmul.mubr.bf16.gmra.mrb[0].mxu0 %v1911
        %v2751 = vpop.f32.mrb[0].mxu0
        %v2752 = vadd.f32 0.0, %v2751
        %v2753 = vpop.f32.mrb[0].mxu0
        %v2754 = vpop.f32.mrb[0].mxu0
        %v2755 = vadd.f32 0.0, %v2754
        %v2756 = vpop.f32.mrb[0].mxu0
        %2757 = vmatprep.mubr.bf16.mxu0 %v1914
        %2758 = vmatmul.mubr.bf16.gmra.mrb[0].mxu0 %v1913
        %v2759 = vpop.f32.mrb[0].mxu0
        %v2760 = vadd.f32 0.0, %v2759
        %v2761 = vpop.f32.mrb[0].mxu0
        %v2762 = vpop.f32.mrb[0].mxu0
        %v2763 = vadd.f32 0.0, %v2762
        %v2764 = vpop.f32.mrb[0].mxu0
        %2765 = vmatprep.mubr.bf16.mxu0 %v1916
        %2766 = vmatmul.mubr.bf16.gmra.mrb[0].mxu0 %v1915
        %v2767 = vpop.f32.mrb[0].mxu0
        %v2768 = vadd.f32 0.0, %v2767
        %v2769 = vpop.f32.mrb[0].mxu0
        %v2770 = vpop.f32.mrb[0].mxu0
        %v2771 = vadd.f32 0.0, %v2770
        %v2772 = vpop.f32.mrb[0].mxu0
        %2773 = vmatprep.mubr.bf16.mxu0 %v1918
        %2774 = vmatmul.mubr.bf16.gmra.mrb[0].mxu0 %v1917
        %v2775 = vpop.f32.mrb[0].mxu0
        %v2776 = vadd.f32 0.0, %v2775
        %v2777 = vpop.f32.mrb[0].mxu0
        %v2778 = vpop.f32.mrb[0].mxu0
        %v2779 = vadd.f32 0.0, %v2778
        %v2780 = vpop.f32.mrb[0].mxu0
        %2781 = vmatprep.mubr.bf16.mxu0 %v1920
        %2782 = vmatmul.mubr.bf16.gmra.mrb[0].mxu0 %v1919
        %v2783 = vpop.f32.mrb[0].mxu0
        %v2784 = vadd.f32 0.0, %v2783
        %v2785 = vpop.f32.mrb[0].mxu0
        %v2786 = vpop.f32.mrb[0].mxu0
        %v2787 = vadd.f32 0.0, %v2786
        %v2788 = vpop.f32.mrb[0].mxu0
        %2789 = vmatprep.mubr.bf16.mxu0 %v1922
        %2790 = vmatmul.mubr.bf16.gmra.mrb[0].mxu0 %v1921
        %v2791 = vpop.f32.mrb[0].mxu0
        %v2792 = vadd.f32 0.0, %v2791
        %v2793 = vpop.f32.mrb[0].mxu0
        %v2794 = vpop.f32.mrb[0].mxu0
        %v2795 = vadd.f32 0.0, %v2794
        %v2796 = vpop.f32.mrb[0].mxu0
        %2797 = vmatprep.mubr.bf16.mxu0 %v1924
        %2798 = vmatmul.mubr.bf16.gmra.mrb[0].mxu0 %v1923
        %v2799 = vpop.f32.mrb[0].mxu0
        %v2800 = vadd.f32 0.0, %v2799
        %v2801 = vpop.f32.mrb[0].mxu0
        %v2802 = vpop.f32.mrb[0].mxu0
        %v2803 = vadd.f32 0.0, %v2802
        %v2804 = vpop.f32.mrb[0].mxu0
        %2805 = vmatprep.mubr.bf16.mxu0 %v1926
        %2806 = vmatmul.mubr.bf16.gmra.mrb[0].mxu0 %v1925
        %v2807 = vpop.f32.mrb[0].mxu0
        %v2808 = vadd.f32 0.0, %v2807
        %v2809 = vpop.f32.mrb[0].mxu0
        %v2810 = vpop.f32.mrb[0].mxu0
        %v2811 = vadd.f32 0.0, %v2810
        %v2812 = vpop.f32.mrb[0].mxu0
        %2813 = vmatprep.mubr.bf16.mxu0 %v1928
        %2814 = vmatmul.mubr.bf16.gmra.mrb[0].mxu0 %v1927
        %v2815 = vpop.f32.mrb[0].mxu0
        %v2816 = vadd.f32 0.0, %v2815
        %v2817 = vpop.f32.mrb[0].mxu0
        %v2818 = vpop.f32.mrb[0].mxu0
        %v2819 = vadd.f32 0.0, %v2818
        %v2820 = vpop.f32.mrb[0].mxu0
        %2821 = vmatprep.mubr.bf16.mxu0 %v1930
        %2822 = vmatmul.mubr.bf16.gmra.mrb[0].mxu0 %v1929
        %v2823 = vpop.f32.mrb[0].mxu0
        %v2824 = vadd.f32 0.0, %v2823
        %v2825 = vpop.f32.mrb[0].mxu0
        %v2826 = vpop.f32.mrb[0].mxu0
        %v2827 = vadd.f32 0.0, %v2826
        %v2828 = vpop.f32.mrb[0].mxu0
        %2829 = vmatprep.mubr.bf16.mxu0 %v1932
        %2830 = vmatmul.mubr.bf16.gmra.mrb[0].mxu0 %v1931
        %v2831 = vpop.f32.mrb[0].mxu0
        %v2832 = vadd.f32 0.0, %v2831
        %v2833 = vpop.f32.mrb[0].mxu0
        %v2834 = vpop.f32.mrb[0].mxu0
        %v2835 = vadd.f32 0.0, %v2834
        %v2836 = vpop.f32.mrb[0].mxu0
        %2837 = vmatprep.mubr.bf16.mxu0 %v1934
        %2838 = vmatmul.mubr.bf16.gmra.mrb[0].mxu0 %v1933
        %v2839 = vpop.f32.mrb[0].mxu0
        %v2840 = vadd.f32 0.0, %v2839
        %v2841 = vpop.f32.mrb[0].mxu0
        %v2842 = vpop.f32.mrb[0].mxu0
        %v2843 = vadd.f32 0.0, %v2842
        %v2844 = vpop.f32.mrb[0].mxu0
        %2845 = vmatprep.mubr.bf16.mxu0 %v1936
        %2846 = vmatmul.mubr.bf16.gmra.mrb[0].mxu0 %v1935
        %v2847 = vpop.f32.mrb[0].mxu0
        %v2848 = vadd.f32 0.0, %v2847
        %v2849 = vpop.f32.mrb[0].mxu0
        %v2850 = vpop.f32.mrb[0].mxu0
        %v2851 = vadd.f32 0.0, %v2850
        %v2852 = vpop.f32.mrb[0].mxu0
        %2853 = vmatprep.mubr.bf16.mxu0 %v1938
        %2854 = vmatmul.mubr.bf16.gmra.mrb[0].mxu0 %v1937
        %v2855 = vpop.f32.mrb[0].mxu0
        %v2856 = vadd.f32 0.0, %v2855
        %v2857 = vpop.f32.mrb[0].mxu0
        %v2858 = vpop.f32.mrb[0].mxu0
        %v2859 = vadd.f32 0.0, %v2858
        %v2860 = vpop.f32.mrb[0].mxu0
        %2861 = vmatprep.mubr.bf16.mxu0 %v1940
        %2862 = vmatmul.mubr.bf16.gmra.mrb[0].mxu0 %v1939
        %v2863 = vpop.f32.mrb[0].mxu0
        %v2864 = vadd.f32 0.0, %v2863
        %v2865 = vpop.f32.mrb[0].mxu0
        %v2866 = vpop.f32.mrb[0].mxu0
        %v2867 = vadd.f32 0.0, %v2866
        %v2868 = vpop.f32.mrb[0].mxu0
        %2869 = vmatprep.mubr.bf16.mxu0 %v1942
        %2870 = vmatmul.mubr.bf16.gmra.mrb[0].mxu0 %v1941
        %v2871 = vpop.f32.mrb[0].mxu0
        %v2872 = vadd.f32 0.0, %v2871
        %v2873 = vpop.f32.mrb[0].mxu0
        %v2874 = vpop.f32.mrb[0].mxu0
        %v2875 = vadd.f32 0.0, %v2874
        %v2876 = vpop.f32.mrb[0].mxu0
        %2877 = vmatprep.mubr.bf16.mxu0 %v1944
        %2878 = vmatmul.mubr.bf16.gmra.mrb[0].mxu0 %v1943
        %v2879 = vpop.f32.mrb[0].mxu0
        %v2880 = vadd.f32 0.0, %v2879
        %v2881 = vpop.f32.mrb[0].mxu0
        %v2882 = vpop.f32.mrb[0].mxu0
        %v2883 = vadd.f32 0.0, %v2882
        %v2884 = vpop.f32.mrb[0].mxu0
        %2885 = vmatprep.mubr.bf16.mxu0 %v1946
        %2886 = vmatmul.mubr.bf16.gmra.mrb[0].mxu0 %v1945
        %v2887 = vpop.f32.mrb[0].mxu0
        %v2888 = vadd.f32 0.0, %v2887
        %v2889 = vpop.f32.mrb[0].mxu0
        %v2890 = vpop.f32.mrb[0].mxu0
        %v2891 = vadd.f32 0.0, %v2890
        %v2892 = vpop.f32.mrb[0].mxu0
        %2893 = vmatprep.mubr.bf16.mxu0 %v1948
        %2894 = vmatmul.mubr.bf16.gmra.mrb[0].mxu0 %v1947
        %v2895 = vpop.f32.mrb[0].mxu0
        %v2896 = vadd.f32 0.0, %v2895
        %v2897 = vpop.f32.mrb[0].mxu0
        %v2898 = vpop.f32.mrb[0].mxu0
        %v2899 = vadd.f32 0.0, %v2898
        %v2900 = vpop.f32.mrb[0].mxu0
        %2901 = vmatprep.mubr.bf16.mxu0 %v1950
        %2902 = vmatmul.mubr.bf16.gmra.mrb[0].mxu0 %v1949
        %v2903 = vpop.f32.mrb[0].mxu0
        %v2904 = vadd.f32 0.0, %v2903
        %v2905 = vpop.f32.mrb[0].mxu0
        %v2906 = vpop.f32.mrb[0].mxu0
        %v2907 = vadd.f32 0.0, %v2906
        %v2908 = vpop.f32.mrb[0].mxu0
        %2909 = vmatprep.mubr.bf16.mxu0 %v1952
        %2910 = vmatmul.mubr.bf16.gmra.mrb[0].mxu0 %v1951
        %v2911 = vpop.f32.mrb[0].mxu0
        %v2912 = vadd.f32 0.0, %v2911
        %v2913 = vpop.f32.mrb[0].mxu0
        %v2914 = vpop.f32.mrb[0].mxu0
        %v2915 = vadd.f32 0.0, %v2914
        %v2916 = vpop.f32.mrb[0].mxu0
        %2917 = vmatprep.mubr.bf16.mxu0 %v1954
        %2918 = vmatmul.mubr.bf16.gmra.mrb[0].mxu0 %v1953
        %v2919 = vpop.f32.mrb[0].mxu0
        %v2920 = vadd.f32 0.0, %v2919
        %v2921 = vpop.f32.mrb[0].mxu0
        %v2922 = vpop.f32.mrb[0].mxu0
        %v2923 = vadd.f32 0.0, %v2922
        %v2924 = vpop.f32.mrb[0].mxu0
        %2925 = vmatprep.mubr.bf16.mxu0 %v1956
        %2926 = vmatmul.mubr.bf16.gmra.mrb[0].mxu0 %v1955
        %v2927 = vpop.f32.mrb[0].mxu0
        %v2928 = vadd.f32 0.0, %v2927
        %v2929 = vpop.f32.mrb[0].mxu0
        %v2930 = vpop.f32.mrb[0].mxu0
        %v2931 = vadd.f32 0.0, %v2930
        %v2932 = vpop.f32.mrb[0].mxu0
        %2933 = vmatprep.mubr.bf16.mxu0 %v1958
        %2934 = vmatmul.mubr.bf16.gmra.mrb[0].mxu0 %v1957
        %v2935 = vpop.f32.mrb[0].mxu0
        %v2936 = vadd.f32 0.0, %v2935
        %v2937 = vpop.f32.mrb[0].mxu0
        %v2938 = vpop.f32.mrb[0].mxu0
        %v2939 = vadd.f32 0.0, %v2938
        %v2940 = vpop.f32.mrb[0].mxu0
        %2941 = vmatprep.mubr.bf16.mxu0 %v1960
        %2942 = vmatmul.mubr.bf16.gmra.mrb[0].mxu0 %v1959
        %v2943 = vpop.f32.mrb[0].mxu0
        %v2944 = vadd.f32 0.0, %v2943
        %v2945 = vpop.f32.mrb[0].mxu0
        %v2946 = vpop.f32.mrb[0].mxu0
        %v2947 = vadd.f32 0.0, %v2946
        %v2948 = vpop.f32.mrb[0].mxu0
        %2949 = vmatprep.mubr.bf16.mxu0 %v1962
        %2950 = vmatmul.mubr.bf16.gmra.mrb[0].mxu0 %v1961
        %v2951 = vpop.f32.mrb[0].mxu0
        %v2952 = vadd.f32 0.0, %v2951
        %v2953 = vpop.f32.mrb[0].mxu0
        %v2954 = vpop.f32.mrb[0].mxu0
        %v2955 = vadd.f32 0.0, %v2954
        %v2956 = vpop.f32.mrb[0].mxu0
        %2957 = vmatprep.mubr.bf16.mxu0 %v1964
        %2958 = vmatmul.mubr.bf16.gmra.mrb[0].mxu0 %v1963
        %v2959 = vpop.f32.mrb[0].mxu0
        %v2960 = vadd.f32 0.0, %v2959
        %v2961 = vpop.f32.mrb[0].mxu0
        %v2962 = vpop.f32.mrb[0].mxu0
        %v2963 = vadd.f32 0.0, %v2962
        %v2964 = vpop.f32.mrb[0].mxu0
        %2965 = vmatprep.mubr.bf16.mxu0 %v1966
        %2966 = vmatmul.mubr.bf16.gmra.mrb[0].mxu0 %v1965
        %v2967 = vpop.f32.mrb[0].mxu0
        %v2968 = vadd.f32 0.0, %v2967
        %v2969 = vpop.f32.mrb[0].mxu0
        %v2970 = vpop.f32.mrb[0].mxu0
        %v2971 = vadd.f32 0.0, %v2970
        %v2972 = vpop.f32.mrb[0].mxu0
        %2973 = vmatprep.mubr.bf16.mxu0 %v1968
        %2974 = vmatmul.mubr.bf16.gmra.mrb[0].mxu0 %v1967
        %v2975 = vpop.f32.mrb[0].mxu0
        %v2976 = vadd.f32 0.0, %v2975
        %v2977 = vpop.f32.mrb[0].mxu0
        %v2978 = vpop.f32.mrb[0].mxu0
        %v2979 = vadd.f32 0.0, %v2978
        %v2980 = vpop.f32.mrb[0].mxu0
        %2981 = vmatprep.mubr.bf16.mxu0 %v1970
        %2982 = vmatmul.mubr.bf16.gmra.mrb[0].mxu0 %v1969
        %v2983 = vpop.f32.mrb[0].mxu0
        %v2984 = vadd.f32 0.0, %v2983
        %v2985 = vpop.f32.mrb[0].mxu0
        %v2986 = vpop.f32.mrb[0].mxu0
        %v2987 = vadd.f32 0.0, %v2986
        %v2988 = vpop.f32.mrb[0].mxu0
        %2989 = vmatprep.mubr.bf16.mxu0 %v1972
        %2990 = vmatmul.mubr.bf16.gmra.mrb[0].mxu0 %v1971
        %v2991 = vpop.f32.mrb[0].mxu0
        %v2992 = vadd.f32 0.0, %v2991
        %v2993 = vpop.f32.mrb[0].mxu0
        %v2994 = vpop.f32.mrb[0].mxu0
        %v2995 = vadd.f32 0.0, %v2994
        %v2996 = vpop.f32.mrb[0].mxu0
        %2997 = vmatprep.mubr.bf16.mxu0 %v1974
        %2998 = vmatmul.mubr.bf16.gmra.mrb[0].mxu0 %v1973
        %v2999 = vpop.f32.mrb[0].mxu0
        %v3000 = vadd.f32 0.0, %v2999
        %v3001 = vpop.f32.mrb[0].mxu0
        %v3002 = vpop.f32.mrb[0].mxu0
        %v3003 = vadd.f32 0.0, %v3002
        %v3004 = vpop.f32.mrb[0].mxu0
        %3005 = vmatprep.mubr.bf16.mxu0 %v1976
        %3006 = vmatmul.mubr.bf16.gmra.mrb[0].mxu0 %v1975
        %v3007 = vpop.f32.mrb[0].mxu0
        %v3008 = vadd.f32 0.0, %v3007
        %v3009 = vpop.f32.mrb[0].mxu0
        %v3010 = vpop.f32.mrb[0].mxu0
        %v3011 = vadd.f32 0.0, %v3010
        %v3012 = vpop.f32.mrb[0].mxu0
        %3013 = vmatprep.mubr.bf16.mxu0 %v1978
        %3014 = vmatmul.mubr.bf16.gmra.mrb[0].mxu0 %v1977
        %v3015 = vpop.f32.mrb[0].mxu0
        %v3016 = vadd.f32 0.0, %v3015
        %v3017 = vpop.f32.mrb[0].mxu0
        %v3018 = vpop.f32.mrb[0].mxu0
        %v3019 = vadd.f32 0.0, %v3018
        %v3020 = vpop.f32.mrb[0].mxu0
        %3021 = vmatprep.mubr.bf16.mxu0 %v1980
        %3022 = vmatmul.mubr.bf16.gmra.mrb[0].mxu0 %v1979
        %v3023 = vpop.f32.mrb[0].mxu0
        %v3024 = vadd.f32 0.0, %v3023
        %v3025 = vpop.f32.mrb[0].mxu0
        %v3026 = vpop.f32.mrb[0].mxu0
        %v3027 = vadd.f32 0.0, %v3026
        %v3028 = vpop.f32.mrb[0].mxu0
        %3029 = vmatprep.mubr.bf16.mxu0 %v1982
        %3030 = vmatmul.mubr.bf16.gmra.mrb[0].mxu0 %v1981
        %v3031 = vpop.f32.mrb[0].mxu0
        %v3032 = vadd.f32 0.0, %v3031
        %v3033 = vpop.f32.mrb[0].mxu0
        %v3034 = vpop.f32.mrb[0].mxu0
        %v3035 = vadd.f32 0.0, %v3034
        %v3036 = vpop.f32.mrb[0].mxu0
        %3037 = vmatprep.mubr.bf16.mxu0 %v1984
        %3038 = vmatmul.mubr.bf16.gmra.mrb[0].mxu0 %v1983
        %v3039 = vpop.f32.mrb[0].mxu0
        %v3040 = vadd.f32 0.0, %v3039
        %v3041 = vpop.f32.mrb[0].mxu0
        %v3042 = vpop.f32.mrb[0].mxu0
        %v3043 = vadd.f32 0.0, %v3042
        %v3044 = vpop.f32.mrb[0].mxu0
        %3045 = vmatprep.mubr.bf16.mxu0 %v1986
        %3046 = vmatmul.mubr.bf16.gmra.mrb[0].mxu0 %v1985
        %v3047 = vpop.f32.mrb[0].mxu0
        %v3048 = vadd.f32 0.0, %v3047
        %v3049 = vpop.f32.mrb[0].mxu0
        %v3050 = vpop.f32.mrb[0].mxu0
        %v3051 = vadd.f32 0.0, %v3050
        %v3052 = vpop.f32.mrb[0].mxu0
        %3053 = vmatprep.mubr.bf16.mxu0 %v1988
        %3054 = vmatmul.mubr.bf16.gmra.mrb[0].mxu0 %v1987
        %v3055 = vpop.f32.mrb[0].mxu0
        %v3056 = vadd.f32 0.0, %v3055
        %v3057 = vpop.f32.mrb[0].mxu0
        %v3058 = vpop.f32.mrb[0].mxu0
        %v3059 = vadd.f32 0.0, %v3058
        %v3060 = vpop.f32.mrb[0].mxu0
        %3061 = vmatprep.mubr.bf16.mxu0 %v1990
        %3062 = vmatmul.mubr.bf16.gmra.mrb[0].mxu0 %v1989
        %v3063 = vpop.f32.mrb[0].mxu0
        %v3064 = vadd.f32 0.0, %v3063
        %v3065 = vpop.f32.mrb[0].mxu0
        %v3066 = vpop.f32.mrb[0].mxu0
        %v3067 = vadd.f32 0.0, %v3066
        %v3068 = vpop.f32.mrb[0].mxu0
        %3069 = vmatprep.mubr.bf16.mxu0 %v1992
        %3070 = vmatmul.mubr.bf16.gmra.mrb[0].mxu0 %v1991
        %v3071 = vpop.f32.mrb[0].mxu0
        %v3072 = vadd.f32 0.0, %v3071
        %v3073 = vpop.f32.mrb[0].mxu0
        %v3074 = vpop.f32.mrb[0].mxu0
        %v3075 = vadd.f32 0.0, %v3074
        %v3076 = vpop.f32.mrb[0].mxu0
        %3077 = vmatprep.mubr.bf16.mxu0 %v1994
        %3078 = vmatmul.mubr.bf16.gmra.mrb[0].mxu0 %v1993
        %v3079 = vpop.f32.mrb[0].mxu0
        %v3080 = vadd.f32 0.0, %v3079
        %v3081 = vpop.f32.mrb[0].mxu0
        %v3082 = vpop.f32.mrb[0].mxu0
        %v3083 = vadd.f32 0.0, %v3082
        %v3084 = vpop.f32.mrb[0].mxu0
        %3085 = vmatprep.mubr.bf16.mxu0 %v1996
        %3086 = vmatmul.mubr.bf16.gmra.mrb[0].mxu0 %v1995
        %v3087 = vpop.f32.mrb[0].mxu0
        %v3088 = vadd.f32 0.0, %v3087
        %v3089 = vpop.f32.mrb[0].mxu0
        %v3090 = vpop.f32.mrb[0].mxu0
        %v3091 = vadd.f32 0.0, %v3090
        %v3092 = vpop.f32.mrb[0].mxu0
        %3093 = vmatprep.mubr.bf16.mxu0 %v1998
        %3094 = vmatmul.mubr.bf16.gmra.mrb[0].mxu0 %v1997
        %v3095 = vpop.f32.mrb[0].mxu0
        %v3096 = vadd.f32 0.0, %v3095
        %v3097 = vpop.f32.mrb[0].mxu0
        %v3098 = vpop.f32.mrb[0].mxu0
        %v3099 = vadd.f32 0.0, %v3098
        %v3100 = vpop.f32.mrb[0].mxu0
        %3101 = vmatprep.mubr.bf16.mxu0 %v2000
        %3102 = vmatmul.mubr.bf16.gmra.mrb[0].mxu0 %v1999
        %v3103 = vpop.f32.mrb[0].mxu0
        %v3104 = vadd.f32 0.0, %v3103
        %v3105 = vpop.f32.mrb[0].mxu0
        %v3106 = vpop.f32.mrb[0].mxu0
        %v3107 = vadd.f32 0.0, %v3106
        %v3108 = vpop.f32.mrb[0].mxu0
        %3109 = vmatprep.mubr.bf16.mxu0 %v2002
        %3110 = vmatmul.mubr.bf16.gmra.mrb[0].mxu0 %v2001
        %v3111 = vpop.f32.mrb[0].mxu0
        %v3112 = vadd.f32 0.0, %v3111
        %v3113 = vpop.f32.mrb[0].mxu0
        %v3114 = vpop.f32.mrb[0].mxu0
        %v3115 = vadd.f32 0.0, %v3114
        %v3116 = vpop.f32.mrb[0].mxu0
        %3117 = vmatprep.mubr.bf16.mxu0 %v2004
        %3118 = vmatmul.mubr.bf16.gmra.mrb[0].mxu0 %v2003
        %v3119 = vpop.f32.mrb[0].mxu0
        %v3120 = vadd.f32 0.0, %v3119
        %v3121 = vpop.f32.mrb[0].mxu0
        %v3122 = vpop.f32.mrb[0].mxu0
        %v3123 = vadd.f32 0.0, %v3122
        %v3124 = vpop.f32.mrb[0].mxu0
        %3125 = vmatprep.mubr.bf16.mxu0 %v2006
        %3126 = vmatmul.mubr.bf16.gmra.mrb[0].mxu0 %v2005
        %v3127 = vpop.f32.mrb[0].mxu0
        %v3128 = vadd.f32 0.0, %v3127
        %v3129 = vpop.f32.mrb[0].mxu0
        %v3130 = vpop.f32.mrb[0].mxu0
        %v3131 = vadd.f32 0.0, %v3130
        %v3132 = vpop.f32.mrb[0].mxu0
        %3133 = vmatprep.mubr.bf16.mxu0 %v2008
        %3134 = vmatmul.mubr.bf16.gmra.mrb[0].mxu0 %v2007
        %v3135 = vpop.f32.mrb[0].mxu0
        %v3136 = vadd.f32 0.0, %v3135
        %v3137 = vpop.f32.mrb[0].mxu0
        %v3138 = vpop.f32.mrb[0].mxu0
        %v3139 = vadd.f32 0.0, %v3138
        %v3140 = vpop.f32.mrb[0].mxu0
        %3141 = vmatprep.mubr.bf16.mxu0 %v2010
        %3142 = vmatmul.mubr.bf16.gmra.mrb[0].mxu0 %v2009
        %v3143 = vpop.f32.mrb[0].mxu0
        %v3144 = vadd.f32 0.0, %v3143
        %v3145 = vpop.f32.mrb[0].mxu0
        %v3146 = vpop.f32.mrb[0].mxu0
        %v3147 = vadd.f32 0.0, %v3146
        %v3148 = vpop.f32.mrb[0].mxu0
        %3149 = vmatprep.mubr.bf16.mxu0 %v2012
        %3150 = vmatmul.mubr.bf16.gmra.mrb[0].mxu0 %v2011
        %v3151 = vpop.f32.mrb[0].mxu0
        %v3152 = vadd.f32 0.0, %v3151
        %v3153 = vpop.f32.mrb[0].mxu0
        %v3154 = vpop.f32.mrb[0].mxu0
        %v3155 = vadd.f32 0.0, %v3154
        %v3156 = vpop.f32.mrb[0].mxu0
        %3157 = vmatprep.mubr.bf16.mxu0 %v2014
        %3158 = vmatmul.mubr.bf16.gmra.mrb[0].mxu0 %v2013
        %v3159 = vpop.f32.mrb[0].mxu0
        %v3160 = vadd.f32 0.0, %v3159
        %v3161 = vpop.f32.mrb[0].mxu0
        %v3162 = vpop.f32.mrb[0].mxu0
        %v3163 = vadd.f32 0.0, %v3162
        %v3164 = vpop.f32.mrb[0].mxu0
        %3165 = vmatprep.mubr.bf16.mxu0 %v2016
        %3166 = vmatmul.mubr.bf16.gmra.mrb[0].mxu0 %v2015
        %v3167 = vpop.f32.mrb[0].mxu0
        %v3168 = vadd.f32 0.0, %v3167
        %v3169 = vpop.f32.mrb[0].mxu0
        %v3170 = vpop.f32.mrb[0].mxu0
        %v3171 = vadd.f32 0.0, %v3170
        %v3172 = vpop.f32.mrb[0].mxu0
        %3173 = vmatprep.mubr.bf16.mxu0 %v2018
        %3174 = vmatmul.mubr.bf16.gmra.mrb[0].mxu0 %v2017
        %v3175 = vpop.f32.mrb[0].mxu0
        %v3176 = vadd.f32 0.0, %v3175
        %v3177 = vpop.f32.mrb[0].mxu0
        %v3178 = vpop.f32.mrb[0].mxu0
        %v3179 = vadd.f32 0.0, %v3178
        %v3180 = vpop.f32.mrb[0].mxu0
        %3181 = vmatprep.mubr.bf16.mxu0 %v2020
        %3182 = vmatmul.mubr.bf16.gmra.mrb[0].mxu0 %v2019
        %v3183 = vpop.f32.mrb[0].mxu0
        %v3184 = vadd.f32 0.0, %v3183
        %v3185 = vpop.f32.mrb[0].mxu0
        %v3186 = vpop.f32.mrb[0].mxu0
        %v3187 = vadd.f32 0.0, %v3186
        %v3188 = vpop.f32.mrb[0].mxu0
        %3189 = vmatprep.mubr.bf16.mxu0 %v2022
        %3190 = vmatmul.mubr.bf16.gmra.mrb[0].mxu0 %v2021
        %v3191 = vpop.f32.mrb[0].mxu0
        %v3192 = vadd.f32 0.0, %v3191
        %v3193 = vpop.f32.mrb[0].mxu0
        %v3194 = vpop.f32.mrb[0].mxu0
        %v3195 = vadd.f32 0.0, %v3194
        %v3196 = vpop.f32.mrb[0].mxu0
        %3197 = vmatprep.mubr.bf16.mxu0 %v2024
        %3198 = vmatmul.mubr.bf16.gmra.mrb[0].mxu0 %v2023
        %v3199 = vpop.f32.mrb[0].mxu0
        %v3200 = vadd.f32 0.0, %v3199
        %v3201 = vpop.f32.mrb[0].mxu0
        %v3202 = vpop.f32.mrb[0].mxu0
        %v3203 = vadd.f32 0.0, %v3202
        %v3204 = vpop.f32.mrb[0].mxu0
        %3205 = vmatprep.mubr.bf16.mxu0 %v2026
        %3206 = vmatmul.mubr.bf16.gmra.mrb[0].mxu0 %v2025
        %v3207 = vpop.f32.mrb[0].mxu0
        %v3208 = vadd.f32 0.0, %v3207
        %v3209 = vpop.f32.mrb[0].mxu0
        %v3210 = vpop.f32.mrb[0].mxu0
        %v3211 = vadd.f32 0.0, %v3210
        %v3212 = vpop.f32.mrb[0].mxu0
        %3213 = vmatprep.mubr.bf16.mxu0 %v2028
        %3214 = vmatmul.mubr.bf16.gmra.mrb[0].mxu0 %v2027
        %v3215 = vpop.f32.mrb[0].mxu0
        %v3216 = vadd.f32 0.0, %v3215
        %v3217 = vpop.f32.mrb[0].mxu0
        %v3218 = vpop.f32.mrb[0].mxu0
        %v3219 = vadd.f32 0.0, %v3218
        %v3220 = vpop.f32.mrb[0].mxu0
        %3221 = vmatprep.mubr.bf16.mxu0 %v2030
        %3222 = vmatmul.mubr.bf16.gmra.mrb[0].mxu0 %v2029
        %v3223 = vpop.f32.mrb[0].mxu0
        %v3224 = vadd.f32 0.0, %v3223
        %v3225 = vpop.f32.mrb[0].mxu0
        %v3226 = vpop.f32.mrb[0].mxu0
        %v3227 = vadd.f32 0.0, %v3226
        %v3228 = vpop.f32.mrb[0].mxu0
        %3229 = vmatprep.mubr.bf16.mxu0 %v2032
        %3230 = vmatmul.mubr.bf16.gmra.mrb[0].mxu0 %v2031
        %v3231 = vpop.f32.mrb[0].mxu0
        %v3232 = vadd.f32 0.0, %v3231
        %v3233 = vpop.f32.mrb[0].mxu0
        %v3234 = vpop.f32.mrb[0].mxu0
        %v3235 = vadd.f32 0.0, %v3234
        %v3236 = vpop.f32.mrb[0].mxu0
        %3237 = vmatprep.mubr.bf16.mxu0 %v2034
        %3238 = vmatmul.mubr.bf16.gmra.mrb[0].mxu0 %v2033
        %v3239 = vpop.f32.mrb[0].mxu0
        %v3240 = vadd.f32 0.0, %v3239
        %v3241 = vpop.f32.mrb[0].mxu0
        %v3242 = vpop.f32.mrb[0].mxu0
        %v3243 = vadd.f32 0.0, %v3242
        %v3244 = vpop.f32.mrb[0].mxu0
        %3245 = vmatprep.mubr.bf16.mxu0 %v2036
        %3246 = vmatmul.mubr.bf16.gmra.mrb[0].mxu0 %v2035
        %v3247 = vpop.f32.mrb[0].mxu0
        %v3248 = vadd.f32 0.0, %v3247
        %v3249 = vpop.f32.mrb[0].mxu0
        %v3250 = vpop.f32.mrb[0].mxu0
        %v3251 = vadd.f32 0.0, %v3250
        %v3252 = vpop.f32.mrb[0].mxu0
        %3253 = vmatprep.mubr.bf16.mxu0 %v2038
        %3254 = vmatmul.mubr.bf16.gmra.mrb[0].mxu0 %v2037
        %v3255 = vpop.f32.mrb[0].mxu0
        %v3256 = vadd.f32 0.0, %v3255
        %v3257 = vpop.f32.mrb[0].mxu0
        %v3258 = vpop.f32.mrb[0].mxu0
        %v3259 = vadd.f32 0.0, %v3258
        %v3260 = vpop.f32.mrb[0].mxu0
        %3261 = vmatprep.mubr.bf16.mxu0 %v2040
        %3262 = vmatmul.mubr.bf16.gmra.mrb[0].mxu0 %v2039
        %v3263 = vpop.f32.mrb[0].mxu0
        %v3264 = vadd.f32 0.0, %v3263
        %v3265 = vpop.f32.mrb[0].mxu0
        %v3266 = vpop.f32.mrb[0].mxu0
        %v3267 = vadd.f32 0.0, %v3266
        %v3268 = vpop.f32.mrb[0].mxu0
        %3269 = vmatprep.mubr.bf16.mxu0 %v2042
        %3270 = vmatmul.mubr.bf16.gmra.mrb[0].mxu0 %v2041
        %v3271 = vpop.f32.mrb[0].mxu0
        %v3272 = vadd.f32 0.0, %v3271
        %v3273 = vpop.f32.mrb[0].mxu0
        %v3274 = vpop.f32.mrb[0].mxu0
        %v3275 = vadd.f32 0.0, %v3274
        %v3276 = vpop.f32.mrb[0].mxu0
        %3277 = vmatprep.mubr.bf16.mxu0 %v2044
        %3278 = vmatmul.mubr.bf16.gmra.mrb[0].mxu0 %v2043
        %v3279 = vpop.f32.mrb[0].mxu0
        %v3280 = vadd.f32 0.0, %v3279
        %v3281 = vpop.f32.mrb[0].mxu0
        %v3282 = vpop.f32.mrb[0].mxu0
        %v3283 = vadd.f32 0.0, %v3282
        %v3284 = vpop.f32.mrb[0].mxu0
        %3285 = vmatprep.mubr.bf16.mxu0 %v2046
        %3286 = vmatmul.mubr.bf16.gmra.mrb[0].mxu0 %v2045
        %v3287 = vpop.f32.mrb[0].mxu0
        %v3288 = vadd.f32 0.0, %v3287
        %v3289 = vpop.f32.mrb[0].mxu0
        %v3290 = vpop.f32.mrb[0].mxu0
        %v3291 = vadd.f32 0.0, %v3290
        %v3292 = vpop.f32.mrb[0].mxu0
        %3293 = vmatprep.mubr.bf16.mxu0 %v2048
        %3294 = vmatmul.mubr.bf16.gmra.mrb[0].mxu0 %v2047
        %v3295 = vpop.f32.mrb[0].mxu0
        %v3296 = vadd.f32 0.0, %v3295
        %v3297 = vpop.f32.mrb[0].mxu0
        %v3298 = vpop.f32.mrb[0].mxu0
        %v3299 = vadd.f32 0.0, %v3298
        %v3300 = vpop.f32.mrb[0].mxu0
        %3301 = vmatprep.mubr.bf16.mxu0 %v2050
        %3302 = vmatmul.mubr.bf16.gmra.mrb[0].mxu0 %v2049
        %v3303 = vpop.f32.mrb[0].mxu0
        %v3304 = vadd.f32 0.0, %v3303
        %v3305 = vpop.f32.mrb[0].mxu0
        %v3306 = vpop.f32.mrb[0].mxu0
        %v3307 = vadd.f32 0.0, %v3306
        %v3308 = vpop.f32.mrb[0].mxu0
        %3309 = vmatprep.mubr.bf16.mxu0 %v2052
        %3310 = vmatmul.mubr.bf16.gmra.mrb[0].mxu0 %v2051
        %v3311 = vpop.f32.mrb[0].mxu0
        %v3312 = vadd.f32 0.0, %v3311
        %v3313 = vpop.f32.mrb[0].mxu0
        %v3314 = vpop.f32.mrb[0].mxu0
        %v3315 = vadd.f32 0.0, %v3314
        %v3316 = vpop.f32.mrb[0].mxu0
        %3317 = vmatprep.mubr.bf16.mxu0 %v2054
        %3318 = vmatmul.mubr.bf16.gmra.mrb[0].mxu0 %v2053
        %v3319 = vpop.f32.mrb[0].mxu0
        %v3320 = vadd.f32 0.0, %v3319
        %v3321 = vpop.f32.mrb[0].mxu0
        %v3322 = vpop.f32.mrb[0].mxu0
        %v3323 = vadd.f32 0.0, %v3322
        %v3324 = vpop.f32.mrb[0].mxu0
        %3325 = vmatprep.mubr.bf16.mxu0 %v2056
        %3326 = vmatmul.mubr.bf16.gmra.mrb[0].mxu0 %v2055
        %v3327 = vpop.f32.mrb[0].mxu0
        %v3328 = vadd.f32 0.0, %v3327
        %v3329 = vpop.f32.mrb[0].mxu0
        %v3330 = vpop.f32.mrb[0].mxu0
        %v3331 = vadd.f32 0.0, %v3330
        %v3332 = vpop.f32.mrb[0].mxu0
        %3333 = vmatprep.mubr.bf16.mxu0 %v2058
        %3334 = vmatmul.mubr.bf16.gmra.mrb[0].mxu0 %v2057
        %v3335 = vpop.f32.mrb[0].mxu0
        %v3336 = vadd.f32 0.0, %v3335
        %v3337 = vpop.f32.mrb[0].mxu0
        %v3338 = vpop.f32.mrb[0].mxu0
        %v3339 = vadd.f32 0.0, %v3338
        %v3340 = vpop.f32.mrb[0].mxu0
        %3341 = vmatprep.mubr.bf16.mxu0 %v2060
        %3342 = vmatmul.mubr.bf16.gmra.mrb[0].mxu0 %v2059
        %v3343 = vpop.f32.mrb[0].mxu0
        %v3344 = vadd.f32 0.0, %v3343
        %v3345 = vpop.f32.mrb[0].mxu0
        %v3346 = vpop.f32.mrb[0].mxu0
        %v3347 = vadd.f32 0.0, %v3346
        %v3348 = vpop.f32.mrb[0].mxu0
        %3349 = vmatprep.mubr.bf16.mxu0 %v2062
        %3350 = vmatmul.mubr.bf16.gmra.mrb[0].mxu0 %v2061
        %v3351 = vpop.f32.mrb[0].mxu0
        %v3352 = vadd.f32 0.0, %v3351
        %v3353 = vpop.f32.mrb[0].mxu0
        %v3354 = vpop.f32.mrb[0].mxu0
        %v3355 = vadd.f32 0.0, %v3354
        %v3356 = vpop.f32.mrb[0].mxu0
        %3357 = vmatprep.mubr.bf16.mxu0 %v2064
        %3358 = vmatmul.mubr.bf16.gmra.mrb[0].mxu0 %v2063
        %v3359 = vpop.f32.mrb[0].mxu0
        %v3360 = vadd.f32 0.0, %v3359
        %v3361 = vpop.f32.mrb[0].mxu0
        %v3362 = vpop.f32.mrb[0].mxu0
        %v3363 = vadd.f32 0.0, %v3362
        %v3364 = vpop.f32.mrb[0].mxu0
        %3365 = vmatprep.mubr.bf16.mxu0 %v2066
        %3366 = vmatmul.mubr.bf16.gmra.mrb[0].mxu0 %v2065
        %v3367 = vpop.f32.mrb[0].mxu0
        %v3368 = vadd.f32 0.0, %v3367
        %v3369 = vpop.f32.mrb[0].mxu0
        %v3370 = vpop.f32.mrb[0].mxu0
        %v3371 = vadd.f32 0.0, %v3370
        %v3372 = vpop.f32.mrb[0].mxu0
        %3373 = vmatprep.mubr.bf16.mxu0 %v2068
        %3374 = vmatmul.mubr.bf16.gmra.mrb[0].mxu0 %v2067
        %v3375 = vpop.f32.mrb[0].mxu0
        %v3376 = vadd.f32 0.0, %v3375
        %v3377 = vpop.f32.mrb[0].mxu0
        %v3378 = vpop.f32.mrb[0].mxu0
        %v3379 = vadd.f32 0.0, %v3378
        %v3380 = vpop.f32.mrb[0].mxu0
        %3381 = vmatprep.mubr.bf16.mxu0 %v2070
        %3382 = vmatmul.mubr.bf16.gmra.mrb[0].mxu0 %v2069
        %v3383 = vpop.f32.mrb[0].mxu0
        %v3384 = vadd.f32 0.0, %v3383
        %v3385 = vpop.f32.mrb[0].mxu0
        %v3386 = vpop.f32.mrb[0].mxu0
        %v3387 = vadd.f32 0.0, %v3386
        %v3388 = vpop.f32.mrb[0].mxu0
        %3389 = vmatprep.mubr.bf16.mxu0 %v2072
        %3390 = vmatmul.mubr.bf16.gmra.mrb[0].mxu0 %v2071
        %v3391 = vpop.f32.mrb[0].mxu0
        %v3392 = vadd.f32 0.0, %v3391
        %v3393 = vpop.f32.mrb[0].mxu0
        %v3394 = vpop.f32.mrb[0].mxu0
        %v3395 = vadd.f32 0.0, %v3394
        %v3396 = vpop.f32.mrb[0].mxu0
        %3397 = vmatprep.mubr.bf16.mxu0 %v2074
        %3398 = vmatmul.mubr.bf16.gmra.mrb[0].mxu0 %v2073
        %v3399 = vpop.f32.mrb[0].mxu0
        %v3400 = vadd.f32 0.0, %v3399
        %v3401 = vpop.f32.mrb[0].mxu0
        %v3402 = vpop.f32.mrb[0].mxu0
        %v3403 = vadd.f32 0.0, %v3402
        %v3404 = vpop.f32.mrb[0].mxu0
        %3405 = vmatprep.mubr.bf16.mxu0 %v2076
        %3406 = vmatmul.mubr.bf16.gmra.mrb[0].mxu0 %v2075
        %v3407 = vpop.f32.mrb[0].mxu0
        %v3408 = vadd.f32 0.0, %v3407
        %v3409 = vpop.f32.mrb[0].mxu0
        %v3410 = vpop.f32.mrb[0].mxu0
        %v3411 = vadd.f32 0.0, %v3410
        %v3412 = vpop.f32.mrb[0].mxu0
        %3413 = vmatprep.mubr.bf16.mxu0 %v2078
        %3414 = vmatmul.mubr.bf16.gmra.mrb[0].mxu0 %v2077
        %v3415 = vpop.f32.mrb[0].mxu0
        %v3416 = vadd.f32 0.0, %v3415
        %v3417 = vpop.f32.mrb[0].mxu0
        %v3418 = vpop.f32.mrb[0].mxu0
        %v3419 = vadd.f32 0.0, %v3418
        %v3420 = vpop.f32.mrb[0].mxu0
        %3421 = vmatprep.mubr.bf16.mxu0 %v2080
        %3422 = vmatmul.mubr.bf16.gmra.mrb[0].mxu0 %v2079
        %v3423 = vpop.f32.mrb[0].mxu0
        %v3424 = vadd.f32 0.0, %v3423
        %v3425 = vpop.f32.mrb[0].mxu0
        %v3426 = vpop.f32.mrb[0].mxu0
        %v3427 = vadd.f32 0.0, %v3426
        %v3428 = vpop.f32.mrb[0].mxu0
        %3429 = vmatprep.mubr.bf16.mxu0 %v2082
        %3430 = vmatmul.mubr.bf16.gmra.mrb[0].mxu0 %v2081
        %v3431 = vpop.f32.mrb[0].mxu0
        %v3432 = vadd.f32 0.0, %v3431
        %v3433 = vpop.f32.mrb[0].mxu0
        %v3434 = vpop.f32.mrb[0].mxu0
        %v3435 = vadd.f32 0.0, %v3434
        %v3436 = vpop.f32.mrb[0].mxu0
        %3437 = vmatprep.mubr.bf16.mxu0 %v2084
        %3438 = vmatmul.mubr.bf16.gmra.mrb[0].mxu0 %v2083
        %v3439 = vpop.f32.mrb[0].mxu0
        %v3440 = vadd.f32 0.0, %v3439
        %v3441 = vpop.f32.mrb[0].mxu0
        %v3442 = vpop.f32.mrb[0].mxu0
        %v3443 = vadd.f32 0.0, %v3442
        %v3444 = vpop.f32.mrb[0].mxu0
        %3445 = vmatprep.mubr.bf16.mxu0 %v2086
        %3446 = vmatmul.mubr.bf16.gmra.mrb[0].mxu0 %v2085
        %v3447 = vpop.f32.mrb[0].mxu0
        %v3448 = vadd.f32 0.0, %v3447
        %v3449 = vpop.f32.mrb[0].mxu0
        %v3450 = vpop.f32.mrb[0].mxu0
        %v3451 = vadd.f32 0.0, %v3450
        %v3452 = vpop.f32.mrb[0].mxu0
        %3453 = vmatprep.mubr.bf16.mxu0 %v2088
        %3454 = vmatmul.mubr.bf16.gmra.mrb[0].mxu0 %v2087
        %v3455 = vpop.f32.mrb[0].mxu0
        %v3456 = vadd.f32 0.0, %v3455
        %v3457 = vpop.f32.mrb[0].mxu0
        %v3458 = vpop.f32.mrb[0].mxu0
        %v3459 = vadd.f32 0.0, %v3458
        %v3460 = vpop.f32.mrb[0].mxu0
        %3461 = vmatprep.mubr.bf16.mxu0 %v2090
        %3462 = vmatmul.mubr.bf16.gmra.mrb[0].mxu0 %v2089
        %v3463 = vpop.f32.mrb[0].mxu0
        %v3464 = vadd.f32 0.0, %v3463
        %v3465 = vpop.f32.mrb[0].mxu0
        %v3466 = vpop.f32.mrb[0].mxu0
        %v3467 = vadd.f32 0.0, %v3466
        %v3468 = vpop.f32.mrb[0].mxu0
        %3469 = vmatprep.mubr.bf16.mxu0 %v2092
        %3470 = vmatmul.mubr.bf16.gmra.mrb[0].mxu0 %v2091
        %v3471 = vpop.f32.mrb[0].mxu0
        %v3472 = vadd.f32 0.0, %v3471
        %v3473 = vpop.f32.mrb[0].mxu0
        %v3474 = vpop.f32.mrb[0].mxu0
        %v3475 = vadd.f32 0.0, %v3474
        %v3476 = vpop.f32.mrb[0].mxu0
        %3477 = vmatprep.mubr.bf16.mxu0 %v2094
        %3478 = vmatmul.mubr.bf16.gmra.mrb[0].mxu0 %v2093
        %v3479 = vpop.f32.mrb[0].mxu0
        %v3480 = vadd.f32 0.0, %v3479
        %v3481 = vpop.f32.mrb[0].mxu0
        %v3482 = vpop.f32.mrb[0].mxu0
        %v3483 = vadd.f32 0.0, %v3482
        %v3484 = vpop.f32.mrb[0].mxu0
        %3485 = vmatprep.mubr.bf16.mxu0 %v2096
        %3486 = vmatmul.mubr.bf16.gmra.mrb[0].mxu0 %v2095
        %v3487 = vpop.f32.mrb[0].mxu0
        %v3488 = vadd.f32 0.0, %v3487
        %v3489 = vpop.f32.mrb[0].mxu0
        %v3490 = vpop.f32.mrb[0].mxu0
        %v3491 = vadd.f32 0.0, %v3490
        %v3492 = vpop.f32.mrb[0].mxu0
        %3493 = vmatprep.mubr.bf16.mxu0 %v2098
        %3494 = vmatmul.mubr.bf16.gmra.mrb[0].mxu0 %v2097
        %v3495 = vpop.f32.mrb[0].mxu0
        %v3496 = vadd.f32 0.0, %v3495
        %v3497 = vpop.f32.mrb[0].mxu0
        %v3498 = vpop.f32.mrb[0].mxu0
        %v3499 = vadd.f32 0.0, %v3498
        %v3500 = vpop.f32.mrb[0].mxu0
        %3501 = vmatprep.mubr.bf16.mxu0 %v2100
        %3502 = vmatmul.mubr.bf16.gmra.mrb[0].mxu0 %v2099
        %v3503 = vpop.f32.mrb[0].mxu0
        %v3504 = vadd.f32 0.0, %v3503
        %v3505 = vpop.f32.mrb[0].mxu0
        %v3506 = vpop.f32.mrb[0].mxu0
        %v3507 = vadd.f32 0.0, %v3506
        %v3508 = vpop.f32.mrb[0].mxu0
        %3509 = vdwg.mxu0
        %v3510 = vadd.f32 %v533, %v2488
        %v3511 = vadd.f32 %v534, %v2491
        %v3512 = vadd.f32 %v535, %v2496
        %v3513 = vadd.f32 %v536, %v2499
        %v3514 = vadd.f32 %v537, %v2504
        %v3515 = vadd.f32 %v538, %v2507
        %v3516 = vadd.f32 %v539, %v2512
        %v3517 = vadd.f32 %v540, %v2515
        %v3518 = vadd.f32 %v541, %v2520
        %v3519 = vadd.f32 %v542, %v2523
        %v3520 = vadd.f32 %v543, %v2528
        %v3521 = vadd.f32 %v544, %v2531
        %v3522 = vadd.f32 %v545, %v2536
        %v3523 = vadd.f32 %v546, %v2539
        %v3524 = vadd.f32 %v547, %v2544
        %v3525 = vadd.f32 %v548, %v2547
        %v3526 = vadd.f32 %v549, %v2552
        %v3527 = vadd.f32 %v550, %v2555
        %v3528 = vadd.f32 %v551, %v2560
        %v3529 = vadd.f32 %v552, %v2563
        %v3530 = vadd.f32 %v553, %v2568
        %v3531 = vadd.f32 %v554, %v2571
        %v3532 = vadd.f32 %v555, %v2576
        %v3533 = vadd.f32 %v556, %v2579
        %v3534 = vadd.f32 %v557, %v2584
        %v3535 = vadd.f32 %v558, %v2587
        %v3536 = vadd.f32 %v559, %v2592
        %v3537 = vadd.f32 %v560, %v2595
        %v3538 = vadd.f32 %v561, %v2600
        %v3539 = vadd.f32 %v562, %v2603
        %v3540 = vadd.f32 %v563, %v2608
        %v3541 = vadd.f32 %v564, %v2611
        %v3542 = vadd.f32 %v565, %v2616
        %v3543 = vadd.f32 %v566, %v2619
        %v3544 = vadd.f32 %v567, %v2624
        %v3545 = vadd.f32 %v568, %v2627
        %v3546 = vadd.f32 %v569, %v2632
        %v3547 = vadd.f32 %v570, %v2635
        %v3548 = vadd.f32 %v571, %v2640
        %v3549 = vadd.f32 %v572, %v2643
        %v3550 = vadd.f32 %v573, %v2648
        %v3551 = vadd.f32 %v574, %v2651
        %v3552 = vadd.f32 %v575, %v2656
        %v3553 = vadd.f32 %v576, %v2659
        %v3554 = vadd.f32 %v577, %v2664
        %v3555 = vadd.f32 %v578, %v2667
        %v3556 = vadd.f32 %v579, %v2672
        %v3557 = vadd.f32 %v580, %v2675
        %v3558 = vadd.f32 %v581, %v2680
        %v3559 = vadd.f32 %v582, %v2683
        %v3560 = vadd.f32 %v583, %v2688
        %v3561 = vadd.f32 %v584, %v2691
        %v3562 = vadd.f32 %v585, %v2696
        %v3563 = vadd.f32 %v586, %v2699
        %v3564 = vadd.f32 %v587, %v2704
        %v3565 = vadd.f32 %v588, %v2707
        %v3566 = vadd.f32 %v589, %v2712
        %v3567 = vadd.f32 %v590, %v2715
        %v3568 = vadd.f32 %v591, %v2720
        %v3569 = vadd.f32 %v592, %v2723
        %v3570 = vadd.f32 %v593, %v2728
        %v3571 = vadd.f32 %v594, %v2731
        %v3572 = vadd.f32 %v595, %v2736
        %v3573 = vadd.f32 %v596, %v2739
        %v3574 = vadd.f32 %v597, %v2744
        %v3575 = vadd.f32 %v598, %v2747
        %v3576 = vadd.f32 %v599, %v2752
        %v3577 = vadd.f32 %v600, %v2755
        %v3578 = vadd.f32 %v601, %v2760
        %v3579 = vadd.f32 %v602, %v2763
        %v3580 = vadd.f32 %v603, %v2768
        %v3581 = vadd.f32 %v604, %v2771
        %v3582 = vadd.f32 %v605, %v2776
        %v3583 = vadd.f32 %v606, %v2779
        %v3584 = vadd.f32 %v607, %v2784
        %v3585 = vadd.f32 %v608, %v2787
        %v3586 = vadd.f32 %v609, %v2792
        %v3587 = vadd.f32 %v610, %v2795
        %v3588 = vadd.f32 %v611, %v2800
        %v3589 = vadd.f32 %v612, %v2803
        %v3590 = vadd.f32 %v613, %v2808
        %v3591 = vadd.f32 %v614, %v2811
        %v3592 = vadd.f32 %v615, %v2816
        %v3593 = vadd.f32 %v616, %v2819
        %v3594 = vadd.f32 %v617, %v2824
        %v3595 = vadd.f32 %v618, %v2827
        %v3596 = vadd.f32 %v619, %v2832
        %v3597 = vadd.f32 %v620, %v2835
        %v3598 = vadd.f32 %v621, %v2840
        %v3599 = vadd.f32 %v622, %v2843
        %v3600 = vadd.f32 %v623, %v2848
        %v3601 = vadd.f32 %v624, %v2851
        %v3602 = vadd.f32 %v625, %v2856
        %v3603 = vadd.f32 %v626, %v2859
        %v3604 = vadd.f32 %v627, %v2864
        %v3605 = vadd.f32 %v628, %v2867
        %v3606 = vadd.f32 %v629, %v2872
        %v3607 = vadd.f32 %v630, %v2875
        %v3608 = vadd.f32 %v631, %v2880
        %v3609 = vadd.f32 %v632, %v2883
        %v3610 = vadd.f32 %v633, %v2888
        %v3611 = vadd.f32 %v634, %v2891
        %v3612 = vadd.f32 %v635, %v2896
        %v3613 = vadd.f32 %v636, %v2899
        %v3614 = vadd.f32 %v637, %v2904
        %v3615 = vadd.f32 %v638, %v2907
        %v3616 = vadd.f32 %v639, %v2912
        %v3617 = vadd.f32 %v640, %v2915
        %v3618 = vadd.f32 %v641, %v2920
        %v3619 = vadd.f32 %v642, %v2923
        %v3620 = vadd.f32 %v643, %v2928
        %v3621 = vadd.f32 %v644, %v2931
        %v3622 = vadd.f32 %v645, %v2936
        %v3623 = vadd.f32 %v646, %v2939
        %v3624 = vadd.f32 %v647, %v2944
        %v3625 = vadd.f32 %v648, %v2947
        %v3626 = vadd.f32 %v649, %v2952
        %v3627 = vadd.f32 %v650, %v2955
        %v3628 = vadd.f32 %v651, %v2960
        %v3629 = vadd.f32 %v652, %v2963
        %v3630 = vadd.f32 %v653, %v2968
        %v3631 = vadd.f32 %v654, %v2971
        %v3632 = vadd.f32 %v655, %v2976
        %v3633 = vadd.f32 %v656, %v2979
        %v3634 = vadd.f32 %v657, %v2984
        %v3635 = vadd.f32 %v658, %v2987
        %v3636 = vadd.f32 %v659, %v2992
        %v3637 = vadd.f32 %v660, %v2995
        %v3638 = vadd.f32 %v661, %v3000
        %v3639 = vadd.f32 %v662, %v3003
        %v3640 = vadd.f32 %v663, %v3008
        %v3641 = vadd.f32 %v664, %v3011
        %v3642 = vadd.f32 %v665, %v3016
        %v3643 = vadd.f32 %v666, %v3019
        %v3644 = vadd.f32 %v667, %v3024
        %v3645 = vadd.f32 %v668, %v3027
        %v3646 = vadd.f32 %v669, %v3032
        %v3647 = vadd.f32 %v670, %v3035
        %v3648 = vadd.f32 %v671, %v3040
        %v3649 = vadd.f32 %v672, %v3043
        %v3650 = vadd.f32 %v673, %v3048
        %v3651 = vadd.f32 %v674, %v3051
        %v3652 = vadd.f32 %v675, %v3056
        %v3653 = vadd.f32 %v676, %v3059
        %v3654 = vadd.f32 %v677, %v3064
        %v3655 = vadd.f32 %v678, %v3067
        %v3656 = vadd.f32 %v679, %v3072
        %v3657 = vadd.f32 %v680, %v3075
        %v3658 = vadd.f32 %v681, %v3080
        %v3659 = vadd.f32 %v682, %v3083
        %v3660 = vadd.f32 %v683, %v3088
        %v3661 = vadd.f32 %v684, %v3091
        %v3662 = vadd.f32 %v685, %v3096
        %v3663 = vadd.f32 %v686, %v3099
        %v3664 = vadd.f32 %v687, %v3104
        %v3665 = vadd.f32 %v688, %v3107
        %v3666 = vadd.f32 %v689, %v3112
        %v3667 = vadd.f32 %v690, %v3115
        %v3668 = vadd.f32 %v691, %v3120
        %v3669 = vadd.f32 %v692, %v3123
        %v3670 = vadd.f32 %v693, %v3128
        %v3671 = vadd.f32 %v694, %v3131
        %v3672 = vadd.f32 %v695, %v3136
        %v3673 = vadd.f32 %v696, %v3139
        %v3674 = vadd.f32 %v697, %v3144
        %v3675 = vadd.f32 %v698, %v3147
        %v3676 = vadd.f32 %v699, %v3152
        %v3677 = vadd.f32 %v700, %v3155
        %v3678 = vadd.f32 %v701, %v3160
        %v3679 = vadd.f32 %v702, %v3163
        %v3680 = vadd.f32 %v703, %v3168
        %v3681 = vadd.f32 %v704, %v3171
        %v3682 = vadd.f32 %v705, %v3176
        %v3683 = vadd.f32 %v706, %v3179
        %v3684 = vadd.f32 %v707, %v3184
        %v3685 = vadd.f32 %v708, %v3187
        %v3686 = vadd.f32 %v709, %v3192
        %v3687 = vadd.f32 %v710, %v3195
        %v3688 = vadd.f32 %v711, %v3200
        %v3689 = vadd.f32 %v712, %v3203
        %v3690 = vadd.f32 %v713, %v3208
        %v3691 = vadd.f32 %v714, %v3211
        %v3692 = vadd.f32 %v715, %v3216
        %v3693 = vadd.f32 %v716, %v3219
        %v3694 = vadd.f32 %v717, %v3224
        %v3695 = vadd.f32 %v718, %v3227
        %v3696 = vadd.f32 %v719, %v3232
        %v3697 = vadd.f32 %v720, %v3235
        %v3698 = vadd.f32 %v721, %v3240
        %v3699 = vadd.f32 %v722, %v3243
        %v3700 = vadd.f32 %v723, %v3248
        %v3701 = vadd.f32 %v724, %v3251
        %v3702 = vadd.f32 %v725, %v3256
        %v3703 = vadd.f32 %v726, %v3259
        %v3704 = vadd.f32 %v727, %v3264
        %v3705 = vadd.f32 %v728, %v3267
        %v3706 = vadd.f32 %v729, %v3272
        %v3707 = vadd.f32 %v730, %v3275
        %v3708 = vadd.f32 %v731, %v3280
        %v3709 = vadd.f32 %v732, %v3283
        %v3710 = vadd.f32 %v733, %v3288
        %v3711 = vadd.f32 %v734, %v3291
        %v3712 = vadd.f32 %v735, %v3296
        %v3713 = vadd.f32 %v736, %v3299
        %v3714 = vadd.f32 %v737, %v3304
        %v3715 = vadd.f32 %v738, %v3307
        %v3716 = vadd.f32 %v739, %v3312
        %v3717 = vadd.f32 %v740, %v3315
        %v3718 = vadd.f32 %v741, %v3320
        %v3719 = vadd.f32 %v742, %v3323
        %v3720 = vadd.f32 %v743, %v3328
        %v3721 = vadd.f32 %v744, %v3331
        %v3722 = vadd.f32 %v745, %v3336
        %v3723 = vadd.f32 %v746, %v3339
        %v3724 = vadd.f32 %v747, %v3344
        %v3725 = vadd.f32 %v748, %v3347
        %v3726 = vadd.f32 %v749, %v3352
        %v3727 = vadd.f32 %v750, %v3355
        %v3728 = vadd.f32 %v751, %v3360
        %v3729 = vadd.f32 %v752, %v3363
        %v3730 = vadd.f32 %v753, %v3368
        %v3731 = vadd.f32 %v754, %v3371
        %v3732 = vadd.f32 %v755, %v3376
        %v3733 = vadd.f32 %v756, %v3379
        %v3734 = vadd.f32 %v757, %v3384
        %v3735 = vadd.f32 %v758, %v3387
        %v3736 = vadd.f32 %v759, %v3392
        %v3737 = vadd.f32 %v760, %v3395
        %v3738 = vadd.f32 %v761, %v3400
        %v3739 = vadd.f32 %v762, %v3403
        %v3740 = vadd.f32 %v763, %v3408
        %v3741 = vadd.f32 %v764, %v3411
        %v3742 = vadd.f32 %v765, %v3416
        %v3743 = vadd.f32 %v766, %v3419
        %v3744 = vadd.f32 %v767, %v3424
        %v3745 = vadd.f32 %v768, %v3427
        %v3746 = vadd.f32 %v769, %v3432
        %v3747 = vadd.f32 %v770, %v3435
        %v3748 = vadd.f32 %v771, %v3440
        %v3749 = vadd.f32 %v772, %v3443
        %v3750 = vadd.f32 %v773, %v3448
        %v3751 = vadd.f32 %v774, %v3451
        %v3752 = vadd.f32 %v775, %v3456
        %v3753 = vadd.f32 %v776, %v3459
        %v3754 = vadd.f32 %v777, %v3464
        %v3755 = vadd.f32 %v778, %v3467
        %v3756 = vadd.f32 %v779, %v3472
        %v3757 = vadd.f32 %v780, %v3475
        %v3758 = vadd.f32 %v781, %v3480
        %v3759 = vadd.f32 %v782, %v3483
        %v3760 = vadd.f32 %v783, %v3488
        %v3761 = vadd.f32 %v784, %v3491
        %v3762 = vadd.f32 %v785, %v3496
        %v3763 = vadd.f32 %v786, %v3499
        %v3764 = vadd.f32 %v787, %v3504
        %v3765 = vadd.f32 %v788, %v3507
        %3766 = vst [vmem:[#allocation2] sm:$0xff] %v3510
        %3767 = vst [vmem:[#allocation2 + $0x8] sm:$0xff] %v3511
        %3768 = vst [vmem:[#allocation2 + $0x10] sm:$0xff] %v3512
        %3769 = vst [vmem:[#allocation2 + $0x18] sm:$0xff] %v3513
        %3770 = vst [vmem:[#allocation2 + $0x20] sm:$0xff] %v3514
        %3771 = vst [vmem:[#allocation2 + $0x28] sm:$0xff] %v3515
        %3772 = vst [vmem:[#allocation2 + $0x30] sm:$0xff] %v3516
        %3773 = vst [vmem:[#allocation2 + $0x38] sm:$0xff] %v3517
        %3774 = vst [vmem:[#allocation2 + $0x40] sm:$0xff] %v3518
        %3775 = vst [vmem:[#allocation2 + $0x48] sm:$0xff] %v3519
        %3776 = vst [vmem:[#allocation2 + $0x50] sm:$0xff] %v3520
        %3777 = vst [vmem:[#allocation2 + $0x58] sm:$0xff] %v3521
        %3778 = vst [vmem:[#allocation2 + $0x60] sm:$0xff] %v3522
        %3779 = vst [vmem:[#allocation2 + $0x68] sm:$0xff] %v3523
        %3780 = vst [vmem:[#allocation2 + $0x70] sm:$0xff] %v3524
        %3781 = vst [vmem:[#allocation2 + $0x78] sm:$0xff] %v3525
        %3782 = vst [vmem:[#allocation2 + $0x80] sm:$0xff] %v3526
        %3783 = vst [vmem:[#allocation2 + $0x88] sm:$0xff] %v3527
        %3784 = vst [vmem:[#allocation2 + $0x90] sm:$0xff] %v3528
        %3785 = vst [vmem:[#allocation2 + $0x98] sm:$0xff] %v3529
        %3786 = vst [vmem:[#allocation2 + $0xa0] sm:$0xff] %v3530
        %3787 = vst [vmem:[#allocation2 + $0xa8] sm:$0xff] %v3531
        %3788 = vst [vmem:[#allocation2 + $0xb0] sm:$0xff] %v3532
        %3789 = vst [vmem:[#allocation2 + $0xb8] sm:$0xff] %v3533
        %3790 = vst [vmem:[#allocation2 + $0xc0] sm:$0xff] %v3534
        %3791 = vst [vmem:[#allocation2 + $0xc8] sm:$0xff] %v3535
        %3792 = vst [vmem:[#allocation2 + $0xd0] sm:$0xff] %v3536
        %3793 = vst [vmem:[#allocation2 + $0xd8] sm:$0xff] %v3537
        %3794 = vst [vmem:[#allocation2 + $0xe0] sm:$0xff] %v3538
        %3795 = vst [vmem:[#allocation2 + $0xe8] sm:$0xff] %v3539
        %3796 = vst [vmem:[#allocation2 + $0xf0] sm:$0xff] %v3540
        %3797 = vst [vmem:[#allocation2 + $0xf8] sm:$0xff] %v3541
        %3798 = vst [vmem:[#allocation2 + $0x100] sm:$0xff] %v3542
        %3799 = vst [vmem:[#allocation2 + $0x108] sm:$0xff] %v3543
        %3800 = vst [vmem:[#allocation2 + $0x110] sm:$0xff] %v3544
        %3801 = vst [vmem:[#allocation2 + $0x118] sm:$0xff] %v3545
        %3802 = vst [vmem:[#allocation2 + $0x120] sm:$0xff] %v3546
        %3803 = vst [vmem:[#allocation2 + $0x128] sm:$0xff] %v3547
        %3804 = vst [vmem:[#allocation2 + $0x130] sm:$0xff] %v3548
        %3805 = vst [vmem:[#allocation2 + $0x138] sm:$0xff] %v3549
        %3806 = vst [vmem:[#allocation2 + $0x140] sm:$0xff] %v3550
        %3807 = vst [vmem:[#allocation2 + $0x148] sm:$0xff] %v3551
        %3808 = vst [vmem:[#allocation2 + $0x150] sm:$0xff] %v3552
        %3809 = vst [vmem:[#allocation2 + $0x158] sm:$0xff] %v3553
        %3810 = vst [vmem:[#allocation2 + $0x160] sm:$0xff] %v3554
        %3811 = vst [vmem:[#allocation2 + $0x168] sm:$0xff] %v3555
        %3812 = vst [vmem:[#allocation2 + $0x170] sm:$0xff] %v3556
        %3813 = vst [vmem:[#allocation2 + $0x178] sm:$0xff] %v3557
        %3814 = vst [vmem:[#allocation2 + $0x180] sm:$0xff] %v3558
        %3815 = vst [vmem:[#allocation2 + $0x188] sm:$0xff] %v3559
        %3816 = vst [vmem:[#allocation2 + $0x190] sm:$0xff] %v3560
        %3817 = vst [vmem:[#allocation2 + $0x198] sm:$0xff] %v3561
        %3818 = vst [vmem:[#allocation2 + $0x1a0] sm:$0xff] %v3562
        %3819 = vst [vmem:[#allocation2 + $0x1a8] sm:$0xff] %v3563
        %3820 = vst [vmem:[#allocation2 + $0x1b0] sm:$0xff] %v3564
        %3821 = vst [vmem:[#allocation2 + $0x1b8] sm:$0xff] %v3565
        %3822 = vst [vmem:[#allocation2 + $0x1c0] sm:$0xff] %v3566
        %3823 = vst [vmem:[#allocation2 + $0x1c8] sm:$0xff] %v3567
        %3824 = vst [vmem:[#allocation2 + $0x1d0] sm:$0xff] %v3568
        %3825 = vst [vmem:[#allocation2 + $0x1d8] sm:$0xff] %v3569
        %3826 = vst [vmem:[#allocation2 + $0x1e0] sm:$0xff] %v3570
        %3827 = vst [vmem:[#allocation2 + $0x1e8] sm:$0xff] %v3571
        %3828 = vst [vmem:[#allocation2 + $0x1f0] sm:$0xff] %v3572
        %3829 = vst [vmem:[#allocation2 + $0x1f8] sm:$0xff] %v3573
        %3830 = vst [vmem:[#allocation2 + $0x200] sm:$0xff] %v3574
        %3831 = vst [vmem:[#allocation2 + $0x208] sm:$0xff] %v3575
        %3832 = vst [vmem:[#allocation2 + $0x210] sm:$0xff] %v3576
        %3833 = vst [vmem:[#allocation2 + $0x218] sm:$0xff] %v3577
        %3834 = vst [vmem:[#allocation2 + $0x220] sm:$0xff] %v3578
        %3835 = vst [vmem:[#allocation2 + $0x228] sm:$0xff] %v3579
        %3836 = vst [vmem:[#allocation2 + $0x230] sm:$0xff] %v3580
        %3837 = vst [vmem:[#allocation2 + $0x238] sm:$0xff] %v3581
        %3838 = vst [vmem:[#allocation2 + $0x240] sm:$0xff] %v3582
        %3839 = vst [vmem:[#allocation2 + $0x248] sm:$0xff] %v3583
        %3840 = vst [vmem:[#allocation2 + $0x250] sm:$0xff] %v3584
        %3841 = vst [vmem:[#allocation2 + $0x258] sm:$0xff] %v3585
        %3842 = vst [vmem:[#allocation2 + $0x260] sm:$0xff] %v3586
        %3843 = vst [vmem:[#allocation2 + $0x268] sm:$0xff] %v3587
        %3844 = vst [vmem:[#allocation2 + $0x270] sm:$0xff] %v3588
        %3845 = vst [vmem:[#allocation2 + $0x278] sm:$0xff] %v3589
        %3846 = vst [vmem:[#allocation2 + $0x280] sm:$0xff] %v3590
        %3847 = vst [vmem:[#allocation2 + $0x288] sm:$0xff] %v3591
        %3848 = vst [vmem:[#allocation2 + $0x290] sm:$0xff] %v3592
        %3849 = vst [vmem:[#allocation2 + $0x298] sm:$0xff] %v3593
        %3850 = vst [vmem:[#allocation2 + $0x2a0] sm:$0xff] %v3594
        %3851 = vst [vmem:[#allocation2 + $0x2a8] sm:$0xff] %v3595
        %3852 = vst [vmem:[#allocation2 + $0x2b0] sm:$0xff] %v3596
        %3853 = vst [vmem:[#allocation2 + $0x2b8] sm:$0xff] %v3597
        %3854 = vst [vmem:[#allocation2 + $0x2c0] sm:$0xff] %v3598
        %3855 = vst [vmem:[#allocation2 + $0x2c8] sm:$0xff] %v3599
        %3856 = vst [vmem:[#allocation2 + $0x2d0] sm:$0xff] %v3600
        %3857 = vst [vmem:[#allocation2 + $0x2d8] sm:$0xff] %v3601
        %3858 = vst [vmem:[#allocation2 + $0x2e0] sm:$0xff] %v3602
        %3859 = vst [vmem:[#allocation2 + $0x2e8] sm:$0xff] %v3603
        %3860 = vst [vmem:[#allocation2 + $0x2f0] sm:$0xff] %v3604
        %3861 = vst [vmem:[#allocation2 + $0x2f8] sm:$0xff] %v3605
        %3862 = vst [vmem:[#allocation2 + $0x300] sm:$0xff] %v3606
        %3863 = vst [vmem:[#allocation2 + $0x308] sm:$0xff] %v3607
        %3864 = vst [vmem:[#allocation2 + $0x310] sm:$0xff] %v3608
        %3865 = vst [vmem:[#allocation2 + $0x318] sm:$0xff] %v3609
        %3866 = vst [vmem:[#allocation2 + $0x320] sm:$0xff] %v3610
        %3867 = vst [vmem:[#allocation2 + $0x328] sm:$0xff] %v3611
        %3868 = vst [vmem:[#allocation2 + $0x330] sm:$0xff] %v3612
        %3869 = vst [vmem:[#allocation2 + $0x338] sm:$0xff] %v3613
        %3870 = vst [vmem:[#allocation2 + $0x340] sm:$0xff] %v3614
        %3871 = vst [vmem:[#allocation2 + $0x348] sm:$0xff] %v3615
        %3872 = vst [vmem:[#allocation2 + $0x350] sm:$0xff] %v3616
        %3873 = vst [vmem:[#allocation2 + $0x358] sm:$0xff] %v3617
        %3874 = vst [vmem:[#allocation2 + $0x360] sm:$0xff] %v3618
        %3875 = vst [vmem:[#allocation2 + $0x368] sm:$0xff] %v3619
        %3876 = vst [vmem:[#allocation2 + $0x370] sm:$0xff] %v3620
        %3877 = vst [vmem:[#allocation2 + $0x378] sm:$0xff] %v3621
        %3878 = vst [vmem:[#allocation2 + $0x380] sm:$0xff] %v3622
        %3879 = vst [vmem:[#allocation2 + $0x388] sm:$0xff] %v3623
        %3880 = vst [vmem:[#allocation2 + $0x390] sm:$0xff] %v3624
        %3881 = vst [vmem:[#allocation2 + $0x398] sm:$0xff] %v3625
        %3882 = vst [vmem:[#allocation2 + $0x3a0] sm:$0xff] %v3626
        %3883 = vst [vmem:[#allocation2 + $0x3a8] sm:$0xff] %v3627
        %3884 = vst [vmem:[#allocation2 + $0x3b0] sm:$0xff] %v3628
        %3885 = vst [vmem:[#allocation2 + $0x3b8] sm:$0xff] %v3629
        %3886 = vst [vmem:[#allocation2 + $0x3c0] sm:$0xff] %v3630
        %3887 = vst [vmem:[#allocation2 + $0x3c8] sm:$0xff] %v3631
        %3888 = vst [vmem:[#allocation2 + $0x3d0] sm:$0xff] %v3632
        %3889 = vst [vmem:[#allocation2 + $0x3d8] sm:$0xff] %v3633
        %3890 = vst [vmem:[#allocation2 + $0x3e0] sm:$0xff] %v3634
        %3891 = vst [vmem:[#allocation2 + $0x3e8] sm:$0xff] %v3635
        %3892 = vst [vmem:[#allocation2 + $0x3f0] sm:$0xff] %v3636
        %3893 = vst [vmem:[#allocation2 + $0x3f8] sm:$0xff] %v3637
        %3894 = vst [vmem:[#allocation2 + $0x400] sm:$0xff] %v3638
        %3895 = vst [vmem:[#allocation2 + $0x408] sm:$0xff] %v3639
        %3896 = vst [vmem:[#allocation2 + $0x410] sm:$0xff] %v3640
        %3897 = vst [vmem:[#allocation2 + $0x418] sm:$0xff] %v3641
        %3898 = vst [vmem:[#allocation2 + $0x420] sm:$0xff] %v3642
        %3899 = vst [vmem:[#allocation2 + $0x428] sm:$0xff] %v3643
        %3900 = vst [vmem:[#allocation2 + $0x430] sm:$0xff] %v3644
        %3901 = vst [vmem:[#allocation2 + $0x438] sm:$0xff] %v3645
        %3902 = vst [vmem:[#allocation2 + $0x440] sm:$0xff] %v3646
        %3903 = vst [vmem:[#allocation2 + $0x448] sm:$0xff] %v3647
        %3904 = vst [vmem:[#allocation2 + $0x450] sm:$0xff] %v3648
        %3905 = vst [vmem:[#allocation2 + $0x458] sm:$0xff] %v3649
        %3906 = vst [vmem:[#allocation2 + $0x460] sm:$0xff] %v3650
        %3907 = vst [vmem:[#allocation2 + $0x468] sm:$0xff] %v3651
        %3908 = vst [vmem:[#allocation2 + $0x470] sm:$0xff] %v3652
        %3909 = vst [vmem:[#allocation2 + $0x478] sm:$0xff] %v3653
        %3910 = vst [vmem:[#allocation2 + $0x480] sm:$0xff] %v3654
        %3911 = vst [vmem:[#allocation2 + $0x488] sm:$0xff] %v3655
        %3912 = vst [vmem:[#allocation2 + $0x490] sm:$0xff] %v3656
        %3913 = vst [vmem:[#allocation2 + $0x498] sm:$0xff] %v3657
        %3914 = vst [vmem:[#allocation2 + $0x4a0] sm:$0xff] %v3658
        %3915 = vst [vmem:[#allocation2 + $0x4a8] sm:$0xff] %v3659
        %3916 = vst [vmem:[#allocation2 + $0x4b0] sm:$0xff] %v3660
        %3917 = vst [vmem:[#allocation2 + $0x4b8] sm:$0xff] %v3661
        %3918 = vst [vmem:[#allocation2 + $0x4c0] sm:$0xff] %v3662
        %3919 = vst [vmem:[#allocation2 + $0x4c8] sm:$0xff] %v3663
        %3920 = vst [vmem:[#allocation2 + $0x4d0] sm:$0xff] %v3664
        %3921 = vst [vmem:[#allocation2 + $0x4d8] sm:$0xff] %v3665
        %3922 = vst [vmem:[#allocation2 + $0x4e0] sm:$0xff] %v3666
        %3923 = vst [vmem:[#allocation2 + $0x4e8] sm:$0xff] %v3667
        %3924 = vst [vmem:[#allocation2 + $0x4f0] sm:$0xff] %v3668
        %3925 = vst [vmem:[#allocation2 + $0x4f8] sm:$0xff] %v3669
        %3926 = vst [vmem:[#allocation2 + $0x500] sm:$0xff] %v3670
        %3927 = vst [vmem:[#allocation2 + $0x508] sm:$0xff] %v3671
        %3928 = vst [vmem:[#allocation2 + $0x510] sm:$0xff] %v3672
        %3929 = vst [vmem:[#allocation2 + $0x518] sm:$0xff] %v3673
        %3930 = vst [vmem:[#allocation2 + $0x520] sm:$0xff] %v3674
        %3931 = vst [vmem:[#allocation2 + $0x528] sm:$0xff] %v3675
        %3932 = vst [vmem:[#allocation2 + $0x530] sm:$0xff] %v3676
        %3933 = vst [vmem:[#allocation2 + $0x538] sm:$0xff] %v3677
        %3934 = vst [vmem:[#allocation2 + $0x540] sm:$0xff] %v3678
        %3935 = vst [vmem:[#allocation2 + $0x548] sm:$0xff] %v3679
        %3936 = vst [vmem:[#allocation2 + $0x550] sm:$0xff] %v3680
        %3937 = vst [vmem:[#allocation2 + $0x558] sm:$0xff] %v3681
        %3938 = vst [vmem:[#allocation2 + $0x560] sm:$0xff] %v3682
        %3939 = vst [vmem:[#allocation2 + $0x568] sm:$0xff] %v3683
        %3940 = vst [vmem:[#allocation2 + $0x570] sm:$0xff] %v3684
        %3941 = vst [vmem:[#allocation2 + $0x578] sm:$0xff] %v3685
        %3942 = vst [vmem:[#allocation2 + $0x580] sm:$0xff] %v3686
        %3943 = vst [vmem:[#allocation2 + $0x588] sm:$0xff] %v3687
        %3944 = vst [vmem:[#allocation2 + $0x590] sm:$0xff] %v3688
        %3945 = vst [vmem:[#allocation2 + $0x598] sm:$0xff] %v3689
        %3946 = vst [vmem:[#allocation2 + $0x5a0] sm:$0xff] %v3690
        %3947 = vst [vmem:[#allocation2 + $0x5a8] sm:$0xff] %v3691
        %3948 = vst [vmem:[#allocation2 + $0x5b0] sm:$0xff] %v3692
        %3949 = vst [vmem:[#allocation2 + $0x5b8] sm:$0xff] %v3693
        %3950 = vst [vmem:[#allocation2 + $0x5c0] sm:$0xff] %v3694
        %3951 = vst [vmem:[#allocation2 + $0x5c8] sm:$0xff] %v3695
        %3952 = vst [vmem:[#allocation2 + $0x5d0] sm:$0xff] %v3696
        %3953 = vst [vmem:[#allocation2 + $0x5d8] sm:$0xff] %v3697
        %3954 = vst [vmem:[#allocation2 + $0x5e0] sm:$0xff] %v3698
        %3955 = vst [vmem:[#allocation2 + $0x5e8] sm:$0xff] %v3699
        %3956 = vst [vmem:[#allocation2 + $0x5f0] sm:$0xff] %v3700
        %3957 = vst [vmem:[#allocation2 + $0x5f8] sm:$0xff] %v3701
        %3958 = vst [vmem:[#allocation2 + $0x600] sm:$0xff] %v3702
        %3959 = vst [vmem:[#allocation2 + $0x608] sm:$0xff] %v3703
        %3960 = vst [vmem:[#allocation2 + $0x610] sm:$0xff] %v3704
        %3961 = vst [vmem:[#allocation2 + $0x618] sm:$0xff] %v3705
        %3962 = vst [vmem:[#allocation2 + $0x620] sm:$0xff] %v3706
        %3963 = vst [vmem:[#allocation2 + $0x628] sm:$0xff] %v3707
        %3964 = vst [vmem:[#allocation2 + $0x630] sm:$0xff] %v3708
        %3965 = vst [vmem:[#allocation2 + $0x638] sm:$0xff] %v3709
        %3966 = vst [vmem:[#allocation2 + $0x640] sm:$0xff] %v3710
        %3967 = vst [vmem:[#allocation2 + $0x648] sm:$0xff] %v3711
        %3968 = vst [vmem:[#allocation2 + $0x650] sm:$0xff] %v3712
        %3969 = vst [vmem:[#allocation2 + $0x658] sm:$0xff] %v3713
        %3970 = vst [vmem:[#allocation2 + $0x660] sm:$0xff] %v3714
        %3971 = vst [vmem:[#allocation2 + $0x668] sm:$0xff] %v3715
        %3972 = vst [vmem:[#allocation2 + $0x670] sm:$0xff] %v3716
        %3973 = vst [vmem:[#allocation2 + $0x678] sm:$0xff] %v3717
        %3974 = vst [vmem:[#allocation2 + $0x680] sm:$0xff] %v3718
        %3975 = vst [vmem:[#allocation2 + $0x688] sm:$0xff] %v3719
        %3976 = vst [vmem:[#allocation2 + $0x690] sm:$0xff] %v3720
        %3977 = vst [vmem:[#allocation2 + $0x698] sm:$0xff] %v3721
        %3978 = vst [vmem:[#allocation2 + $0x6a0] sm:$0xff] %v3722
        %3979 = vst [vmem:[#allocation2 + $0x6a8] sm:$0xff] %v3723
        %3980 = vst [vmem:[#allocation2 + $0x6b0] sm:$0xff] %v3724
        %3981 = vst [vmem:[#allocation2 + $0x6b8] sm:$0xff] %v3725
        %3982 = vst [vmem:[#allocation2 + $0x6c0] sm:$0xff] %v3726
        %3983 = vst [vmem:[#allocation2 + $0x6c8] sm:$0xff] %v3727
        %3984 = vst [vmem:[#allocation2 + $0x6d0] sm:$0xff] %v3728
        %3985 = vst [vmem:[#allocation2 + $0x6d8] sm:$0xff] %v3729
        %3986 = vst [vmem:[#allocation2 + $0x6e0] sm:$0xff] %v3730
        %3987 = vst [vmem:[#allocation2 + $0x6e8] sm:$0xff] %v3731
        %3988 = vst [vmem:[#allocation2 + $0x6f0] sm:$0xff] %v3732
        %3989 = vst [vmem:[#allocation2 + $0x6f8] sm:$0xff] %v3733
        %3990 = vst [vmem:[#allocation2 + $0x700] sm:$0xff] %v3734
        %3991 = vst [vmem:[#allocation2 + $0x708] sm:$0xff] %v3735
        %3992 = vst [vmem:[#allocation2 + $0x710] sm:$0xff] %v3736
        %3993 = vst [vmem:[#allocation2 + $0x718] sm:$0xff] %v3737
        %3994 = vst [vmem:[#allocation2 + $0x720] sm:$0xff] %v3738
        %3995 = vst [vmem:[#allocation2 + $0x728] sm:$0xff] %v3739
        %3996 = vst [vmem:[#allocation2 + $0x730] sm:$0xff] %v3740
        %3997 = vst [vmem:[#allocation2 + $0x738] sm:$0xff] %v3741
        %3998 = vst [vmem:[#allocation2 + $0x740] sm:$0xff] %v3742
        %3999 = vst [vmem:[#allocation2 + $0x748] sm:$0xff] %v3743
        %4000 = vst [vmem:[#allocation2 + $0x750] sm:$0xff] %v3744
        %4001 = vst [vmem:[#allocation2 + $0x758] sm:$0xff] %v3745
        %4002 = vst [vmem:[#allocation2 + $0x760] sm:$0xff] %v3746
        %4003 = vst [vmem:[#allocation2 + $0x768] sm:$0xff] %v3747
        %4004 = vst [vmem:[#allocation2 + $0x770] sm:$0xff] %v3748
        %4005 = vst [vmem:[#allocation2 + $0x778] sm:$0xff] %v3749
        %4006 = vst [vmem:[#allocation2 + $0x780] sm:$0xff] %v3750
        %4007 = vst [vmem:[#allocation2 + $0x788] sm:$0xff] %v3751
        %4008 = vst [vmem:[#allocation2 + $0x790] sm:$0xff] %v3752
        %4009 = vst [vmem:[#allocation2 + $0x798] sm:$0xff] %v3753
        %4010 = vst [vmem:[#allocation2 + $0x7a0] sm:$0xff] %v3754
        %4011 = vst [vmem:[#allocation2 + $0x7a8] sm:$0xff] %v3755
        %4012 = vst [vmem:[#allocation2 + $0x7b0] sm:$0xff] %v3756
        %4013 = vst [vmem:[#allocation2 + $0x7b8] sm:$0xff] %v3757
        %4014 = vst [vmem:[#allocation2 + $0x7c0] sm:$0xff] %v3758
        %4015 = vst [vmem:[#allocation2 + $0x7c8] sm:$0xff] %v3759
        %4016 = vst [vmem:[#allocation2 + $0x7d0] sm:$0xff] %v3760
        %4017 = vst [vmem:[#allocation2 + $0x7d8] sm:$0xff] %v3761
        %4018 = vst [vmem:[#allocation2 + $0x7e0] sm:$0xff] %v3762
        %4019 = vst [vmem:[#allocation2 + $0x7e8] sm:$0xff] %v3763
        %4020 = vst [vmem:[#allocation2 + $0x7f0] sm:$0xff] %v3764
        %4021 = vst [vmem:[#allocation2 + $0x7f8] sm:$0xff] %v3765
        // Predicated region
        $region49: #{matmul_bias_act.1} parent=31 // pred_check
          %p4022 = pneg %p273
        $region50: #{matmul_bias_act.1} parent=31 // pred_check_branch
          %4024 = sbr.rel (%p4022) target = $region52
        $region51: #{matmul_bias_act.1} parent=31 // pred_region
          %v4025 = vld [vmem:[#allocation2] sm:$0xff]
          %v4026 = vld [vmem:[#allocation2 + $0x8] sm:$0xff]
          %v4027 = vld [vmem:[#allocation2 + $0x10] sm:$0xff]
          %v4028 = vld [vmem:[#allocation2 + $0x18] sm:$0xff]
          %v4029 = vld [vmem:[#allocation2 + $0x20] sm:$0xff]
          %v4030 = vld [vmem:[#allocation2 + $0x28] sm:$0xff]
          %v4031 = vld [vmem:[#allocation2 + $0x30] sm:$0xff]
          %v4032 = vld [vmem:[#allocation2 + $0x38] sm:$0xff]
          %v4033 = vld [vmem:[#allocation2 + $0x40] sm:$0xff]
          %v4034 = vld [vmem:[#allocation2 + $0x48] sm:$0xff]
          %v4035 = vld [vmem:[#allocation2 + $0x50] sm:$0xff]
          %v4036 = vld [vmem:[#allocation2 + $0x58] sm:$0xff]
          %v4037 = vld [vmem:[#allocation2 + $0x60] sm:$0xff]
          %v4038 = vld [vmem:[#allocation2 + $0x68] sm:$0xff]
          %v4039 = vld [vmem:[#allocation2 + $0x70] sm:$0xff]
          %v4040 = vld [vmem:[#allocation2 + $0x78] sm:$0xff]
          %v4041 = vld [vmem:[#allocation2 + $0x80] sm:$0xff]
          %v4042 = vld [vmem:[#allocation2 + $0x88] sm:$0xff]
          %v4043 = vld [vmem:[#allocation2 + $0x90] sm:$0xff]
          %v4044 = vld [vmem:[#allocation2 + $0x98] sm:$0xff]
          %v4045 = vld [vmem:[#allocation2 + $0xa0] sm:$0xff]
          %v4046 = vld [vmem:[#allocation2 + $0xa8] sm:$0xff]
          %v4047 = vld [vmem:[#allocation2 + $0xb0] sm:$0xff]
          %v4048 = vld [vmem:[#allocation2 + $0xb8] sm:$0xff]
          %v4049 = vld [vmem:[#allocation2 + $0xc0] sm:$0xff]
          %v4050 = vld [vmem:[#allocation2 + $0xc8] sm:$0xff]
          %v4051 = vld [vmem:[#allocation2 + $0xd0] sm:$0xff]
          %v4052 = vld [vmem:[#allocation2 + $0xd8] sm:$0xff]
          %v4053 = vld [vmem:[#allocation2 + $0xe0] sm:$0xff]
          %v4054 = vld [vmem:[#allocation2 + $0xe8] sm:$0xff]
          %v4055 = vld [vmem:[#allocation2 + $0xf0] sm:$0xff]
          %v4056 = vld [vmem:[#allocation2 + $0xf8] sm:$0xff]
          %v4057 = vld [vmem:[#allocation2 + $0x100] sm:$0xff]
          %v4058 = vld [vmem:[#allocation2 + $0x108] sm:$0xff]
          %v4059 = vld [vmem:[#allocation2 + $0x110] sm:$0xff]
          %v4060 = vld [vmem:[#allocation2 + $0x118] sm:$0xff]
          %v4061 = vld [vmem:[#allocation2 + $0x120] sm:$0xff]
          %v4062 = vld [vmem:[#allocation2 + $0x128] sm:$0xff]
          %v4063 = vld [vmem:[#allocation2 + $0x130] sm:$0xff]
          %v4064 = vld [vmem:[#allocation2 + $0x138] sm:$0xff]
          %v4065 = vld [vmem:[#allocation2 + $0x140] sm:$0xff]
          %v4066 = vld [vmem:[#allocation2 + $0x148] sm:$0xff]
          %v4067 = vld [vmem:[#allocation2 + $0x150] sm:$0xff]
          %v4068 = vld [vmem:[#allocation2 + $0x158] sm:$0xff]
          %v4069 = vld [vmem:[#allocation2 + $0x160] sm:$0xff]
          %v4070 = vld [vmem:[#allocation2 + $0x168] sm:$0xff]
          %v4071 = vld [vmem:[#allocation2 + $0x170] sm:$0xff]
          %v4072 = vld [vmem:[#allocation2 + $0x178] sm:$0xff]
          %v4073 = vld [vmem:[#allocation2 + $0x180] sm:$0xff]
          %v4074 = vld [vmem:[#allocation2 + $0x188] sm:$0xff]
          %v4075 = vld [vmem:[#allocation2 + $0x190] sm:$0xff]
          %v4076 = vld [vmem:[#allocation2 + $0x198] sm:$0xff]
          %v4077 = vld [vmem:[#allocation2 + $0x1a0] sm:$0xff]
          %v4078 = vld [vmem:[#allocation2 + $0x1a8] sm:$0xff]
          %v4079 = vld [vmem:[#allocation2 + $0x1b0] sm:$0xff]
          %v4080 = vld [vmem:[#allocation2 + $0x1b8] sm:$0xff]
          %v4081 = vld [vmem:[#allocation2 + $0x1c0] sm:$0xff]
          %v4082 = vld [vmem:[#allocation2 + $0x1c8] sm:$0xff]
          %v4083 = vld [vmem:[#allocation2 + $0x1d0] sm:$0xff]
          %v4084 = vld [vmem:[#allocation2 + $0x1d8] sm:$0xff]
          %v4085 = vld [vmem:[#allocation2 + $0x1e0] sm:$0xff]
          %v4086 = vld [vmem:[#allocation2 + $0x1e8] sm:$0xff]
          %v4087 = vld [vmem:[#allocation2 + $0x1f0] sm:$0xff]
          %v4088 = vld [vmem:[#allocation2 + $0x1f8] sm:$0xff]
          %v4089 = vld [vmem:[#allocation2 + $0x200] sm:$0xff]
          %v4090 = vld [vmem:[#allocation2 + $0x208] sm:$0xff]
          %v4091 = vld [vmem:[#allocation2 + $0x210] sm:$0xff]
          %v4092 = vld [vmem:[#allocation2 + $0x218] sm:$0xff]
          %v4093 = vld [vmem:[#allocation2 + $0x220] sm:$0xff]
          %v4094 = vld [vmem:[#allocation2 + $0x228] sm:$0xff]
          %v4095 = vld [vmem:[#allocation2 + $0x230] sm:$0xff]
          %v4096 = vld [vmem:[#allocation2 + $0x238] sm:$0xff]
          %v4097 = vld [vmem:[#allocation2 + $0x240] sm:$0xff]
          %v4098 = vld [vmem:[#allocation2 + $0x248] sm:$0xff]
          %v4099 = vld [vmem:[#allocation2 + $0x250] sm:$0xff]
          %v4100 = vld [vmem:[#allocation2 + $0x258] sm:$0xff]
          %v4101 = vld [vmem:[#allocation2 + $0x260] sm:$0xff]
          %v4102 = vld [vmem:[#allocation2 + $0x268] sm:$0xff]
          %v4103 = vld [vmem:[#allocation2 + $0x270] sm:$0xff]
          %v4104 = vld [vmem:[#allocation2 + $0x278] sm:$0xff]
          %v4105 = vld [vmem:[#allocation2 + $0x280] sm:$0xff]
          %v4106 = vld [vmem:[#allocation2 + $0x288] sm:$0xff]
          %v4107 = vld [vmem:[#allocation2 + $0x290] sm:$0xff]
          %v4108 = vld [vmem:[#allocation2 + $0x298] sm:$0xff]
          %v4109 = vld [vmem:[#allocation2 + $0x2a0] sm:$0xff]
          %v4110 = vld [vmem:[#allocation2 + $0x2a8] sm:$0xff]
          %v4111 = vld [vmem:[#allocation2 + $0x2b0] sm:$0xff]
          %v4112 = vld [vmem:[#allocation2 + $0x2b8] sm:$0xff]
          %v4113 = vld [vmem:[#allocation2 + $0x2c0] sm:$0xff]
          %v4114 = vld [vmem:[#allocation2 + $0x2c8] sm:$0xff]
          %v4115 = vld [vmem:[#allocation2 + $0x2d0] sm:$0xff]
          %v4116 = vld [vmem:[#allocation2 + $0x2d8] sm:$0xff]
          %v4117 = vld [vmem:[#allocation2 + $0x2e0] sm:$0xff]
          %v4118 = vld [vmem:[#allocation2 + $0x2e8] sm:$0xff]
          %v4119 = vld [vmem:[#allocation2 + $0x2f0] sm:$0xff]
          %v4120 = vld [vmem:[#allocation2 + $0x2f8] sm:$0xff]
          %v4121 = vld [vmem:[#allocation2 + $0x300] sm:$0xff]
          %v4122 = vld [vmem:[#allocation2 + $0x308] sm:$0xff]
          %v4123 = vld [vmem:[#allocation2 + $0x310] sm:$0xff]
          %v4124 = vld [vmem:[#allocation2 + $0x318] sm:$0xff]
          %v4125 = vld [vmem:[#allocation2 + $0x320] sm:$0xff]
          %v4126 = vld [vmem:[#allocation2 + $0x328] sm:$0xff]
          %v4127 = vld [vmem:[#allocation2 + $0x330] sm:$0xff]
          %v4128 = vld [vmem:[#allocation2 + $0x338] sm:$0xff]
          %v4129 = vld [vmem:[#allocation2 + $0x340] sm:$0xff]
          %v4130 = vld [vmem:[#allocation2 + $0x348] sm:$0xff]
          %v4131 = vld [vmem:[#allocation2 + $0x350] sm:$0xff]
          %v4132 = vld [vmem:[#allocation2 + $0x358] sm:$0xff]
          %v4133 = vld [vmem:[#allocation2 + $0x360] sm:$0xff]
          %v4134 = vld [vmem:[#allocation2 + $0x368] sm:$0xff]
          %v4135 = vld [vmem:[#allocation2 + $0x370] sm:$0xff]
          %v4136 = vld [vmem:[#allocation2 + $0x378] sm:$0xff]
          %v4137 = vld [vmem:[#allocation2 + $0x380] sm:$0xff]
          %v4138 = vld [vmem:[#allocation2 + $0x388] sm:$0xff]
          %v4139 = vld [vmem:[#allocation2 + $0x390] sm:$0xff]
          %v4140 = vld [vmem:[#allocation2 + $0x398] sm:$0xff]
          %v4141 = vld [vmem:[#allocation2 + $0x3a0] sm:$0xff]
          %v4142 = vld [vmem:[#allocation2 + $0x3a8] sm:$0xff]
          %v4143 = vld [vmem:[#allocation2 + $0x3b0] sm:$0xff]
          %v4144 = vld [vmem:[#allocation2 + $0x3b8] sm:$0xff]
          %v4145 = vld [vmem:[#allocation2 + $0x3c0] sm:$0xff]
          %v4146 = vld [vmem:[#allocation2 + $0x3c8] sm:$0xff]
          %v4147 = vld [vmem:[#allocation2 + $0x3d0] sm:$0xff]
          %v4148 = vld [vmem:[#allocation2 + $0x3d8] sm:$0xff]
          %v4149 = vld [vmem:[#allocation2 + $0x3e0] sm:$0xff]
          %v4150 = vld [vmem:[#allocation2 + $0x3e8] sm:$0xff]
          %v4151 = vld [vmem:[#allocation2 + $0x3f0] sm:$0xff]
          %v4152 = vld [vmem:[#allocation2 + $0x3f8] sm:$0xff]
          %v4153 = vld [vmem:[#allocation2 + $0x400] sm:$0xff]
          %v4154 = vld [vmem:[#allocation2 + $0x408] sm:$0xff]
          %v4155 = vld [vmem:[#allocation2 + $0x410] sm:$0xff]
          %v4156 = vld [vmem:[#allocation2 + $0x418] sm:$0xff]
          %v4157 = vld [vmem:[#allocation2 + $0x420] sm:$0xff]
          %v4158 = vld [vmem:[#allocation2 + $0x428] sm:$0xff]
          %v4159 = vld [vmem:[#allocation2 + $0x430] sm:$0xff]
          %v4160 = vld [vmem:[#allocation2 + $0x438] sm:$0xff]
          %v4161 = vld [vmem:[#allocation2 + $0x440] sm:$0xff]
          %v4162 = vld [vmem:[#allocation2 + $0x448] sm:$0xff]
          %v4163 = vld [vmem:[#allocation2 + $0x450] sm:$0xff]
          %v4164 = vld [vmem:[#allocation2 + $0x458] sm:$0xff]
          %v4165 = vld [vmem:[#allocation2 + $0x460] sm:$0xff]
          %v4166 = vld [vmem:[#allocation2 + $0x468] sm:$0xff]
          %v4167 = vld [vmem:[#allocation2 + $0x470] sm:$0xff]
          %v4168 = vld [vmem:[#allocation2 + $0x478] sm:$0xff]
          %v4169 = vld [vmem:[#allocation2 + $0x480] sm:$0xff]
          %v4170 = vld [vmem:[#allocation2 + $0x488] sm:$0xff]
          %v4171 = vld [vmem:[#allocation2 + $0x490] sm:$0xff]
          %v4172 = vld [vmem:[#allocation2 + $0x498] sm:$0xff]
          %v4173 = vld [vmem:[#allocation2 + $0x4a0] sm:$0xff]
          %v4174 = vld [vmem:[#allocation2 + $0x4a8] sm:$0xff]
          %v4175 = vld [vmem:[#allocation2 + $0x4b0] sm:$0xff]
          %v4176 = vld [vmem:[#allocation2 + $0x4b8] sm:$0xff]
          %v4177 = vld [vmem:[#allocation2 + $0x4c0] sm:$0xff]
          %v4178 = vld [vmem:[#allocation2 + $0x4c8] sm:$0xff]
          %v4179 = vld [vmem:[#allocation2 + $0x4d0] sm:$0xff]
          %v4180 = vld [vmem:[#allocation2 + $0x4d8] sm:$0xff]
          %v4181 = vld [vmem:[#allocation2 + $0x4e0] sm:$0xff]
          %v4182 = vld [vmem:[#allocation2 + $0x4e8] sm:$0xff]
          %v4183 = vld [vmem:[#allocation2 + $0x4f0] sm:$0xff]
          %v4184 = vld [vmem:[#allocation2 + $0x4f8] sm:$0xff]
          %v4185 = vld [vmem:[#allocation2 + $0x500] sm:$0xff]
          %v4186 = vld [vmem:[#allocation2 + $0x508] sm:$0xff]
          %v4187 = vld [vmem:[#allocation2 + $0x510] sm:$0xff]
          %v4188 = vld [vmem:[#allocation2 + $0x518] sm:$0xff]
          %v4189 = vld [vmem:[#allocation2 + $0x520] sm:$0xff]
          %v4190 = vld [vmem:[#allocation2 + $0x528] sm:$0xff]
          %v4191 = vld [vmem:[#allocation2 + $0x530] sm:$0xff]
          %v4192 = vld [vmem:[#allocation2 + $0x538] sm:$0xff]
          %v4193 = vld [vmem:[#allocation2 + $0x540] sm:$0xff]
          %v4194 = vld [vmem:[#allocation2 + $0x548] sm:$0xff]
          %v4195 = vld [vmem:[#allocation2 + $0x550] sm:$0xff]
          %v4196 = vld [vmem:[#allocation2 + $0x558] sm:$0xff]
          %v4197 = vld [vmem:[#allocation2 + $0x560] sm:$0xff]
          %v4198 = vld [vmem:[#allocation2 + $0x568] sm:$0xff]
          %v4199 = vld [vmem:[#allocation2 + $0x570] sm:$0xff]
          %v4200 = vld [vmem:[#allocation2 + $0x578] sm:$0xff]
          %v4201 = vld [vmem:[#allocation2 + $0x580] sm:$0xff]
          %v4202 = vld [vmem:[#allocation2 + $0x588] sm:$0xff]
          %v4203 = vld [vmem:[#allocation2 + $0x590] sm:$0xff]
          %v4204 = vld [vmem:[#allocation2 + $0x598] sm:$0xff]
          %v4205 = vld [vmem:[#allocation2 + $0x5a0] sm:$0xff]
          %v4206 = vld [vmem:[#allocation2 + $0x5a8] sm:$0xff]
          %v4207 = vld [vmem:[#allocation2 + $0x5b0] sm:$0xff]
          %v4208 = vld [vmem:[#allocation2 + $0x5b8] sm:$0xff]
          %v4209 = vld [vmem:[#allocation2 + $0x5c0] sm:$0xff]
          %v4210 = vld [vmem:[#allocation2 + $0x5c8] sm:$0xff]
          %v4211 = vld [vmem:[#allocation2 + $0x5d0] sm:$0xff]
          %v4212 = vld [vmem:[#allocation2 + $0x5d8] sm:$0xff]
          %v4213 = vld [vmem:[#allocation2 + $0x5e0] sm:$0xff]
          %v4214 = vld [vmem:[#allocation2 + $0x5e8] sm:$0xff]
          %v4215 = vld [vmem:[#allocation2 + $0x5f0] sm:$0xff]
          %v4216 = vld [vmem:[#allocation2 + $0x5f8] sm:$0xff]
          %v4217 = vld [vmem:[#allocation2 + $0x600] sm:$0xff]
          %v4218 = vld [vmem:[#allocation2 + $0x608] sm:$0xff]
          %v4219 = vld [vmem:[#allocation2 + $0x610] sm:$0xff]
          %v4220 = vld [vmem:[#allocation2 + $0x618] sm:$0xff]
          %v4221 = vld [vmem:[#allocation2 + $0x620] sm:$0xff]
          %v4222 = vld [vmem:[#allocation2 + $0x628] sm:$0xff]
          %v4223 = vld [vmem:[#allocation2 + $0x630] sm:$0xff]
          %v4224 = vld [vmem:[#allocation2 + $0x638] sm:$0xff]
          %v4225 = vld [vmem:[#allocation2 + $0x640] sm:$0xff]
          %v4226 = vld [vmem:[#allocation2 + $0x648] sm:$0xff]
          %v4227 = vld [vmem:[#allocation2 + $0x650] sm:$0xff]
          %v4228 = vld [vmem:[#allocation2 + $0x658] sm:$0xff]
          %v4229 = vld [vmem:[#allocation2 + $0x660] sm:$0xff]
          %v4230 = vld [vmem:[#allocation2 + $0x668] sm:$0xff]
          %v4231 = vld [vmem:[#allocation2 + $0x670] sm:$0xff]
          %v4232 = vld [vmem:[#allocation2 + $0x678] sm:$0xff]
          %v4233 = vld [vmem:[#allocation2 + $0x680] sm:$0xff]
          %v4234 = vld [vmem:[#allocation2 + $0x688] sm:$0xff]
          %v4235 = vld [vmem:[#allocation2 + $0x690] sm:$0xff]
          %v4236 = vld [vmem:[#allocation2 + $0x698] sm:$0xff]
          %v4237 = vld [vmem:[#allocation2 + $0x6a0] sm:$0xff]
          %v4238 = vld [vmem:[#allocation2 + $0x6a8] sm:$0xff]
          %v4239 = vld [vmem:[#allocation2 + $0x6b0] sm:$0xff]
          %v4240 = vld [vmem:[#allocation2 + $0x6b8] sm:$0xff]
          %v4241 = vld [vmem:[#allocation2 + $0x6c0] sm:$0xff]
          %v4242 = vld [vmem:[#allocation2 + $0x6c8] sm:$0xff]
          %v4243 = vld [vmem:[#allocation2 + $0x6d0] sm:$0xff]
          %v4244 = vld [vmem:[#allocation2 + $0x6d8] sm:$0xff]
          %v4245 = vld [vmem:[#allocation2 + $0x6e0] sm:$0xff]
          %v4246 = vld [vmem:[#allocation2 + $0x6e8] sm:$0xff]
          %v4247 = vld [vmem:[#allocation2 + $0x6f0] sm:$0xff]
          %v4248 = vld [vmem:[#allocation2 + $0x6f8] sm:$0xff]
          %v4249 = vld [vmem:[#allocation2 + $0x700] sm:$0xff]
          %v4250 = vld [vmem:[#allocation2 + $0x708] sm:$0xff]
          %v4251 = vld [vmem:[#allocation2 + $0x710] sm:$0xff]
          %v4252 = vld [vmem:[#allocation2 + $0x718] sm:$0xff]
          %v4253 = vld [vmem:[#allocation2 + $0x720] sm:$0xff]
          %v4254 = vld [vmem:[#allocation2 + $0x728] sm:$0xff]
          %v4255 = vld [vmem:[#allocation2 + $0x730] sm:$0xff]
          %v4256 = vld [vmem:[#allocation2 + $0x738] sm:$0xff]
          %v4257 = vld [vmem:[#allocation2 + $0x740] sm:$0xff]
          %v4258 = vld [vmem:[#allocation2 + $0x748] sm:$0xff]
          %v4259 = vld [vmem:[#allocation2 + $0x750] sm:$0xff]
          %v4260 = vld [vmem:[#allocation2 + $0x758] sm:$0xff]
          %v4261 = vld [vmem:[#allocation2 + $0x760] sm:$0xff]
          %v4262 = vld [vmem:[#allocation2 + $0x768] sm:$0xff]
          %v4263 = vld [vmem:[#allocation2 + $0x770] sm:$0xff]
          %v4264 = vld [vmem:[#allocation2 + $0x778] sm:$0xff]
          %v4265 = vld [vmem:[#allocation2 + $0x780] sm:$0xff]
          %v4266 = vld [vmem:[#allocation2 + $0x788] sm:$0xff]
          %v4267 = vld [vmem:[#allocation2 + $0x790] sm:$0xff]
          %v4268 = vld [vmem:[#allocation2 + $0x798] sm:$0xff]
          %v4269 = vld [vmem:[#allocation2 + $0x7a0] sm:$0xff]
          %v4270 = vld [vmem:[#allocation2 + $0x7a8] sm:$0xff]
          %v4271 = vld [vmem:[#allocation2 + $0x7b0] sm:$0xff]
          %v4272 = vld [vmem:[#allocation2 + $0x7b8] sm:$0xff]
          %v4273 = vld [vmem:[#allocation2 + $0x7c0] sm:$0xff]
          %v4274 = vld [vmem:[#allocation2 + $0x7c8] sm:$0xff]
          %v4275 = vld [vmem:[#allocation2 + $0x7d0] sm:$0xff]
          %v4276 = vld [vmem:[#allocation2 + $0x7d8] sm:$0xff]
          %v4277 = vld [vmem:[#allocation2 + $0x7e0] sm:$0xff]
          %v4278 = vld [vmem:[#allocation2 + $0x7e8] sm:$0xff]
          %v4279 = vld [vmem:[#allocation2 + $0x7f0] sm:$0xff]
          %v4280 = vld [vmem:[#allocation2 + $0x7f8] sm:$0xff]
          %v4281 = vld [vmem:[#allocation7] sm:$0x1]
          %v4283 = vlaneseq
          %v4284 = vshrl.u32 %v4283, 7
          %v4285 = vsub.s32 0, %v4284
          %v4286 = vrot.slane %v4281, %v4285
          %v4288 = vadd.f32 %v4025, %v4286
          %v4289 = vadd.f32 %v4026, %v4286
          %v4290 = vadd.f32 %v4027, %v4286
          %v4291 = vadd.f32 %v4028, %v4286
          %v4292 = vadd.f32 %v4029, %v4286
          %v4293 = vadd.f32 %v4030, %v4286
          %v4294 = vadd.f32 %v4031, %v4286
          %v4295 = vadd.f32 %v4032, %v4286
          %v4296 = vadd.f32 %v4033, %v4286
          %v4297 = vadd.f32 %v4034, %v4286
          %v4298 = vadd.f32 %v4035, %v4286
          %v4299 = vadd.f32 %v4036, %v4286
          %v4300 = vadd.f32 %v4037, %v4286
          %v4301 = vadd.f32 %v4038, %v4286
          %v4302 = vadd.f32 %v4039, %v4286
          %v4303 = vadd.f32 %v4040, %v4286
          %v4304 = vadd.f32 %v4041, %v4286
          %v4305 = vadd.f32 %v4042, %v4286
          %v4306 = vadd.f32 %v4043, %v4286
          %v4307 = vadd.f32 %v4044, %v4286
          %v4308 = vadd.f32 %v4045, %v4286
          %v4309 = vadd.f32 %v4046, %v4286
          %v4310 = vadd.f32 %v4047, %v4286
          %v4311 = vadd.f32 %v4048, %v4286
          %v4312 = vadd.f32 %v4049, %v4286
          %v4313 = vadd.f32 %v4050, %v4286
          %v4314 = vadd.f32 %v4051, %v4286
          %v4315 = vadd.f32 %v4052, %v4286
          %v4316 = vadd.f32 %v4053, %v4286
          %v4317 = vadd.f32 %v4054, %v4286
          %v4318 = vadd.f32 %v4055, %v4286
          %v4319 = vadd.f32 %v4056, %v4286
          %v4320 = vadd.f32 %v4057, %v4286
          %v4321 = vadd.f32 %v4058, %v4286
          %v4322 = vadd.f32 %v4059, %v4286
          %v4323 = vadd.f32 %v4060, %v4286
          %v4324 = vadd.f32 %v4061, %v4286
          %v4325 = vadd.f32 %v4062, %v4286
          %v4326 = vadd.f32 %v4063, %v4286
          %v4327 = vadd.f32 %v4064, %v4286
          %v4328 = vadd.f32 %v4065, %v4286
          %v4329 = vadd.f32 %v4066, %v4286
          %v4330 = vadd.f32 %v4067, %v4286
          %v4331 = vadd.f32 %v4068, %v4286
          %v4332 = vadd.f32 %v4069, %v4286
          %v4333 = vadd.f32 %v4070, %v4286
          %v4334 = vadd.f32 %v4071, %v4286
          %v4335 = vadd.f32 %v4072, %v4286
          %v4336 = vadd.f32 %v4073, %v4286
          %v4337 = vadd.f32 %v4074, %v4286
          %v4338 = vadd.f32 %v4075, %v4286
          %v4339 = vadd.f32 %v4076, %v4286
          %v4340 = vadd.f32 %v4077, %v4286
          %v4341 = vadd.f32 %v4078, %v4286
          %v4342 = vadd.f32 %v4079, %v4286
          %v4343 = vadd.f32 %v4080, %v4286
          %v4344 = vadd.f32 %v4081, %v4286
          %v4345 = vadd.f32 %v4082, %v4286
          %v4346 = vadd.f32 %v4083, %v4286
          %v4347 = vadd.f32 %v4084, %v4286
          %v4348 = vadd.f32 %v4085, %v4286
          %v4349 = vadd.f32 %v4086, %v4286
          %v4350 = vadd.f32 %v4087, %v4286
          %v4351 = vadd.f32 %v4088, %v4286
          %v4352 = vadd.f32 %v4089, %v4286
          %v4353 = vadd.f32 %v4090, %v4286
          %v4354 = vadd.f32 %v4091, %v4286
          %v4355 = vadd.f32 %v4092, %v4286
          %v4356 = vadd.f32 %v4093, %v4286
          %v4357 = vadd.f32 %v4094, %v4286
          %v4358 = vadd.f32 %v4095, %v4286
          %v4359 = vadd.f32 %v4096, %v4286
          %v4360 = vadd.f32 %v4097, %v4286
          %v4361 = vadd.f32 %v4098, %v4286
          %v4362 = vadd.f32 %v4099, %v4286
          %v4363 = vadd.f32 %v4100, %v4286
          %v4364 = vadd.f32 %v4101, %v4286
          %v4365 = vadd.f32 %v4102, %v4286
          %v4366 = vadd.f32 %v4103, %v4286
          %v4367 = vadd.f32 %v4104, %v4286
          %v4368 = vadd.f32 %v4105, %v4286
          %v4369 = vadd.f32 %v4106, %v4286
          %v4370 = vadd.f32 %v4107, %v4286
          %v4371 = vadd.f32 %v4108, %v4286
          %v4372 = vadd.f32 %v4109, %v4286
          %v4373 = vadd.f32 %v4110, %v4286
          %v4374 = vadd.f32 %v4111, %v4286
          %v4375 = vadd.f32 %v4112, %v4286
          %v4376 = vadd.f32 %v4113, %v4286
          %v4377 = vadd.f32 %v4114, %v4286
          %v4378 = vadd.f32 %v4115, %v4286
          %v4379 = vadd.f32 %v4116, %v4286
          %v4380 = vadd.f32 %v4117, %v4286
          %v4381 = vadd.f32 %v4118, %v4286
          %v4382 = vadd.f32 %v4119, %v4286
          %v4383 = vadd.f32 %v4120, %v4286
          %v4384 = vadd.f32 %v4121, %v4286
          %v4385 = vadd.f32 %v4122, %v4286
          %v4386 = vadd.f32 %v4123, %v4286
          %v4387 = vadd.f32 %v4124, %v4286
          %v4388 = vadd.f32 %v4125, %v4286
          %v4389 = vadd.f32 %v4126, %v4286
          %v4390 = vadd.f32 %v4127, %v4286
          %v4391 = vadd.f32 %v4128, %v4286
          %v4392 = vadd.f32 %v4129, %v4286
          %v4393 = vadd.f32 %v4130, %v4286
          %v4394 = vadd.f32 %v4131, %v4286
          %v4395 = vadd.f32 %v4132, %v4286
          %v4396 = vadd.f32 %v4133, %v4286
          %v4397 = vadd.f32 %v4134, %v4286
          %v4398 = vadd.f32 %v4135, %v4286
          %v4399 = vadd.f32 %v4136, %v4286
          %v4400 = vadd.f32 %v4137, %v4286
          %v4401 = vadd.f32 %v4138, %v4286
          %v4402 = vadd.f32 %v4139, %v4286
          %v4403 = vadd.f32 %v4140, %v4286
          %v4404 = vadd.f32 %v4141, %v4286
          %v4405 = vadd.f32 %v4142, %v4286
          %v4406 = vadd.f32 %v4143, %v4286
          %v4407 = vadd.f32 %v4144, %v4286
          %v4408 = vadd.f32 %v4145, %v4286
          %v4409 = vadd.f32 %v4146, %v4286
          %v4410 = vadd.f32 %v4147, %v4286
          %v4411 = vadd.f32 %v4148, %v4286
          %v4412 = vadd.f32 %v4149, %v4286
          %v4413 = vadd.f32 %v4150, %v4286
          %v4414 = vadd.f32 %v4151, %v4286
          %v4415 = vadd.f32 %v4152, %v4286
          %v4416 = vadd.f32 %v4153, %v4286
          %v4417 = vadd.f32 %v4154, %v4286
          %v4418 = vadd.f32 %v4155, %v4286
          %v4419 = vadd.f32 %v4156, %v4286
          %v4420 = vadd.f32 %v4157, %v4286
          %v4421 = vadd.f32 %v4158, %v4286
          %v4422 = vadd.f32 %v4159, %v4286
          %v4423 = vadd.f32 %v4160, %v4286
          %v4424 = vadd.f32 %v4161, %v4286
          %v4425 = vadd.f32 %v4162, %v4286
          %v4426 = vadd.f32 %v4163, %v4286
          %v4427 = vadd.f32 %v4164, %v4286
          %v4428 = vadd.f32 %v4165, %v4286
          %v4429 = vadd.f32 %v4166, %v4286
          %v4430 = vadd.f32 %v4167, %v4286
          %v4431 = vadd.f32 %v4168, %v4286
          %v4432 = vadd.f32 %v4169, %v4286
          %v4433 = vadd.f32 %v4170, %v4286
          %v4434 = vadd.f32 %v4171, %v4286
          %v4435 = vadd.f32 %v4172, %v4286
          %v4436 = vadd.f32 %v4173, %v4286
          %v4437 = vadd.f32 %v4174, %v4286
          %v4438 = vadd.f32 %v4175, %v4286
          %v4439 = vadd.f32 %v4176, %v4286
          %v4440 = vadd.f32 %v4177, %v4286
          %v4441 = vadd.f32 %v4178, %v4286
          %v4442 = vadd.f32 %v4179, %v4286
          %v4443 = vadd.f32 %v4180, %v4286
          %v4444 = vadd.f32 %v4181, %v4286
          %v4445 = vadd.f32 %v4182, %v4286
          %v4446 = vadd.f32 %v4183, %v4286
          %v4447 = vadd.f32 %v4184, %v4286
          %v4448 = vadd.f32 %v4185, %v4286
          %v4449 = vadd.f32 %v4186, %v4286
          %v4450 = vadd.f32 %v4187, %v4286
          %v4451 = vadd.f32 %v4188, %v4286
          %v4452 = vadd.f32 %v4189, %v4286
          %v4453 = vadd.f32 %v4190, %v4286
          %v4454 = vadd.f32 %v4191, %v4286
          %v4455 = vadd.f32 %v4192, %v4286
          %v4456 = vadd.f32 %v4193, %v4286
          %v4457 = vadd.f32 %v4194, %v4286
          %v4458 = vadd.f32 %v4195, %v4286
          %v4459 = vadd.f32 %v4196, %v4286
          %v4460 = vadd.f32 %v4197, %v4286
          %v4461 = vadd.f32 %v4198, %v4286
          %v4462 = vadd.f32 %v4199, %v4286
          %v4463 = vadd.f32 %v4200, %v4286
          %v4464 = vadd.f32 %v4201, %v4286
          %v4465 = vadd.f32 %v4202, %v4286
          %v4466 = vadd.f32 %v4203, %v4286
          %v4467 = vadd.f32 %v4204, %v4286
          %v4468 = vadd.f32 %v4205, %v4286
          %v4469 = vadd.f32 %v4206, %v4286
          %v4470 = vadd.f32 %v4207, %v4286
          %v4471 = vadd.f32 %v4208, %v4286
          %v4472 = vadd.f32 %v4209, %v4286
          %v4473 = vadd.f32 %v4210, %v4286
          %v4474 = vadd.f32 %v4211, %v4286
          %v4475 = vadd.f32 %v4212, %v4286
          %v4476 = vadd.f32 %v4213, %v4286
          %v4477 = vadd.f32 %v4214, %v4286
          %v4478 = vadd.f32 %v4215, %v4286
          %v4479 = vadd.f32 %v4216, %v4286
          %v4480 = vadd.f32 %v4217, %v4286
          %v4481 = vadd.f32 %v4218, %v4286
          %v4482 = vadd.f32 %v4219, %v4286
          %v4483 = vadd.f32 %v4220, %v4286
          %v4484 = vadd.f32 %v4221, %v4286
          %v4485 = vadd.f32 %v4222, %v4286
          %v4486 = vadd.f32 %v4223, %v4286
          %v4487 = vadd.f32 %v4224, %v4286
          %v4488 = vadd.f32 %v4225, %v4286
          %v4489 = vadd.f32 %v4226, %v4286
          %v4490 = vadd.f32 %v4227, %v4286
          %v4491 = vadd.f32 %v4228, %v4286
          %v4492 = vadd.f32 %v4229, %v4286
          %v4493 = vadd.f32 %v4230, %v4286
          %v4494 = vadd.f32 %v4231, %v4286
          %v4495 = vadd.f32 %v4232, %v4286
          %v4496 = vadd.f32 %v4233, %v4286
          %v4497 = vadd.f32 %v4234, %v4286
          %v4498 = vadd.f32 %v4235, %v4286
          %v4499 = vadd.f32 %v4236, %v4286
          %v4500 = vadd.f32 %v4237, %v4286
          %v4501 = vadd.f32 %v4238, %v4286
          %v4502 = vadd.f32 %v4239, %v4286
          %v4503 = vadd.f32 %v4240, %v4286
          %v4504 = vadd.f32 %v4241, %v4286
          %v4505 = vadd.f32 %v4242, %v4286
          %v4506 = vadd.f32 %v4243, %v4286
          %v4507 = vadd.f32 %v4244, %v4286
          %v4508 = vadd.f32 %v4245, %v4286
          %v4509 = vadd.f32 %v4246, %v4286
          %v4510 = vadd.f32 %v4247, %v4286
          %v4511 = vadd.f32 %v4248, %v4286
          %v4512 = vadd.f32 %v4249, %v4286
          %v4513 = vadd.f32 %v4250, %v4286
          %v4514 = vadd.f32 %v4251, %v4286
          %v4515 = vadd.f32 %v4252, %v4286
          %v4516 = vadd.f32 %v4253, %v4286
          %v4517 = vadd.f32 %v4254, %v4286
          %v4518 = vadd.f32 %v4255, %v4286
          %v4519 = vadd.f32 %v4256, %v4286
          %v4520 = vadd.f32 %v4257, %v4286
          %v4521 = vadd.f32 %v4258, %v4286
          %v4522 = vadd.f32 %v4259, %v4286
          %v4523 = vadd.f32 %v4260, %v4286
          %v4524 = vadd.f32 %v4261, %v4286
          %v4525 = vadd.f32 %v4262, %v4286
          %v4526 = vadd.f32 %v4263, %v4286
          %v4527 = vadd.f32 %v4264, %v4286
          %v4528 = vadd.f32 %v4265, %v4286
          %v4529 = vadd.f32 %v4266, %v4286
          %v4530 = vadd.f32 %v4267, %v4286
          %v4531 = vadd.f32 %v4268, %v4286
          %v4532 = vadd.f32 %v4269, %v4286
          %v4533 = vadd.f32 %v4270, %v4286
          %v4534 = vadd.f32 %v4271, %v4286
          %v4535 = vadd.f32 %v4272, %v4286
          %v4536 = vadd.f32 %v4273, %v4286
          %v4537 = vadd.f32 %v4274, %v4286
          %v4538 = vadd.f32 %v4275, %v4286
          %v4539 = vadd.f32 %v4276, %v4286
          %v4540 = vadd.f32 %v4277, %v4286
          %v4541 = vadd.f32 %v4278, %v4286
          %v4542 = vadd.f32 %v4279, %v4286
          %v4543 = vadd.f32 %v4280, %v4286
          %v4544 = vmax.f32 %v4288, 0.0
          %v4545 = vmax.f32 %v4289, 0.0
          %v4546 = vmax.f32 %v4290, 0.0
          %v4547 = vmax.f32 %v4291, 0.0
          %v4548 = vmax.f32 %v4292, 0.0
          %v4549 = vmax.f32 %v4293, 0.0
          %v4550 = vmax.f32 %v4294, 0.0
          %v4551 = vmax.f32 %v4295, 0.0
          %v4552 = vmax.f32 %v4296, 0.0
          %v4553 = vmax.f32 %v4297, 0.0
          %v4554 = vmax.f32 %v4298, 0.0
          %v4555 = vmax.f32 %v4299, 0.0
          %v4556 = vmax.f32 %v4300, 0.0
          %v4557 = vmax.f32 %v4301, 0.0
          %v4558 = vmax.f32 %v4302, 0.0
          %v4559 = vmax.f32 %v4303, 0.0
          %v4560 = vmax.f32 %v4304, 0.0
          %v4561 = vmax.f32 %v4305, 0.0
          %v4562 = vmax.f32 %v4306, 0.0
          %v4563 = vmax.f32 %v4307, 0.0
          %v4564 = vmax.f32 %v4308, 0.0
          %v4565 = vmax.f32 %v4309, 0.0
          %v4566 = vmax.f32 %v4310, 0.0
          %v4567 = vmax.f32 %v4311, 0.0
          %v4568 = vmax.f32 %v4312, 0.0
          %v4569 = vmax.f32 %v4313, 0.0
          %v4570 = vmax.f32 %v4314, 0.0
          %v4571 = vmax.f32 %v4315, 0.0
          %v4572 = vmax.f32 %v4316, 0.0
          %v4573 = vmax.f32 %v4317, 0.0
          %v4574 = vmax.f32 %v4318, 0.0
          %v4575 = vmax.f32 %v4319, 0.0
          %v4576 = vmax.f32 %v4320, 0.0
          %v4577 = vmax.f32 %v4321, 0.0
          %v4578 = vmax.f32 %v4322, 0.0
          %v4579 = vmax.f32 %v4323, 0.0
          %v4580 = vmax.f32 %v4324, 0.0
          %v4581 = vmax.f32 %v4325, 0.0
          %v4582 = vmax.f32 %v4326, 0.0
          %v4583 = vmax.f32 %v4327, 0.0
          %v4584 = vmax.f32 %v4328, 0.0
          %v4585 = vmax.f32 %v4329, 0.0
          %v4586 = vmax.f32 %v4330, 0.0
          %v4587 = vmax.f32 %v4331, 0.0
          %v4588 = vmax.f32 %v4332, 0.0
          %v4589 = vmax.f32 %v4333, 0.0
          %v4590 = vmax.f32 %v4334, 0.0
          %v4591 = vmax.f32 %v4335, 0.0
          %v4592 = vmax.f32 %v4336, 0.0
          %v4593 = vmax.f32 %v4337, 0.0
          %v4594 = vmax.f32 %v4338, 0.0
          %v4595 = vmax.f32 %v4339, 0.0
          %v4596 = vmax.f32 %v4340, 0.0
          %v4597 = vmax.f32 %v4341, 0.0
          %v4598 = vmax.f32 %v4342, 0.0
          %v4599 = vmax.f32 %v4343, 0.0
          %v4600 = vmax.f32 %v4344, 0.0
          %v4601 = vmax.f32 %v4345, 0.0
          %v4602 = vmax.f32 %v4346, 0.0
          %v4603 = vmax.f32 %v4347, 0.0
          %v4604 = vmax.f32 %v4348, 0.0
          %v4605 = vmax.f32 %v4349, 0.0
          %v4606 = vmax.f32 %v4350, 0.0
          %v4607 = vmax.f32 %v4351, 0.0
          %v4608 = vmax.f32 %v4352, 0.0
          %v4609 = vmax.f32 %v4353, 0.0
          %v4610 = vmax.f32 %v4354, 0.0
          %v4611 = vmax.f32 %v4355, 0.0
          %v4612 = vmax.f32 %v4356, 0.0
          %v4613 = vmax.f32 %v4357, 0.0
          %v4614 = vmax.f32 %v4358, 0.0
          %v4615 = vmax.f32 %v4359, 0.0
          %v4616 = vmax.f32 %v4360, 0.0
          %v4617 = vmax.f32 %v4361, 0.0
          %v4618 = vmax.f32 %v4362, 0.0
          %v4619 = vmax.f32 %v4363, 0.0
          %v4620 = vmax.f32 %v4364, 0.0
          %v4621 = vmax.f32 %v4365, 0.0
          %v4622 = vmax.f32 %v4366, 0.0
          %v4623 = vmax.f32 %v4367, 0.0
          %v4624 = vmax.f32 %v4368, 0.0
          %v4625 = vmax.f32 %v4369, 0.0
          %v4626 = vmax.f32 %v4370, 0.0
          %v4627 = vmax.f32 %v4371, 0.0
          %v4628 = vmax.f32 %v4372, 0.0
          %v4629 = vmax.f32 %v4373, 0.0
          %v4630 = vmax.f32 %v4374, 0.0
          %v4631 = vmax.f32 %v4375, 0.0
          %v4632 = vmax.f32 %v4376, 0.0
          %v4633 = vmax.f32 %v4377, 0.0
          %v4634 = vmax.f32 %v4378, 0.0
          %v4635 = vmax.f32 %v4379, 0.0
          %v4636 = vmax.f32 %v4380, 0.0
          %v4637 = vmax.f32 %v4381, 0.0
          %v4638 = vmax.f32 %v4382, 0.0
          %v4639 = vmax.f32 %v4383, 0.0
          %v4640 = vmax.f32 %v4384, 0.0
          %v4641 = vmax.f32 %v4385, 0.0
          %v4642 = vmax.f32 %v4386, 0.0
          %v4643 = vmax.f32 %v4387, 0.0
          %v4644 = vmax.f32 %v4388, 0.0
          %v4645 = vmax.f32 %v4389, 0.0
          %v4646 = vmax.f32 %v4390, 0.0
          %v4647 = vmax.f32 %v4391, 0.0
          %v4648 = vmax.f32 %v4392, 0.0
          %v4649 = vmax.f32 %v4393, 0.0
          %v4650 = vmax.f32 %v4394, 0.0
          %v4651 = vmax.f32 %v4395, 0.0
          %v4652 = vmax.f32 %v4396, 0.0
          %v4653 = vmax.f32 %v4397, 0.0
          %v4654 = vmax.f32 %v4398, 0.0
          %v4655 = vmax.f32 %v4399, 0.0
          %v4656 = vmax.f32 %v4400, 0.0
          %v4657 = vmax.f32 %v4401, 0.0
          %v4658 = vmax.f32 %v4402, 0.0
          %v4659 = vmax.f32 %v4403, 0.0
          %v4660 = vmax.f32 %v4404, 0.0
          %v4661 = vmax.f32 %v4405, 0.0
          %v4662 = vmax.f32 %v4406, 0.0
          %v4663 = vmax.f32 %v4407, 0.0
          %v4664 = vmax.f32 %v4408, 0.0
          %v4665 = vmax.f32 %v4409, 0.0
          %v4666 = vmax.f32 %v4410, 0.0
          %v4667 = vmax.f32 %v4411, 0.0
          %v4668 = vmax.f32 %v4412, 0.0
          %v4669 = vmax.f32 %v4413, 0.0
          %v4670 = vmax.f32 %v4414, 0.0
          %v4671 = vmax.f32 %v4415, 0.0
          %v4672 = vmax.f32 %v4416, 0.0
          %v4673 = vmax.f32 %v4417, 0.0
          %v4674 = vmax.f32 %v4418, 0.0
          %v4675 = vmax.f32 %v4419, 0.0
          %v4676 = vmax.f32 %v4420, 0.0
          %v4677 = vmax.f32 %v4421, 0.0
          %v4678 = vmax.f32 %v4422, 0.0
          %v4679 = vmax.f32 %v4423, 0.0
          %v4680 = vmax.f32 %v4424, 0.0
          %v4681 = vmax.f32 %v4425, 0.0
          %v4682 = vmax.f32 %v4426, 0.0
          %v4683 = vmax.f32 %v4427, 0.0
          %v4684 = vmax.f32 %v4428, 0.0
          %v4685 = vmax.f32 %v4429, 0.0
          %v4686 = vmax.f32 %v4430, 0.0
          %v4687 = vmax.f32 %v4431, 0.0
          %v4688 = vmax.f32 %v4432, 0.0
          %v4689 = vmax.f32 %v4433, 0.0
          %v4690 = vmax.f32 %v4434, 0.0
          %v4691 = vmax.f32 %v4435, 0.0
          %v4692 = vmax.f32 %v4436, 0.0
          %v4693 = vmax.f32 %v4437, 0.0
          %v4694 = vmax.f32 %v4438, 0.0
          %v4695 = vmax.f32 %v4439, 0.0
          %v4696 = vmax.f32 %v4440, 0.0
          %v4697 = vmax.f32 %v4441, 0.0
          %v4698 = vmax.f32 %v4442, 0.0
          %v4699 = vmax.f32 %v4443, 0.0
          %v4700 = vmax.f32 %v4444, 0.0
          %v4701 = vmax.f32 %v4445, 0.0
          %v4702 = vmax.f32 %v4446, 0.0
          %v4703 = vmax.f32 %v4447, 0.0
          %v4704 = vmax.f32 %v4448, 0.0
          %v4705 = vmax.f32 %v4449, 0.0
          %v4706 = vmax.f32 %v4450, 0.0
          %v4707 = vmax.f32 %v4451, 0.0
          %v4708 = vmax.f32 %v4452, 0.0
          %v4709 = vmax.f32 %v4453, 0.0
          %v4710 = vmax.f32 %v4454, 0.0
          %v4711 = vmax.f32 %v4455, 0.0
          %v4712 = vmax.f32 %v4456, 0.0
          %v4713 = vmax.f32 %v4457, 0.0
          %v4714 = vmax.f32 %v4458, 0.0
          %v4715 = vmax.f32 %v4459, 0.0
          %v4716 = vmax.f32 %v4460, 0.0
          %v4717 = vmax.f32 %v4461, 0.0
          %v4718 = vmax.f32 %v4462, 0.0
          %v4719 = vmax.f32 %v4463, 0.0
          %v4720 = vmax.f32 %v4464, 0.0
          %v4721 = vmax.f32 %v4465, 0.0
          %v4722 = vmax.f32 %v4466, 0.0
          %v4723 = vmax.f32 %v4467, 0.0
          %v4724 = vmax.f32 %v4468, 0.0
          %v4725 = vmax.f32 %v4469, 0.0
          %v4726 = vmax.f32 %v4470, 0.0
          %v4727 = vmax.f32 %v4471, 0.0
          %v4728 = vmax.f32 %v4472, 0.0
          %v4729 = vmax.f32 %v4473, 0.0
          %v4730 = vmax.f32 %v4474, 0.0
          %v4731 = vmax.f32 %v4475, 0.0
          %v4732 = vmax.f32 %v4476, 0.0
          %v4733 = vmax.f32 %v4477, 0.0
          %v4734 = vmax.f32 %v4478, 0.0
          %v4735 = vmax.f32 %v4479, 0.0
          %v4736 = vmax.f32 %v4480, 0.0
          %v4737 = vmax.f32 %v4481, 0.0
          %v4738 = vmax.f32 %v4482, 0.0
          %v4739 = vmax.f32 %v4483, 0.0
          %v4740 = vmax.f32 %v4484, 0.0
          %v4741 = vmax.f32 %v4485, 0.0
          %v4742 = vmax.f32 %v4486, 0.0
          %v4743 = vmax.f32 %v4487, 0.0
          %v4744 = vmax.f32 %v4488, 0.0
          %v4745 = vmax.f32 %v4489, 0.0
          %v4746 = vmax.f32 %v4490, 0.0
          %v4747 = vmax.f32 %v4491, 0.0
          %v4748 = vmax.f32 %v4492, 0.0
          %v4749 = vmax.f32 %v4493, 0.0
          %v4750 = vmax.f32 %v4494, 0.0
          %v4751 = vmax.f32 %v4495, 0.0
          %v4752 = vmax.f32 %v4496, 0.0
          %v4753 = vmax.f32 %v4497, 0.0
          %v4754 = vmax.f32 %v4498, 0.0
          %v4755 = vmax.f32 %v4499, 0.0
          %v4756 = vmax.f32 %v4500, 0.0
          %v4757 = vmax.f32 %v4501, 0.0
          %v4758 = vmax.f32 %v4502, 0.0
          %v4759 = vmax.f32 %v4503, 0.0
          %v4760 = vmax.f32 %v4504, 0.0
          %v4761 = vmax.f32 %v4505, 0.0
          %v4762 = vmax.f32 %v4506, 0.0
          %v4763 = vmax.f32 %v4507, 0.0
          %v4764 = vmax.f32 %v4508, 0.0
          %v4765 = vmax.f32 %v4509, 0.0
          %v4766 = vmax.f32 %v4510, 0.0
          %v4767 = vmax.f32 %v4511, 0.0
          %v4768 = vmax.f32 %v4512, 0.0
          %v4769 = vmax.f32 %v4513, 0.0
          %v4770 = vmax.f32 %v4514, 0.0
          %v4771 = vmax.f32 %v4515, 0.0
          %v4772 = vmax.f32 %v4516, 0.0
          %v4773 = vmax.f32 %v4517, 0.0
          %v4774 = vmax.f32 %v4518, 0.0
          %v4775 = vmax.f32 %v4519, 0.0
          %v4776 = vmax.f32 %v4520, 0.0
          %v4777 = vmax.f32 %v4521, 0.0
          %v4778 = vmax.f32 %v4522, 0.0
          %v4779 = vmax.f32 %v4523, 0.0
          %v4780 = vmax.f32 %v4524, 0.0
          %v4781 = vmax.f32 %v4525, 0.0
          %v4782 = vmax.f32 %v4526, 0.0
          %v4783 = vmax.f32 %v4527, 0.0
          %v4784 = vmax.f32 %v4528, 0.0
          %v4785 = vmax.f32 %v4529, 0.0
          %v4786 = vmax.f32 %v4530, 0.0
          %v4787 = vmax.f32 %v4531, 0.0
          %v4788 = vmax.f32 %v4532, 0.0
          %v4789 = vmax.f32 %v4533, 0.0
          %v4790 = vmax.f32 %v4534, 0.0
          %v4791 = vmax.f32 %v4535, 0.0
          %v4792 = vmax.f32 %v4536, 0.0
          %v4793 = vmax.f32 %v4537, 0.0
          %v4794 = vmax.f32 %v4538, 0.0
          %v4795 = vmax.f32 %v4539, 0.0
          %v4796 = vmax.f32 %v4540, 0.0
          %v4797 = vmax.f32 %v4541, 0.0
          %v4798 = vmax.f32 %v4542, 0.0
          %v4799 = vmax.f32 %v4543, 0.0
          %v4800 = vpack.c.bf16 %v4545, %v4544
          %v4801 = vpack.c.bf16 %v4547, %v4546
          %v4802 = vpack.c.bf16 %v4549, %v4548
          %v4803 = vpack.c.bf16 %v4551, %v4550
          %v4804 = vpack.c.bf16 %v4553, %v4552
          %v4805 = vpack.c.bf16 %v4555, %v4554
          %v4806 = vpack.c.bf16 %v4557, %v4556
          %v4807 = vpack.c.bf16 %v4559, %v4558
          %v4808 = vpack.c.bf16 %v4561, %v4560
          %v4809 = vpack.c.bf16 %v4563, %v4562
          %v4810 = vpack.c.bf16 %v4565, %v4564
          %v4811 = vpack.c.bf16 %v4567, %v4566
          %v4812 = vpack.c.bf16 %v4569, %v4568
          %v4813 = vpack.c.bf16 %v4571, %v4570
          %v4814 = vpack.c.bf16 %v4573, %v4572
          %v4815 = vpack.c.bf16 %v4575, %v4574
          %v4816 = vpack.c.bf16 %v4577, %v4576
          %v4817 = vpack.c.bf16 %v4579, %v4578
          %v4818 = vpack.c.bf16 %v4581, %v4580
          %v4819 = vpack.c.bf16 %v4583, %v4582
          %v4820 = vpack.c.bf16 %v4585, %v4584
          %v4821 = vpack.c.bf16 %v4587, %v4586
          %v4822 = vpack.c.bf16 %v4589, %v4588
          %v4823 = vpack.c.bf16 %v4591, %v4590
          %v4824 = vpack.c.bf16 %v4593, %v4592
          %v4825 = vpack.c.bf16 %v4595, %v4594
          %v4826 = vpack.c.bf16 %v4597, %v4596
          %v4827 = vpack.c.bf16 %v4599, %v4598
          %v4828 = vpack.c.bf16 %v4601, %v4600
          %v4829 = vpack.c.bf16 %v4603, %v4602
          %v4830 = vpack.c.bf16 %v4605, %v4604
          %v4831 = vpack.c.bf16 %v4607, %v4606
          %v4832 = vpack.c.bf16 %v4609, %v4608
          %v4833 = vpack.c.bf16 %v4611, %v4610
          %v4834 = vpack.c.bf16 %v4613, %v4612
          %v4835 = vpack.c.bf16 %v4615, %v4614
          %v4836 = vpack.c.bf16 %v4617, %v4616
          %v4837 = vpack.c.bf16 %v4619, %v4618
          %v4838 = vpack.c.bf16 %v4621, %v4620
          %v4839 = vpack.c.bf16 %v4623, %v4622
          %v4840 = vpack.c.bf16 %v4625, %v4624
          %v4841 = vpack.c.bf16 %v4627, %v4626
          %v4842 = vpack.c.bf16 %v4629, %v4628
          %v4843 = vpack.c.bf16 %v4631, %v4630
          %v4844 = vpack.c.bf16 %v4633, %v4632
          %v4845 = vpack.c.bf16 %v4635, %v4634
          %v4846 = vpack.c.bf16 %v4637, %v4636
          %v4847 = vpack.c.bf16 %v4639, %v4638
          %v4848 = vpack.c.bf16 %v4641, %v4640
          %v4849 = vpack.c.bf16 %v4643, %v4642
          %v4850 = vpack.c.bf16 %v4645, %v4644
          %v4851 = vpack.c.bf16 %v4647, %v4646
          %v4852 = vpack.c.bf16 %v4649, %v4648
          %v4853 = vpack.c.bf16 %v4651, %v4650
          %v4854 = vpack.c.bf16 %v4653, %v4652
          %v4855 = vpack.c.bf16 %v4655, %v4654
          %v4856 = vpack.c.bf16 %v4657, %v4656
          %v4857 = vpack.c.bf16 %v4659, %v4658
          %v4858 = vpack.c.bf16 %v4661, %v4660
          %v4859 = vpack.c.bf16 %v4663, %v4662
          %v4860 = vpack.c.bf16 %v4665, %v4664
          %v4861 = vpack.c.bf16 %v4667, %v4666
          %v4862 = vpack.c.bf16 %v4669, %v4668
          %v4863 = vpack.c.bf16 %v4671, %v4670
          %v4864 = vpack.c.bf16 %v4673, %v4672
          %v4865 = vpack.c.bf16 %v4675, %v4674
          %v4866 = vpack.c.bf16 %v4677, %v4676
          %v4867 = vpack.c.bf16 %v4679, %v4678
          %v4868 = vpack.c.bf16 %v4681, %v4680
          %v4869 = vpack.c.bf16 %v4683, %v4682
          %v4870 = vpack.c.bf16 %v4685, %v4684
          %v4871 = vpack.c.bf16 %v4687, %v4686
          %v4872 = vpack.c.bf16 %v4689, %v4688
          %v4873 = vpack.c.bf16 %v4691, %v4690
          %v4874 = vpack.c.bf16 %v4693, %v4692
          %v4875 = vpack.c.bf16 %v4695, %v4694
          %v4876 = vpack.c.bf16 %v4697, %v4696
          %v4877 = vpack.c.bf16 %v4699, %v4698
          %v4878 = vpack.c.bf16 %v4701, %v4700
          %v4879 = vpack.c.bf16 %v4703, %v4702
          %v4880 = vpack.c.bf16 %v4705, %v4704
          %v4881 = vpack.c.bf16 %v4707, %v4706
          %v4882 = vpack.c.bf16 %v4709, %v4708
          %v4883 = vpack.c.bf16 %v4711, %v4710
          %v4884 = vpack.c.bf16 %v4713, %v4712
          %v4885 = vpack.c.bf16 %v4715, %v4714
          %v4886 = vpack.c.bf16 %v4717, %v4716
          %v4887 = vpack.c.bf16 %v4719, %v4718
          %v4888 = vpack.c.bf16 %v4721, %v4720
          %v4889 = vpack.c.bf16 %v4723, %v4722
          %v4890 = vpack.c.bf16 %v4725, %v4724
          %v4891 = vpack.c.bf16 %v4727, %v4726
          %v4892 = vpack.c.bf16 %v4729, %v4728
          %v4893 = vpack.c.bf16 %v4731, %v4730
          %v4894 = vpack.c.bf16 %v4733, %v4732
          %v4895 = vpack.c.bf16 %v4735, %v4734
          %v4896 = vpack.c.bf16 %v4737, %v4736
          %v4897 = vpack.c.bf16 %v4739, %v4738
          %v4898 = vpack.c.bf16 %v4741, %v4740
          %v4899 = vpack.c.bf16 %v4743, %v4742
          %v4900 = vpack.c.bf16 %v4745, %v4744
          %v4901 = vpack.c.bf16 %v4747, %v4746
          %v4902 = vpack.c.bf16 %v4749, %v4748
          %v4903 = vpack.c.bf16 %v4751, %v4750
          %v4904 = vpack.c.bf16 %v4753, %v4752
          %v4905 = vpack.c.bf16 %v4755, %v4754
          %v4906 = vpack.c.bf16 %v4757, %v4756
          %v4907 = vpack.c.bf16 %v4759, %v4758
          %v4908 = vpack.c.bf16 %v4761, %v4760
          %v4909 = vpack.c.bf16 %v4763, %v4762
          %v4910 = vpack.c.bf16 %v4765, %v4764
          %v4911 = vpack.c.bf16 %v4767, %v4766
          %v4912 = vpack.c.bf16 %v4769, %v4768
          %v4913 = vpack.c.bf16 %v4771, %v4770
          %v4914 = vpack.c.bf16 %v4773, %v4772
          %v4915 = vpack.c.bf16 %v4775, %v4774
          %v4916 = vpack.c.bf16 %v4777, %v4776
          %v4917 = vpack.c.bf16 %v4779, %v4778
          %v4918 = vpack.c.bf16 %v4781, %v4780
          %v4919 = vpack.c.bf16 %v4783, %v4782
          %v4920 = vpack.c.bf16 %v4785, %v4784
          %v4921 = vpack.c.bf16 %v4787, %v4786
          %v4922 = vpack.c.bf16 %v4789, %v4788
          %v4923 = vpack.c.bf16 %v4791, %v4790
          %v4924 = vpack.c.bf16 %v4793, %v4792
          %v4925 = vpack.c.bf16 %v4795, %v4794
          %v4926 = vpack.c.bf16 %v4797, %v4796
          %v4927 = vpack.c.bf16 %v4799, %v4798
          %v5056 = vunpack.c.l.b16 %v4800
          %v5057 = vunpack.c.h.b16 %v4800
          %v5058 = vunpack.c.l.b16 %v4801
          %v5059 = vunpack.c.h.b16 %v4801
          %v5060 = vunpack.c.l.b16 %v4802
          %v5061 = vunpack.c.h.b16 %v4802
          %v5062 = vunpack.c.l.b16 %v4803
          %v5063 = vunpack.c.h.b16 %v4803
          %v5064 = vunpack.c.l.b16 %v4804
          %v5065 = vunpack.c.h.b16 %v4804
          %v5066 = vunpack.c.l.b16 %v4805
          %v5067 = vunpack.c.h.b16 %v4805
          %v5068 = vunpack.c.l.b16 %v4806
          %v5069 = vunpack.c.h.b16 %v4806
          %v5070 = vunpack.c.l.b16 %v4807
          %v5071 = vunpack.c.h.b16 %v4807
          %v5072 = vunpack.c.l.b16 %v4808
          %v5073 = vunpack.c.h.b16 %v4808
          %v5074 = vunpack.c.l.b16 %v4809
          %v5075 = vunpack.c.h.b16 %v4809
          %v5076 = vunpack.c.l.b16 %v4810
          %v5077 = vunpack.c.h.b16 %v4810
          %v5078 = vunpack.c.l.b16 %v4811
          %v5079 = vunpack.c.h.b16 %v4811
          %v5080 = vunpack.c.l.b16 %v4812
          %v5081 = vunpack.c.h.b16 %v4812
          %v5082 = vunpack.c.l.b16 %v4813
          %v5083 = vunpack.c.h.b16 %v4813
          %v5084 = vunpack.c.l.b16 %v4814
          %v5085 = vunpack.c.h.b16 %v4814
          %v5086 = vunpack.c.l.b16 %v4815
          %v5087 = vunpack.c.h.b16 %v4815
          %v5088 = vunpack.c.l.b16 %v4816
          %v5089 = vunpack.c.h.b16 %v4816
          %v5090 = vunpack.c.l.b16 %v4817
          %v5091 = vunpack.c.h.b16 %v4817
          %v5092 = vunpack.c.l.b16 %v4818
          %v5093 = vunpack.c.h.b16 %v4818
          %v5094 = vunpack.c.l.b16 %v4819
          %v5095 = vunpack.c.h.b16 %v4819
          %v5096 = vunpack.c.l.b16 %v4820
          %v5097 = vunpack.c.h.b16 %v4820
          %v5098 = vunpack.c.l.b16 %v4821
          %v5099 = vunpack.c.h.b16 %v4821
          %v5100 = vunpack.c.l.b16 %v4822
          %v5101 = vunpack.c.h.b16 %v4822
          %v5102 = vunpack.c.l.b16 %v4823
          %v5103 = vunpack.c.h.b16 %v4823
          %v5104 = vunpack.c.l.b16 %v4824
          %v5105 = vunpack.c.h.b16 %v4824
          %v5106 = vunpack.c.l.b16 %v4825
          %v5107 = vunpack.c.h.b16 %v4825
          %v5108 = vunpack.c.l.b16 %v4826
          %v5109 = vunpack.c.h.b16 %v4826
          %v5110 = vunpack.c.l.b16 %v4827
          %v5111 = vunpack.c.h.b16 %v4827
          %v5112 = vunpack.c.l.b16 %v4828
          %v5113 = vunpack.c.h.b16 %v4828
          %v5114 = vunpack.c.l.b16 %v4829
          %v5115 = vunpack.c.h.b16 %v4829
          %v5116 = vunpack.c.l.b16 %v4830
          %v5117 = vunpack.c.h.b16 %v4830
          %v5118 = vunpack.c.l.b16 %v4831
          %v5119 = vunpack.c.h.b16 %v4831
          %v5120 = vunpack.c.l.b16 %v4832
          %v5121 = vunpack.c.h.b16 %v4832
          %v5122 = vunpack.c.l.b16 %v4833
          %v5123 = vunpack.c.h.b16 %v4833
          %v5124 = vunpack.c.l.b16 %v4834
          %v5125 = vunpack.c.h.b16 %v4834
          %v5126 = vunpack.c.l.b16 %v4835
          %v5127 = vunpack.c.h.b16 %v4835
          %v5128 = vunpack.c.l.b16 %v4836
          %v5129 = vunpack.c.h.b16 %v4836
          %v5130 = vunpack.c.l.b16 %v4837
          %v5131 = vunpack.c.h.b16 %v4837
          %v5132 = vunpack.c.l.b16 %v4838
          %v5133 = vunpack.c.h.b16 %v4838
          %v5134 = vunpack.c.l.b16 %v4839
          %v5135 = vunpack.c.h.b16 %v4839
          %v5136 = vunpack.c.l.b16 %v4840
          %v5137 = vunpack.c.h.b16 %v4840
          %v5138 = vunpack.c.l.b16 %v4841
          %v5139 = vunpack.c.h.b16 %v4841
          %v5140 = vunpack.c.l.b16 %v4842
          %v5141 = vunpack.c.h.b16 %v4842
          %v5142 = vunpack.c.l.b16 %v4843
          %v5143 = vunpack.c.h.b16 %v4843
          %v5144 = vunpack.c.l.b16 %v4844
          %v5145 = vunpack.c.h.b16 %v4844
          %v5146 = vunpack.c.l.b16 %v4845
          %v5147 = vunpack.c.h.b16 %v4845
          %v5148 = vunpack.c.l.b16 %v4846
          %v5149 = vunpack.c.h.b16 %v4846
          %v5150 = vunpack.c.l.b16 %v4847
          %v5151 = vunpack.c.h.b16 %v4847
          %v5152 = vunpack.c.l.b16 %v4848
          %v5153 = vunpack.c.h.b16 %v4848
          %v5154 = vunpack.c.l.b16 %v4849
          %v5155 = vunpack.c.h.b16 %v4849
          %v5156 = vunpack.c.l.b16 %v4850
          %v5157 = vunpack.c.h.b16 %v4850
          %v5158 = vunpack.c.l.b16 %v4851
          %v5159 = vunpack.c.h.b16 %v4851
          %v5160 = vunpack.c.l.b16 %v4852
          %v5161 = vunpack.c.h.b16 %v4852
          %v5162 = vunpack.c.l.b16 %v4853
          %v5163 = vunpack.c.h.b16 %v4853
          %v5164 = vunpack.c.l.b16 %v4854
          %v5165 = vunpack.c.h.b16 %v4854
          %v5166 = vunpack.c.l.b16 %v4855
          %v5167 = vunpack.c.h.b16 %v4855
          %v5168 = vunpack.c.l.b16 %v4856
          %v5169 = vunpack.c.h.b16 %v4856
          %v5170 = vunpack.c.l.b16 %v4857
          %v5171 = vunpack.c.h.b16 %v4857
          %v5172 = vunpack.c.l.b16 %v4858
          %v5173 = vunpack.c.h.b16 %v4858
          %v5174 = vunpack.c.l.b16 %v4859
          %v5175 = vunpack.c.h.b16 %v4859
          %v5176 = vunpack.c.l.b16 %v4860
          %v5177 = vunpack.c.h.b16 %v4860
          %v5178 = vunpack.c.l.b16 %v4861
          %v5179 = vunpack.c.h.b16 %v4861
          %v5180 = vunpack.c.l.b16 %v4862
          %v5181 = vunpack.c.h.b16 %v4862
          %v5182 = vunpack.c.l.b16 %v4863
          %v5183 = vunpack.c.h.b16 %v4863
          %v5184 = vunpack.c.l.b16 %v4864
          %v5185 = vunpack.c.h.b16 %v4864
          %v5186 = vunpack.c.l.b16 %v4865
          %v5187 = vunpack.c.h.b16 %v4865
          %v5188 = vunpack.c.l.b16 %v4866
          %v5189 = vunpack.c.h.b16 %v4866
          %v5190 = vunpack.c.l.b16 %v4867
          %v5191 = vunpack.c.h.b16 %v4867
          %v5192 = vunpack.c.l.b16 %v4868
          %v5193 = vunpack.c.h.b16 %v4868
          %v5194 = vunpack.c.l.b16 %v4869
          %v5195 = vunpack.c.h.b16 %v4869
          %v5196 = vunpack.c.l.b16 %v4870
          %v5197 = vunpack.c.h.b16 %v4870
          %v5198 = vunpack.c.l.b16 %v4871
          %v5199 = vunpack.c.h.b16 %v4871
          %v5200 = vunpack.c.l.b16 %v4872
          %v5201 = vunpack.c.h.b16 %v4872
          %v5202 = vunpack.c.l.b16 %v4873
          %v5203 = vunpack.c.h.b16 %v4873
          %v5204 = vunpack.c.l.b16 %v4874
          %v5205 = vunpack.c.h.b16 %v4874
          %v5206 = vunpack.c.l.b16 %v4875
          %v5207 = vunpack.c.h.b16 %v4875
          %v5208 = vunpack.c.l.b16 %v4876
          %v5209 = vunpack.c.h.b16 %v4876
          %v5210 = vunpack.c.l.b16 %v4877
          %v5211 = vunpack.c.h.b16 %v4877
          %v5212 = vunpack.c.l.b16 %v4878
          %v5213 = vunpack.c.h.b16 %v4878
          %v5214 = vunpack.c.l.b16 %v4879
          %v5215 = vunpack.c.h.b16 %v4879
          %v5216 = vunpack.c.l.b16 %v4880
          %v5217 = vunpack.c.h.b16 %v4880
          %v5218 = vunpack.c.l.b16 %v4881
          %v5219 = vunpack.c.h.b16 %v4881
          %v5220 = vunpack.c.l.b16 %v4882
          %v5221 = vunpack.c.h.b16 %v4882
          %v5222 = vunpack.c.l.b16 %v4883
          %v5223 = vunpack.c.h.b16 %v4883
          %v5224 = vunpack.c.l.b16 %v4884
          %v5225 = vunpack.c.h.b16 %v4884
          %v5226 = vunpack.c.l.b16 %v4885
          %v5227 = vunpack.c.h.b16 %v4885
          %v5228 = vunpack.c.l.b16 %v4886
          %v5229 = vunpack.c.h.b16 %v4886
          %v5230 = vunpack.c.l.b16 %v4887
          %v5231 = vunpack.c.h.b16 %v4887
          %v5232 = vunpack.c.l.b16 %v4888
          %v5233 = vunpack.c.h.b16 %v4888
          %v5234 = vunpack.c.l.b16 %v4889
          %v5235 = vunpack.c.h.b16 %v4889
          %v5236 = vunpack.c.l.b16 %v4890
          %v5237 = vunpack.c.h.b16 %v4890
          %v5238 = vunpack.c.l.b16 %v4891
          %v5239 = vunpack.c.h.b16 %v4891
          %v5240 = vunpack.c.l.b16 %v4892
          %v5241 = vunpack.c.h.b16 %v4892
          %v5242 = vunpack.c.l.b16 %v4893
          %v5243 = vunpack.c.h.b16 %v4893
          %v5244 = vunpack.c.l.b16 %v4894
          %v5245 = vunpack.c.h.b16 %v4894
          %v5246 = vunpack.c.l.b16 %v4895
          %v5247 = vunpack.c.h.b16 %v4895
          %v5248 = vunpack.c.l.b16 %v4896
          %v5249 = vunpack.c.h.b16 %v4896
          %v5250 = vunpack.c.l.b16 %v4897
          %v5251 = vunpack.c.h.b16 %v4897
          %v5252 = vunpack.c.l.b16 %v4898
          %v5253 = vunpack.c.h.b16 %v4898
          %v5254 = vunpack.c.l.b16 %v4899
          %v5255 = vunpack.c.h.b16 %v4899
          %v5256 = vunpack.c.l.b16 %v4900
          %v5257 = vunpack.c.h.b16 %v4900
          %v5258 = vunpack.c.l.b16 %v4901
          %v5259 = vunpack.c.h.b16 %v4901
          %v5260 = vunpack.c.l.b16 %v4902
          %v5261 = vunpack.c.h.b16 %v4902
          %v5262 = vunpack.c.l.b16 %v4903
          %v5263 = vunpack.c.h.b16 %v4903
          %v5264 = vunpack.c.l.b16 %v4904
          %v5265 = vunpack.c.h.b16 %v4904
          %v5266 = vunpack.c.l.b16 %v4905
          %v5267 = vunpack.c.h.b16 %v4905
          %v5268 = vunpack.c.l.b16 %v4906
          %v5269 = vunpack.c.h.b16 %v4906
          %v5270 = vunpack.c.l.b16 %v4907
          %v5271 = vunpack.c.h.b16 %v4907
          %v5272 = vunpack.c.l.b16 %v4908
          %v5273 = vunpack.c.h.b16 %v4908
          %v5274 = vunpack.c.l.b16 %v4909
          %v5275 = vunpack.c.h.b16 %v4909
          %v5276 = vunpack.c.l.b16 %v4910
          %v5277 = vunpack.c.h.b16 %v4910
          %v5278 = vunpack.c.l.b16 %v4911
          %v5279 = vunpack.c.h.b16 %v4911
          %v5280 = vunpack.c.l.b16 %v4912
          %v5281 = vunpack.c.h.b16 %v4912
          %v5282 = vunpack.c.l.b16 %v4913
          %v5283 = vunpack.c.h.b16 %v4913
          %v5284 = vunpack.c.l.b16 %v4914
          %v5285 = vunpack.c.h.b16 %v4914
          %v5286 = vunpack.c.l.b16 %v4915
          %v5287 = vunpack.c.h.b16 %v4915
          %v5288 = vunpack.c.l.b16 %v4916
          %v5289 = vunpack.c.h.b16 %v4916
          %v5290 = vunpack.c.l.b16 %v4917
          %v5291 = vunpack.c.h.b16 %v4917
          %v5292 = vunpack.c.l.b16 %v4918
          %v5293 = vunpack.c.h.b16 %v4918
          %v5294 = vunpack.c.l.b16 %v4919
          %v5295 = vunpack.c.h.b16 %v4919
          %v5296 = vunpack.c.l.b16 %v4920
          %v5297 = vunpack.c.h.b16 %v4920
          %v5298 = vunpack.c.l.b16 %v4921
          %v5299 = vunpack.c.h.b16 %v4921
          %v5300 = vunpack.c.l.b16 %v4922
          %v5301 = vunpack.c.h.b16 %v4922
          %v5302 = vunpack.c.l.b16 %v4923
          %v5303 = vunpack.c.h.b16 %v4923
          %v5304 = vunpack.c.l.b16 %v4924
          %v5305 = vunpack.c.h.b16 %v4924
          %v5306 = vunpack.c.l.b16 %v4925
          %v5307 = vunpack.c.h.b16 %v4925
          %v5308 = vunpack.c.l.b16 %v4926
          %v5309 = vunpack.c.h.b16 %v4926
          %v5310 = vunpack.c.l.b16 %v4927
          %v5311 = vunpack.c.h.b16 %v4927
          %v5312 = vpack.c.b16 %v5056, %v5056
          %v5313 = vpack.c.b16 %v5057, %v5057
          %v5314 = vpack.c.b16 %v5058, %v5058
          %v5315 = vpack.c.b16 %v5059, %v5059
          %v5316 = vpack.c.b16 %v5060, %v5060
          %v5317 = vpack.c.b16 %v5061, %v5061
          %v5318 = vpack.c.b16 %v5062, %v5062
          %v5319 = vpack.c.b16 %v5063, %v5063
          %v5320 = vpack.c.b16 %v5064, %v5064
          %v5321 = vpack.c.b16 %v5065, %v5065
          %v5322 = vpack.c.b16 %v5066, %v5066
          %v5323 = vpack.c.b16 %v5067, %v5067
          %v5324 = vpack.c.b16 %v5068, %v5068
          %v5325 = vpack.c.b16 %v5069, %v5069
          %v5326 = vpack.c.b16 %v5070, %v5070
          %v5327 = vpack.c.b16 %v5071, %v5071
          %v5328 = vpack.c.b16 %v5072, %v5072
          %v5329 = vpack.c.b16 %v5073, %v5073
          %v5330 = vpack.c.b16 %v5074, %v5074
          %v5331 = vpack.c.b16 %v5075, %v5075
          %v5332 = vpack.c.b16 %v5076, %v5076
          %v5333 = vpack.c.b16 %v5077, %v5077
          %v5334 = vpack.c.b16 %v5078, %v5078
          %v5335 = vpack.c.b16 %v5079, %v5079
          %v5336 = vpack.c.b16 %v5080, %v5080
          %v5337 = vpack.c.b16 %v5081, %v5081
          %v5338 = vpack.c.b16 %v5082, %v5082
          %v5339 = vpack.c.b16 %v5083, %v5083
          %v5340 = vpack.c.b16 %v5084, %v5084
          %v5341 = vpack.c.b16 %v5085, %v5085
          %v5342 = vpack.c.b16 %v5086, %v5086
          %v5343 = vpack.c.b16 %v5087, %v5087
          %v5344 = vpack.c.b16 %v5088, %v5088
          %v5345 = vpack.c.b16 %v5089, %v5089
          %v5346 = vpack.c.b16 %v5090, %v5090
          %v5347 = vpack.c.b16 %v5091, %v5091
          %v5348 = vpack.c.b16 %v5092, %v5092
          %v5349 = vpack.c.b16 %v5093, %v5093
          %v5350 = vpack.c.b16 %v5094, %v5094
          %v5351 = vpack.c.b16 %v5095, %v5095
          %v5352 = vpack.c.b16 %v5096, %v5096
          %v5353 = vpack.c.b16 %v5097, %v5097
          %v5354 = vpack.c.b16 %v5098, %v5098
          %v5355 = vpack.c.b16 %v5099, %v5099
          %v5356 = vpack.c.b16 %v5100, %v5100
          %v5357 = vpack.c.b16 %v5101, %v5101
          %v5358 = vpack.c.b16 %v5102, %v5102
          %v5359 = vpack.c.b16 %v5103, %v5103
          %v5360 = vpack.c.b16 %v5104, %v5104
          %v5361 = vpack.c.b16 %v5105, %v5105
          %v5362 = vpack.c.b16 %v5106, %v5106
          %v5363 = vpack.c.b16 %v5107, %v5107
          %v5364 = vpack.c.b16 %v5108, %v5108
          %v5365 = vpack.c.b16 %v5109, %v5109
          %v5366 = vpack.c.b16 %v5110, %v5110
          %v5367 = vpack.c.b16 %v5111, %v5111
          %v5368 = vpack.c.b16 %v5112, %v5112
          %v5369 = vpack.c.b16 %v5113, %v5113
          %v5370 = vpack.c.b16 %v5114, %v5114
          %v5371 = vpack.c.b16 %v5115, %v5115
          %v5372 = vpack.c.b16 %v5116, %v5116
          %v5373 = vpack.c.b16 %v5117, %v5117
          %v5374 = vpack.c.b16 %v5118, %v5118
          %v5375 = vpack.c.b16 %v5119, %v5119
          %v5376 = vpack.c.b16 %v5120, %v5120
          %v5377 = vpack.c.b16 %v5121, %v5121
          %v5378 = vpack.c.b16 %v5122, %v5122
          %v5379 = vpack.c.b16 %v5123, %v5123
          %v5380 = vpack.c.b16 %v5124, %v5124
          %v5381 = vpack.c.b16 %v5125, %v5125
          %v5382 = vpack.c.b16 %v5126, %v5126
          %v5383 = vpack.c.b16 %v5127, %v5127
          %v5384 = vpack.c.b16 %v5128, %v5128
          %v5385 = vpack.c.b16 %v5129, %v5129
          %v5386 = vpack.c.b16 %v5130, %v5130
          %v5387 = vpack.c.b16 %v5131, %v5131
          %v5388 = vpack.c.b16 %v5132, %v5132
          %v5389 = vpack.c.b16 %v5133, %v5133
          %v5390 = vpack.c.b16 %v5134, %v5134
          %v5391 = vpack.c.b16 %v5135, %v5135
          %v5392 = vpack.c.b16 %v5136, %v5136
          %v5393 = vpack.c.b16 %v5137, %v5137
          %v5394 = vpack.c.b16 %v5138, %v5138
          %v5395 = vpack.c.b16 %v5139, %v5139
          %v5396 = vpack.c.b16 %v5140, %v5140
          %v5397 = vpack.c.b16 %v5141, %v5141
          %v5398 = vpack.c.b16 %v5142, %v5142
          %v5399 = vpack.c.b16 %v5143, %v5143
          %v5400 = vpack.c.b16 %v5144, %v5144
          %v5401 = vpack.c.b16 %v5145, %v5145
          %v5402 = vpack.c.b16 %v5146, %v5146
          %v5403 = vpack.c.b16 %v5147, %v5147
          %v5404 = vpack.c.b16 %v5148, %v5148
          %v5405 = vpack.c.b16 %v5149, %v5149
          %v5406 = vpack.c.b16 %v5150, %v5150
          %v5407 = vpack.c.b16 %v5151, %v5151
          %v5408 = vpack.c.b16 %v5152, %v5152
          %v5409 = vpack.c.b16 %v5153, %v5153
          %v5410 = vpack.c.b16 %v5154, %v5154
          %v5411 = vpack.c.b16 %v5155, %v5155
          %v5412 = vpack.c.b16 %v5156, %v5156
          %v5413 = vpack.c.b16 %v5157, %v5157
          %v5414 = vpack.c.b16 %v5158, %v5158
          %v5415 = vpack.c.b16 %v5159, %v5159
          %v5416 = vpack.c.b16 %v5160, %v5160
          %v5417 = vpack.c.b16 %v5161, %v5161
          %v5418 = vpack.c.b16 %v5162, %v5162
          %v5419 = vpack.c.b16 %v5163, %v5163
          %v5420 = vpack.c.b16 %v5164, %v5164
          %v5421 = vpack.c.b16 %v5165, %v5165
          %v5422 = vpack.c.b16 %v5166, %v5166
          %v5423 = vpack.c.b16 %v5167, %v5167
          %v5424 = vpack.c.b16 %v5168, %v5168
          %v5425 = vpack.c.b16 %v5169, %v5169
          %v5426 = vpack.c.b16 %v5170, %v5170
          %v5427 = vpack.c.b16 %v5171, %v5171
          %v5428 = vpack.c.b16 %v5172, %v5172
          %v5429 = vpack.c.b16 %v5173, %v5173
          %v5430 = vpack.c.b16 %v5174, %v5174
          %v5431 = vpack.c.b16 %v5175, %v5175
          %v5432 = vpack.c.b16 %v5176, %v5176
          %v5433 = vpack.c.b16 %v5177, %v5177
          %v5434 = vpack.c.b16 %v5178, %v5178
          %v5435 = vpack.c.b16 %v5179, %v5179
          %v5436 = vpack.c.b16 %v5180, %v5180
          %v5437 = vpack.c.b16 %v5181, %v5181
          %v5438 = vpack.c.b16 %v5182, %v5182
          %v5439 = vpack.c.b16 %v5183, %v5183
          %v5440 = vpack.c.b16 %v5184, %v5184
          %v5441 = vpack.c.b16 %v5185, %v5185
          %v5442 = vpack.c.b16 %v5186, %v5186
          %v5443 = vpack.c.b16 %v5187, %v5187
          %v5444 = vpack.c.b16 %v5188, %v5188
          %v5445 = vpack.c.b16 %v5189, %v5189
          %v5446 = vpack.c.b16 %v5190, %v5190
          %v5447 = vpack.c.b16 %v5191, %v5191
          %v5448 = vpack.c.b16 %v5192, %v5192
          %v5449 = vpack.c.b16 %v5193, %v5193
          %v5450 = vpack.c.b16 %v5194, %v5194
          %v5451 = vpack.c.b16 %v5195, %v5195
          %v5452 = vpack.c.b16 %v5196, %v5196
          %v5453 = vpack.c.b16 %v5197, %v5197
          %v5454 = vpack.c.b16 %v5198, %v5198
          %v5455 = vpack.c.b16 %v5199, %v5199
          %v5456 = vpack.c.b16 %v5200, %v5200
          %v5457 = vpack.c.b16 %v5201, %v5201
          %v5458 = vpack.c.b16 %v5202, %v5202
          %v5459 = vpack.c.b16 %v5203, %v5203
          %v5460 = vpack.c.b16 %v5204, %v5204
          %v5461 = vpack.c.b16 %v5205, %v5205
          %v5462 = vpack.c.b16 %v5206, %v5206
          %v5463 = vpack.c.b16 %v5207, %v5207
          %v5464 = vpack.c.b16 %v5208, %v5208
          %v5465 = vpack.c.b16 %v5209, %v5209
          %v5466 = vpack.c.b16 %v5210, %v5210
          %v5467 = vpack.c.b16 %v5211, %v5211
          %v5468 = vpack.c.b16 %v5212, %v5212
          %v5469 = vpack.c.b16 %v5213, %v5213
          %v5470 = vpack.c.b16 %v5214, %v5214
          %v5471 = vpack.c.b16 %v5215, %v5215
          %v5472 = vpack.c.b16 %v5216, %v5216
          %v5473 = vpack.c.b16 %v5217, %v5217
          %v5474 = vpack.c.b16 %v5218, %v5218
          %v5475 = vpack.c.b16 %v5219, %v5219
          %v5476 = vpack.c.b16 %v5220, %v5220
          %v5477 = vpack.c.b16 %v5221, %v5221
          %v5478 = vpack.c.b16 %v5222, %v5222
          %v5479 = vpack.c.b16 %v5223, %v5223
          %v5480 = vpack.c.b16 %v5224, %v5224
          %v5481 = vpack.c.b16 %v5225, %v5225
          %v5482 = vpack.c.b16 %v5226, %v5226
          %v5483 = vpack.c.b16 %v5227, %v5227
          %v5484 = vpack.c.b16 %v5228, %v5228
          %v5485 = vpack.c.b16 %v5229, %v5229
          %v5486 = vpack.c.b16 %v5230, %v5230
          %v5487 = vpack.c.b16 %v5231, %v5231
          %v5488 = vpack.c.b16 %v5232, %v5232
          %v5489 = vpack.c.b16 %v5233, %v5233
          %v5490 = vpack.c.b16 %v5234, %v5234
          %v5491 = vpack.c.b16 %v5235, %v5235
          %v5492 = vpack.c.b16 %v5236, %v5236
          %v5493 = vpack.c.b16 %v5237, %v5237
          %v5494 = vpack.c.b16 %v5238, %v5238
          %v5495 = vpack.c.b16 %v5239, %v5239
          %v5496 = vpack.c.b16 %v5240, %v5240
          %v5497 = vpack.c.b16 %v5241, %v5241
          %v5498 = vpack.c.b16 %v5242, %v5242
          %v5499 = vpack.c.b16 %v5243, %v5243
          %v5500 = vpack.c.b16 %v5244, %v5244
          %v5501 = vpack.c.b16 %v5245, %v5245
          %v5502 = vpack.c.b16 %v5246, %v5246
          %v5503 = vpack.c.b16 %v5247, %v5247
          %v5504 = vpack.c.b16 %v5248, %v5248
          %v5505 = vpack.c.b16 %v5249, %v5249
          %v5506 = vpack.c.b16 %v5250, %v5250
          %v5507 = vpack.c.b16 %v5251, %v5251
          %v5508 = vpack.c.b16 %v5252, %v5252
          %v5509 = vpack.c.b16 %v5253, %v5253
          %v5510 = vpack.c.b16 %v5254, %v5254
          %v5511 = vpack.c.b16 %v5255, %v5255
          %v5512 = vpack.c.b16 %v5256, %v5256
          %v5513 = vpack.c.b16 %v5257, %v5257
          %v5514 = vpack.c.b16 %v5258, %v5258
          %v5515 = vpack.c.b16 %v5259, %v5259
          %v5516 = vpack.c.b16 %v5260, %v5260
          %v5517 = vpack.c.b16 %v5261, %v5261
          %v5518 = vpack.c.b16 %v5262, %v5262
          %v5519 = vpack.c.b16 %v5263, %v5263
          %v5520 = vpack.c.b16 %v5264, %v5264
          %v5521 = vpack.c.b16 %v5265, %v5265
          %v5522 = vpack.c.b16 %v5266, %v5266
          %v5523 = vpack.c.b16 %v5267, %v5267
          %v5524 = vpack.c.b16 %v5268, %v5268
          %v5525 = vpack.c.b16 %v5269, %v5269
          %v5526 = vpack.c.b16 %v5270, %v5270
          %v5527 = vpack.c.b16 %v5271, %v5271
          %v5528 = vpack.c.b16 %v5272, %v5272
          %v5529 = vpack.c.b16 %v5273, %v5273
          %v5530 = vpack.c.b16 %v5274, %v5274
          %v5531 = vpack.c.b16 %v5275, %v5275
          %v5532 = vpack.c.b16 %v5276, %v5276
          %v5533 = vpack.c.b16 %v5277, %v5277
          %v5534 = vpack.c.b16 %v5278, %v5278
          %v5535 = vpack.c.b16 %v5279, %v5279
          %v5536 = vpack.c.b16 %v5280, %v5280
          %v5537 = vpack.c.b16 %v5281, %v5281
          %v5538 = vpack.c.b16 %v5282, %v5282
          %v5539 = vpack.c.b16 %v5283, %v5283
          %v5540 = vpack.c.b16 %v5284, %v5284
          %v5541 = vpack.c.b16 %v5285, %v5285
          %v5542 = vpack.c.b16 %v5286, %v5286
          %v5543 = vpack.c.b16 %v5287, %v5287
          %v5544 = vpack.c.b16 %v5288, %v5288
          %v5545 = vpack.c.b16 %v5289, %v5289
          %v5546 = vpack.c.b16 %v5290, %v5290
          %v5547 = vpack.c.b16 %v5291, %v5291
          %v5548 = vpack.c.b16 %v5292, %v5292
          %v5549 = vpack.c.b16 %v5293, %v5293
          %v5550 = vpack.c.b16 %v5294, %v5294
          %v5551 = vpack.c.b16 %v5295, %v5295
          %v5552 = vpack.c.b16 %v5296, %v5296
          %v5553 = vpack.c.b16 %v5297, %v5297
          %v5554 = vpack.c.b16 %v5298, %v5298
          %v5555 = vpack.c.b16 %v5299, %v5299
          %v5556 = vpack.c.b16 %v5300, %v5300
          %v5557 = vpack.c.b16 %v5301, %v5301
          %v5558 = vpack.c.b16 %v5302, %v5302
          %v5559 = vpack.c.b16 %v5303, %v5303
          %v5560 = vpack.c.b16 %v5304, %v5304
          %v5561 = vpack.c.b16 %v5305, %v5305
          %v5562 = vpack.c.b16 %v5306, %v5306
          %v5563 = vpack.c.b16 %v5307, %v5307
          %v5564 = vpack.c.b16 %v5308, %v5308
          %v5565 = vpack.c.b16 %v5309, %v5309
          %v5566 = vpack.c.b16 %v5310, %v5310
          %v5567 = vpack.c.b16 %v5311, %v5311
          %5824 = vst [vmem:[%s270] sm:$0xf] %v5312
          %5825 = vst [vmem:[%s270 + $0x4] sm:$0xf] %v5313
          %5826 = vst [vmem:[%s270 + $0x8] sm:$0xf] %v5314
          %5827 = vst [vmem:[%s270 + $0xc] sm:$0xf] %v5315
          %5828 = vst [vmem:[%s270 + $0x10] sm:$0xf] %v5316
          %5829 = vst [vmem:[%s270 + $0x14] sm:$0xf] %v5317
          %5830 = vst [vmem:[%s270 + $0x18] sm:$0xf] %v5318
          %5831 = vst [vmem:[%s270 + $0x1c] sm:$0xf] %v5319
          %5832 = vst [vmem:[%s270 + $0x20] sm:$0xf] %v5320
          %5833 = vst [vmem:[%s270 + $0x24] sm:$0xf] %v5321
          %5834 = vst [vmem:[%s270 + $0x28] sm:$0xf] %v5322
          %5835 = vst [vmem:[%s270 + $0x2c] sm:$0xf] %v5323
          %5836 = vst [vmem:[%s270 + $0x30] sm:$0xf] %v5324
          %5837 = vst [vmem:[%s270 + $0x34] sm:$0xf] %v5325
          %5838 = vst [vmem:[%s270 + $0x38] sm:$0xf] %v5326
          %5839 = vst [vmem:[%s270 + $0x3c] sm:$0xf] %v5327
          %5840 = vst [vmem:[%s270 + $0x40] sm:$0xf] %v5328
          %5841 = vst [vmem:[%s270 + $0x44] sm:$0xf] %v5329
          %5842 = vst [vmem:[%s270 + $0x48] sm:$0xf] %v5330
          %5843 = vst [vmem:[%s270 + $0x4c] sm:$0xf] %v5331
          %5844 = vst [vmem:[%s270 + $0x50] sm:$0xf] %v5332
          %5845 = vst [vmem:[%s270 + $0x54] sm:$0xf] %v5333
          %5846 = vst [vmem:[%s270 + $0x58] sm:$0xf] %v5334
          %5847 = vst [vmem:[%s270 + $0x5c] sm:$0xf] %v5335
          %5848 = vst [vmem:[%s270 + $0x60] sm:$0xf] %v5336
          %5849 = vst [vmem:[%s270 + $0x64] sm:$0xf] %v5337
          %5850 = vst [vmem:[%s270 + $0x68] sm:$0xf] %v5338
          %5851 = vst [vmem:[%s270 + $0x6c] sm:$0xf] %v5339
          %5852 = vst [vmem:[%s270 + $0x70] sm:$0xf] %v5340
          %5853 = vst [vmem:[%s270 + $0x74] sm:$0xf] %v5341
          %5854 = vst [vmem:[%s270 + $0x78] sm:$0xf] %v5342
          %5855 = vst [vmem:[%s270 + $0x7c] sm:$0xf] %v5343
          %5856 = vst [vmem:[%s270 + $0x80] sm:$0xf] %v5344
          %5857 = vst [vmem:[%s270 + $0x84] sm:$0xf] %v5345
          %5858 = vst [vmem:[%s270 + $0x88] sm:$0xf] %v5346
          %5859 = vst [vmem:[%s270 + $0x8c] sm:$0xf] %v5347
          %5860 = vst [vmem:[%s270 + $0x90] sm:$0xf] %v5348
          %5861 = vst [vmem:[%s270 + $0x94] sm:$0xf] %v5349
          %5862 = vst [vmem:[%s270 + $0x98] sm:$0xf] %v5350
          %5863 = vst [vmem:[%s270 + $0x9c] sm:$0xf] %v5351
          %5864 = vst [vmem:[%s270 + $0xa0] sm:$0xf] %v5352
          %5865 = vst [vmem:[%s270 + $0xa4] sm:$0xf] %v5353
          %5866 = vst [vmem:[%s270 + $0xa8] sm:$0xf] %v5354
          %5867 = vst [vmem:[%s270 + $0xac] sm:$0xf] %v5355
          %5868 = vst [vmem:[%s270 + $0xb0] sm:$0xf] %v5356
          %5869 = vst [vmem:[%s270 + $0xb4] sm:$0xf] %v5357
          %5870 = vst [vmem:[%s270 + $0xb8] sm:$0xf] %v5358
          %5871 = vst [vmem:[%s270 + $0xbc] sm:$0xf] %v5359
          %5872 = vst [vmem:[%s270 + $0xc0] sm:$0xf] %v5360
          %5873 = vst [vmem:[%s270 + $0xc4] sm:$0xf] %v5361
          %5874 = vst [vmem:[%s270 + $0xc8] sm:$0xf] %v5362
          %5875 = vst [vmem:[%s270 + $0xcc] sm:$0xf] %v5363
          %5876 = vst [vmem:[%s270 + $0xd0] sm:$0xf] %v5364
          %5877 = vst [vmem:[%s270 + $0xd4] sm:$0xf] %v5365
          %5878 = vst [vmem:[%s270 + $0xd8] sm:$0xf] %v5366
          %5879 = vst [vmem:[%s270 + $0xdc] sm:$0xf] %v5367
          %5880 = vst [vmem:[%s270 + $0xe0] sm:$0xf] %v5368
          %5881 = vst [vmem:[%s270 + $0xe4] sm:$0xf] %v5369
          %5882 = vst [vmem:[%s270 + $0xe8] sm:$0xf] %v5370
          %5883 = vst [vmem:[%s270 + $0xec] sm:$0xf] %v5371
          %5884 = vst [vmem:[%s270 + $0xf0] sm:$0xf] %v5372
          %5885 = vst [vmem:[%s270 + $0xf4] sm:$0xf] %v5373
          %5886 = vst [vmem:[%s270 + $0xf8] sm:$0xf] %v5374
          %5887 = vst [vmem:[%s270 + $0xfc] sm:$0xf] %v5375
          %5888 = vst [vmem:[%s270 + $0x100] sm:$0xf] %v5376
          %5889 = vst [vmem:[%s270 + $0x104] sm:$0xf] %v5377
          %5890 = vst [vmem:[%s270 + $0x108] sm:$0xf] %v5378
          %5891 = vst [vmem:[%s270 + $0x10c] sm:$0xf] %v5379
          %5892 = vst [vmem:[%s270 + $0x110] sm:$0xf] %v5380
          %5893 = vst [vmem:[%s270 + $0x114] sm:$0xf] %v5381
          %5894 = vst [vmem:[%s270 + $0x118] sm:$0xf] %v5382
          %5895 = vst [vmem:[%s270 + $0x11c] sm:$0xf] %v5383
          %5896 = vst [vmem:[%s270 + $0x120] sm:$0xf] %v5384
          %5897 = vst [vmem:[%s270 + $0x124] sm:$0xf] %v5385
          %5898 = vst [vmem:[%s270 + $0x128] sm:$0xf] %v5386
          %5899 = vst [vmem:[%s270 + $0x12c] sm:$0xf] %v5387
          %5900 = vst [vmem:[%s270 + $0x130] sm:$0xf] %v5388
          %5901 = vst [vmem:[%s270 + $0x134] sm:$0xf] %v5389
          %5902 = vst [vmem:[%s270 + $0x138] sm:$0xf] %v5390
          %5903 = vst [vmem:[%s270 + $0x13c] sm:$0xf] %v5391
          %5904 = vst [vmem:[%s270 + $0x140] sm:$0xf] %v5392
          %5905 = vst [vmem:[%s270 + $0x144] sm:$0xf] %v5393
          %5906 = vst [vmem:[%s270 + $0x148] sm:$0xf] %v5394
          %5907 = vst [vmem:[%s270 + $0x14c] sm:$0xf] %v5395
          %5908 = vst [vmem:[%s270 + $0x150] sm:$0xf] %v5396
          %5909 = vst [vmem:[%s270 + $0x154] sm:$0xf] %v5397
          %5910 = vst [vmem:[%s270 + $0x158] sm:$0xf] %v5398
          %5911 = vst [vmem:[%s270 + $0x15c] sm:$0xf] %v5399
          %5912 = vst [vmem:[%s270 + $0x160] sm:$0xf] %v5400
          %5913 = vst [vmem:[%s270 + $0x164] sm:$0xf] %v5401
          %5914 = vst [vmem:[%s270 + $0x168] sm:$0xf] %v5402
          %5915 = vst [vmem:[%s270 + $0x16c] sm:$0xf] %v5403
          %5916 = vst [vmem:[%s270 + $0x170] sm:$0xf] %v5404
          %5917 = vst [vmem:[%s270 + $0x174] sm:$0xf] %v5405
          %5918 = vst [vmem:[%s270 + $0x178] sm:$0xf] %v5406
          %5919 = vst [vmem:[%s270 + $0x17c] sm:$0xf] %v5407
          %5920 = vst [vmem:[%s270 + $0x180] sm:$0xf] %v5408
          %5921 = vst [vmem:[%s270 + $0x184] sm:$0xf] %v5409
          %5922 = vst [vmem:[%s270 + $0x188] sm:$0xf] %v5410
          %5923 = vst [vmem:[%s270 + $0x18c] sm:$0xf] %v5411
          %5924 = vst [vmem:[%s270 + $0x190] sm:$0xf] %v5412
          %5925 = vst [vmem:[%s270 + $0x194] sm:$0xf] %v5413
          %5926 = vst [vmem:[%s270 + $0x198] sm:$0xf] %v5414
          %5927 = vst [vmem:[%s270 + $0x19c] sm:$0xf] %v5415
          %5928 = vst [vmem:[%s270 + $0x1a0] sm:$0xf] %v5416
          %5929 = vst [vmem:[%s270 + $0x1a4] sm:$0xf] %v5417
          %5930 = vst [vmem:[%s270 + $0x1a8] sm:$0xf] %v5418
          %5931 = vst [vmem:[%s270 + $0x1ac] sm:$0xf] %v5419
          %5932 = vst [vmem:[%s270 + $0x1b0] sm:$0xf] %v5420
          %5933 = vst [vmem:[%s270 + $0x1b4] sm:$0xf] %v5421
          %5934 = vst [vmem:[%s270 + $0x1b8] sm:$0xf] %v5422
          %5935 = vst [vmem:[%s270 + $0x1bc] sm:$0xf] %v5423
          %5936 = vst [vmem:[%s270 + $0x1c0] sm:$0xf] %v5424
          %5937 = vst [vmem:[%s270 + $0x1c4] sm:$0xf] %v5425
          %5938 = vst [vmem:[%s270 + $0x1c8] sm:$0xf] %v5426
          %5939 = vst [vmem:[%s270 + $0x1cc] sm:$0xf] %v5427
          %5940 = vst [vmem:[%s270 + $0x1d0] sm:$0xf] %v5428
          %5941 = vst [vmem:[%s270 + $0x1d4] sm:$0xf] %v5429
          %5942 = vst [vmem:[%s270 + $0x1d8] sm:$0xf] %v5430
          %5943 = vst [vmem:[%s270 + $0x1dc] sm:$0xf] %v5431
          %5944 = vst [vmem:[%s270 + $0x1e0] sm:$0xf] %v5432
          %5945 = vst [vmem:[%s270 + $0x1e4] sm:$0xf] %v5433
          %5946 = vst [vmem:[%s270 + $0x1e8] sm:$0xf] %v5434
          %5947 = vst [vmem:[%s270 + $0x1ec] sm:$0xf] %v5435
          %5948 = vst [vmem:[%s270 + $0x1f0] sm:$0xf] %v5436
          %5949 = vst [vmem:[%s270 + $0x1f4] sm:$0xf] %v5437
          %5950 = vst [vmem:[%s270 + $0x1f8] sm:$0xf] %v5438
          %5951 = vst [vmem:[%s270 + $0x1fc] sm:$0xf] %v5439
          %5952 = vst [vmem:[%s270 + $0x200] sm:$0xf] %v5440
          %5953 = vst [vmem:[%s270 + $0x204] sm:$0xf] %v5441
          %5954 = vst [vmem:[%s270 + $0x208] sm:$0xf] %v5442
          %5955 = vst [vmem:[%s270 + $0x20c] sm:$0xf] %v5443
          %5956 = vst [vmem:[%s270 + $0x210] sm:$0xf] %v5444
          %5957 = vst [vmem:[%s270 + $0x214] sm:$0xf] %v5445
          %5958 = vst [vmem:[%s270 + $0x218] sm:$0xf] %v5446
          %5959 = vst [vmem:[%s270 + $0x21c] sm:$0xf] %v5447
          %5960 = vst [vmem:[%s270 + $0x220] sm:$0xf] %v5448
          %5961 = vst [vmem:[%s270 + $0x224] sm:$0xf] %v5449
          %5962 = vst [vmem:[%s270 + $0x228] sm:$0xf] %v5450
          %5963 = vst [vmem:[%s270 + $0x22c] sm:$0xf] %v5451
          %5964 = vst [vmem:[%s270 + $0x230] sm:$0xf] %v5452
          %5965 = vst [vmem:[%s270 + $0x234] sm:$0xf] %v5453
          %5966 = vst [vmem:[%s270 + $0x238] sm:$0xf] %v5454
          %5967 = vst [vmem:[%s270 + $0x23c] sm:$0xf] %v5455
          %5968 = vst [vmem:[%s270 + $0x240] sm:$0xf] %v5456
          %5969 = vst [vmem:[%s270 + $0x244] sm:$0xf] %v5457
          %5970 = vst [vmem:[%s270 + $0x248] sm:$0xf] %v5458
          %5971 = vst [vmem:[%s270 + $0x24c] sm:$0xf] %v5459
          %5972 = vst [vmem:[%s270 + $0x250] sm:$0xf] %v5460
          %5973 = vst [vmem:[%s270 + $0x254] sm:$0xf] %v5461
          %5974 = vst [vmem:[%s270 + $0x258] sm:$0xf] %v5462
          %5975 = vst [vmem:[%s270 + $0x25c] sm:$0xf] %v5463
          %5976 = vst [vmem:[%s270 + $0x260] sm:$0xf] %v5464
          %5977 = vst [vmem:[%s270 + $0x264] sm:$0xf] %v5465
          %5978 = vst [vmem:[%s270 + $0x268] sm:$0xf] %v5466
          %5979 = vst [vmem:[%s270 + $0x26c] sm:$0xf] %v5467
          %5980 = vst [vmem:[%s270 + $0x270] sm:$0xf] %v5468
          %5981 = vst [vmem:[%s270 + $0x274] sm:$0xf] %v5469
          %5982 = vst [vmem:[%s270 + $0x278] sm:$0xf] %v5470
          %5983 = vst [vmem:[%s270 + $0x27c] sm:$0xf] %v5471
          %5984 = vst [vmem:[%s270 + $0x280] sm:$0xf] %v5472
          %5985 = vst [vmem:[%s270 + $0x284] sm:$0xf] %v5473
          %5986 = vst [vmem:[%s270 + $0x288] sm:$0xf] %v5474
          %5987 = vst [vmem:[%s270 + $0x28c] sm:$0xf] %v5475
          %5988 = vst [vmem:[%s270 + $0x290] sm:$0xf] %v5476
          %5989 = vst [vmem:[%s270 + $0x294] sm:$0xf] %v5477
          %5990 = vst [vmem:[%s270 + $0x298] sm:$0xf] %v5478
          %5991 = vst [vmem:[%s270 + $0x29c] sm:$0xf] %v5479
          %5992 = vst [vmem:[%s270 + $0x2a0] sm:$0xf] %v5480
          %5993 = vst [vmem:[%s270 + $0x2a4] sm:$0xf] %v5481
          %5994 = vst [vmem:[%s270 + $0x2a8] sm:$0xf] %v5482
          %5995 = vst [vmem:[%s270 + $0x2ac] sm:$0xf] %v5483
          %5996 = vst [vmem:[%s270 + $0x2b0] sm:$0xf] %v5484
          %5997 = vst [vmem:[%s270 + $0x2b4] sm:$0xf] %v5485
          %5998 = vst [vmem:[%s270 + $0x2b8] sm:$0xf] %v5486
          %5999 = vst [vmem:[%s270 + $0x2bc] sm:$0xf] %v5487
          %6000 = vst [vmem:[%s270 + $0x2c0] sm:$0xf] %v5488
          %6001 = vst [vmem:[%s270 + $0x2c4] sm:$0xf] %v5489
          %6002 = vst [vmem:[%s270 + $0x2c8] sm:$0xf] %v5490
          %6003 = vst [vmem:[%s270 + $0x2cc] sm:$0xf] %v5491
          %6004 = vst [vmem:[%s270 + $0x2d0] sm:$0xf] %v5492
          %6005 = vst [vmem:[%s270 + $0x2d4] sm:$0xf] %v5493
          %6006 = vst [vmem:[%s270 + $0x2d8] sm:$0xf] %v5494
          %6007 = vst [vmem:[%s270 + $0x2dc] sm:$0xf] %v5495
          %6008 = vst [vmem:[%s270 + $0x2e0] sm:$0xf] %v5496
          %6009 = vst [vmem:[%s270 + $0x2e4] sm:$0xf] %v5497
          %6010 = vst [vmem:[%s270 + $0x2e8] sm:$0xf] %v5498
          %6011 = vst [vmem:[%s270 + $0x2ec] sm:$0xf] %v5499
          %6012 = vst [vmem:[%s270 + $0x2f0] sm:$0xf] %v5500
          %6013 = vst [vmem:[%s270 + $0x2f4] sm:$0xf] %v5501
          %6014 = vst [vmem:[%s270 + $0x2f8] sm:$0xf] %v5502
          %6015 = vst [vmem:[%s270 + $0x2fc] sm:$0xf] %v5503
          %6016 = vst [vmem:[%s270 + $0x300] sm:$0xf] %v5504
          %6017 = vst [vmem:[%s270 + $0x304] sm:$0xf] %v5505
          %6018 = vst [vmem:[%s270 + $0x308] sm:$0xf] %v5506
          %6019 = vst [vmem:[%s270 + $0x30c] sm:$0xf] %v5507
          %6020 = vst [vmem:[%s270 + $0x310] sm:$0xf] %v5508
          %6021 = vst [vmem:[%s270 + $0x314] sm:$0xf] %v5509
          %6022 = vst [vmem:[%s270 + $0x318] sm:$0xf] %v5510
          %6023 = vst [vmem:[%s270 + $0x31c] sm:$0xf] %v5511
          %6024 = vst [vmem:[%s270 + $0x320] sm:$0xf] %v5512
          %6025 = vst [vmem:[%s270 + $0x324] sm:$0xf] %v5513
          %6026 = vst [vmem:[%s270 + $0x328] sm:$0xf] %v5514
          %6027 = vst [vmem:[%s270 + $0x32c] sm:$0xf] %v5515
          %6028 = vst [vmem:[%s270 + $0x330] sm:$0xf] %v5516
          %6029 = vst [vmem:[%s270 + $0x334] sm:$0xf] %v5517
          %6030 = vst [vmem:[%s270 + $0x338] sm:$0xf] %v5518
          %6031 = vst [vmem:[%s270 + $0x33c] sm:$0xf] %v5519
          %6032 = vst [vmem:[%s270 + $0x340] sm:$0xf] %v5520
          %6033 = vst [vmem:[%s270 + $0x344] sm:$0xf] %v5521
          %6034 = vst [vmem:[%s270 + $0x348] sm:$0xf] %v5522
          %6035 = vst [vmem:[%s270 + $0x34c] sm:$0xf] %v5523
          %6036 = vst [vmem:[%s270 + $0x350] sm:$0xf] %v5524
          %6037 = vst [vmem:[%s270 + $0x354] sm:$0xf] %v5525
          %6038 = vst [vmem:[%s270 + $0x358] sm:$0xf] %v5526
          %6039 = vst [vmem:[%s270 + $0x35c] sm:$0xf] %v5527
          %6040 = vst [vmem:[%s270 + $0x360] sm:$0xf] %v5528
          %6041 = vst [vmem:[%s270 + $0x364] sm:$0xf] %v5529
          %6042 = vst [vmem:[%s270 + $0x368] sm:$0xf] %v5530
          %6043 = vst [vmem:[%s270 + $0x36c] sm:$0xf] %v5531
          %6044 = vst [vmem:[%s270 + $0x370] sm:$0xf] %v5532
          %6045 = vst [vmem:[%s270 + $0x374] sm:$0xf] %v5533
          %6046 = vst [vmem:[%s270 + $0x378] sm:$0xf] %v5534
          %6047 = vst [vmem:[%s270 + $0x37c] sm:$0xf] %v5535
          %6048 = vst [vmem:[%s270 + $0x380] sm:$0xf] %v5536
          %6049 = vst [vmem:[%s270 + $0x384] sm:$0xf] %v5537
          %6050 = vst [vmem:[%s270 + $0x388] sm:$0xf] %v5538
          %6051 = vst [vmem:[%s270 + $0x38c] sm:$0xf] %v5539
          %6052 = vst [vmem:[%s270 + $0x390] sm:$0xf] %v5540
          %6053 = vst [vmem:[%s270 + $0x394] sm:$0xf] %v5541
          %6054 = vst [vmem:[%s270 + $0x398] sm:$0xf] %v5542
          %6055 = vst [vmem:[%s270 + $0x39c] sm:$0xf] %v5543
          %6056 = vst [vmem:[%s270 + $0x3a0] sm:$0xf] %v5544
          %6057 = vst [vmem:[%s270 + $0x3a4] sm:$0xf] %v5545
          %6058 = vst [vmem:[%s270 + $0x3a8] sm:$0xf] %v5546
          %6059 = vst [vmem:[%s270 + $0x3ac] sm:$0xf] %v5547
          %6060 = vst [vmem:[%s270 + $0x3b0] sm:$0xf] %v5548
          %6061 = vst [vmem:[%s270 + $0x3b4] sm:$0xf] %v5549
          %6062 = vst [vmem:[%s270 + $0x3b8] sm:$0xf] %v5550
          %6063 = vst [vmem:[%s270 + $0x3bc] sm:$0xf] %v5551
          %6064 = vst [vmem:[%s270 + $0x3c0] sm:$0xf] %v5552
          %6065 = vst [vmem:[%s270 + $0x3c4] sm:$0xf] %v5553
          %6066 = vst [vmem:[%s270 + $0x3c8] sm:$0xf] %v5554
          %6067 = vst [vmem:[%s270 + $0x3cc] sm:$0xf] %v5555
          %6068 = vst [vmem:[%s270 + $0x3d0] sm:$0xf] %v5556
          %6069 = vst [vmem:[%s270 + $0x3d4] sm:$0xf] %v5557
          %6070 = vst [vmem:[%s270 + $0x3d8] sm:$0xf] %v5558
          %6071 = vst [vmem:[%s270 + $0x3dc] sm:$0xf] %v5559
          %6072 = vst [vmem:[%s270 + $0x3e0] sm:$0xf] %v5560
          %6073 = vst [vmem:[%s270 + $0x3e4] sm:$0xf] %v5561
          %6074 = vst [vmem:[%s270 + $0x3e8] sm:$0xf] %v5562
          %6075 = vst [vmem:[%s270 + $0x3ec] sm:$0xf] %v5563
          %6076 = vst [vmem:[%s270 + $0x3f0] sm:$0xf] %v5564
          %6077 = vst [vmem:[%s270 + $0x3f4] sm:$0xf] %v5565
          %6078 = vst [vmem:[%s270 + $0x3f8] sm:$0xf] %v5566
          %6079 = vst [vmem:[%s270 + $0x3fc] sm:$0xf] %v5567
        $region52: #{matmul_bias_act.1} parent=31 // pred_fallthru
          _
        %s6080 = smul.u32 256, %s23
        %p6081 = scmp.lt.s32.totalorder %s6080, 16383
        %s6082 = scalar_select %p6081, %s6080, 16383
        %p6083 = scmp.lt.s32.totalorder %s24, 0
        %s6084 = scalar_select %p6083, %s24, 0
        %s6085 = sadd.s32 %s6084, %s6082
        %s6086 = smul.addr %s6085, 4
        %s6087 = scalar_lea.vmem %s3, %s6086
        // Predicated region
        $region53: #{matmul_bias_act.1} parent=31 // pred_check
          %p6088 = pneg %p139
        $region54: #{matmul_bias_act.1} parent=31 // pred_check_branch
          %6090 = sbr.rel (%p6088) target = $region56
        $region55: #{matmul_bias_act.1} parent=31 // pred_region
          %s6091 = smul.u32 256, %s23
        $region56: #{matmul_bias_act.1} parent=31 // pred_fallthru
          _
      $region32: #{matmul_bias_act.1} parent=5 // pred_fallthru
        _
      %p6092 = scmp.le.s32.totalorder 2, %s13
      // Predicated region
      $region57: #{matmul_bias_act.1} parent=5 // pred_check
        %p6093 = pneg %p6092
      $region58: #{matmul_bias_act.1} parent=5 // pred_check_branch
        %6095 = sbr.rel (%p6093) target = $region60
      $region59: #{matmul_bias_act.1} parent=5 // pred_region
        %s6096 = ssub.s32 %s13, 2
        // Predicated region
        $region61: #{matmul_bias_act.1} parent=59 // pred_check
          %p6097 = pneg %p145
        $region62: #{matmul_bias_act.1} parent=59 // pred_check_branch
          %6099 = sbr.rel (%p6097) target = $region64
        $region63: #{matmul_bias_act.1} parent=59 // pred_region
          %s6100 = smul.u32 256, %s26
          %p6101 = scmp.lt.s32.totalorder %s6100, 16383
          %s6102 = scalar_select %p6101, %s6100, 16383
          %p6103 = scmp.lt.s32.totalorder %s27, 0
          %s6104 = scalar_select %p6103, %s27, 0
          %s6105 = sadd.s32 %s6104, %s6102
          %s6106 = smul.addr %s6105, 4
          %s6107 = scalar_lea.vmem %s3, %s6106
        $region64: #{matmul_bias_act.1} parent=59 // pred_fallthru
          _
      $region60: #{matmul_bias_act.1} parent=5 // pred_fallthru
        _
    $region6: #{matmul_bias_act.1} parent=1 // loop_footer
      %s17 = sadd.s32 1, %s13
    $region7: #{matmul_bias_act.1} parent=1 // loop_footer_branch
      %12 = sbr.rel target = $region3
    $region8: #{matmul_bias_act.1} parent=1 // loop_exit
      _
    %6108 = vsyncpa [#allocation4], 1
    %s6109 = scalar_lea.sflag [#allocation4], 1
    %6110 = vsyncpa %s6109, 1
    %6111 = vsyncpa [#allocation6], 1

</llo_original>
